<compile_context>
chip_gen: v6e
topology: v6e:2x2x1
jax: 0.10.0
libtpu: 0.0.40
codegen_flags: <defaults>
</compile_context>

<pallas_src>
import functools

import numpy as np
import jax
import jax.numpy as jnp
from jax.experimental import pallas as pl
from jax.experimental.pallas import tpu as pltpu

# ----------------------------- config (cfg.* in the torch repo) ---------------
FEAT_STRIDE = 16
ANCHOR_SCALES = np.array([8, 16, 32])
ANCHOR_RATIOS = [0.5, 1, 2]
NUM_ANCHORS = len(ANCHOR_SCALES) * len(ANCHOR_RATIOS)   # 9
PRE_NMS_TOP_N = 300
POST_NMS_TOP_N = 50
NMS_THRESH = 0.7
MIN_SIZE = 16
HEAD_PAD = 128          # lane-dense padded column count of the fused head output
ROW_TILE = 128          # output-row tile (multiple of 8); "parallel" grid axis


# ----------------------- anchor generation (numpy glue) -----------------------
def _whctrs(anchor):
    w = anchor[2] - anchor[0] + 1
    h = anchor[3] - anchor[1] + 1
    x_ctr = anchor[0] + 0.5 * (w - 1)
    y_ctr = anchor[1] + 0.5 * (h - 1)
    return w, h, x_ctr, y_ctr


def _mkanchors(ws, hs, x_ctr, y_ctr):
    ws = ws[:, np.newaxis]
    hs = hs[:, np.newaxis]
    return np.hstack((x_ctr - 0.5 * (ws - 1), y_ctr - 0.5 * (hs - 1),
                      x_ctr + 0.5 * (ws - 1), y_ctr + 0.5 * (hs - 1)))


def _ratio_enum(anchor, ratios):
    w, h, x_ctr, y_ctr = _whctrs(anchor)
    size = w * h
    size_ratios = size / ratios
    ws = np.round(np.sqrt(size_ratios))
    hs = np.round(ws * ratios)
    return _mkanchors(ws, hs, x_ctr, y_ctr)


def _scale_enum(anchor, scales):
    w, h, x_ctr, y_ctr = _whctrs(anchor)
    ws = w * scales
    hs = h * scales
    return _mkanchors(ws, hs, x_ctr, y_ctr)


def generate_anchors(base_size, ratios, scales):
    base_anchor = np.array([1, 1, base_size, base_size], dtype=np.float64) - 1
    ratio_anchors = _ratio_enum(base_anchor, np.array(ratios, dtype=np.float64))
    anchors = np.vstack([_scale_enum(ratio_anchors[i, :], np.array(scales, dtype=np.float64))
                         for i in range(ratio_anchors.shape[0])])
    return anchors.astype(np.float32)


# ----------------------------- NMS (host, numpy) ------------------------------
def nms_numpy(dets, thresh):
    x1, y1, x2, y2, scores = dets[:, 0], dets[:, 1], dets[:, 2], dets[:, 3], dets[:, 4]
    areas = (x2 - x1 + 1) * (y2 - y1 + 1)
    order = scores.argsort()[::-1]
    keep = []
    while order.size > 0:
        i = order[0]
        keep.append(i)
        xx1 = np.maximum(x1[i], x1[order[1:]])
        yy1 = np.maximum(y1[i], y1[order[1:]])
        xx2 = np.minimum(x2[i], x2[order[1:]])
        yy2 = np.minimum(y2[i], y2[order[1:]])
        w = np.maximum(0.0, xx2 - xx1 + 1)
        h = np.maximum(0.0, yy2 - yy1 + 1)
        inter = w * h
        ovr = inter / (areas[i] + areas[order[1:]] - inter)
        inds = np.where(ovr <= thresh)[0]
        order = order[inds + 1]
    return np.array(keep, dtype=np.int64)


# ------------------------------ Pallas kernel ----------------------------------
def _fused_rpn_kernel(lhs_ref, wconv_ref, bconv_ref, whead_ref, bhead_ref,
                      out_ref, acc_ref, *, num_anchors):
    """Fused 3x3 conv (as K=9*Cin matmul) + ReLU + 1x1 heads + 2-class softmax.

    Grid = (row_tiles [parallel], K_tiles [arbitrary]).

    lhs_ref   : (ROW_TILE, tk)       bf16  im2col block of the padded feature
    wconv_ref : (tk, Cout)           bf16  streamed conv-weight K block (one 3x3 tap)
    bconv_ref : (1, Cout)            f32
    whead_ref : (Cout, 2*128)        bf16  [main block | softmax-partner block]
    bhead_ref : (1, 2*128)           f32
    out_ref   : (ROW_TILE, 128)      f32   cols [0:A)=bg prob, [A:2A)=fg prob,
                                           [2A:6A)=reg deltas, rest = pad
    acc_ref   : (ROW_TILE, Cout)     f32   VMEM accumulator scratch
    """
    k = pl.program_id(1)

    @pl.when(k == 0)
    def _():
        acc_ref[...] = jnp.zeros_like(acc_ref)

    # MXU: bf16 x bf16 -> f32 accumulation into VMEM scratch (no live-value spills).
    acc_ref[...] += jnp.dot(lhs_ref[...], wconv_ref[...],
                            preferred_element_type=jnp.float32)

    @pl.when(k == pl.num_programs(1) - 1)
    def _():
        # bias + ReLU kept in f32 (no bf16 VPU on v5e); cast only for the head MXU op.
        feats = jnp.maximum(acc_ref[...] + bconv_ref[...], 0.0)
        hh = jnp.dot(feats.astype(jnp.bfloat16), whead_ref[...],
                     preferred_element_type=jnp.float32) + bhead_ref[...]
        h = hh[:, :HEAD_PAD]          # [s_bg | s_fg | reg | 0]
        g = hh[:, HEAD_PAD:]          # [s_fg | s_bg |  0  | 0]   (softmax partners)

        m = jnp.maximum(h, g)
        e_self = jnp.exp(h - m)
        e_other = jnp.exp(g - m)
        prob = e_self * pl.reciprocal(e_self + e_other, approx=True)

        lane = jax.lax.broadcasted_iota(jnp.int32, h.shape, 1)
        out_ref[...] = jnp.where(lane < 2 * num_anchors, prob, h)   # unmasked lane-dense


# ------------------------------ Pallas wrapper ---------------------------------
def fused_rpn_head(lhs, params, rows_pad, cin):
    """lhs: (rows_pad, 9*Cin) bf16 im2col -> (rows_pad, 128) f32 [bg|fg|reg|pad]."""
    cout = params["b_conv"].shape[-1]
    K = 9 * cin
    tk = cin                          # one 3x3 tap per K step -> ~1 MiB bf16 weight block
    assert cin % 128 == 0 and K % tk == 0 and rows_pad % ROW_TILE == 0

    kernel = functools.partial(_fused_rpn_kernel, num_anchors=NUM_ANCHORS)
    return pl.pallas_call(
        kernel,
        out_shape=jax.ShapeDtypeStruct((rows_pad, HEAD_PAD), jnp.float32),
        grid_spec=pltpu.PrefetchScalarGridSpec(
            num_scalar_prefetch=0,
            grid=(rows_pad // ROW_TILE, K // tk),
            in_specs=[
                pl.BlockSpec((ROW_TILE, tk), lambda i, k: (i, k)),        # im2col LHS
                pl.BlockSpec((tk, cout), lambda i, k: (k, 0)),            # conv weight (streamed)
                pl.BlockSpec((1, cout), lambda i, k: (0, 0)),             # conv bias
                pl.BlockSpec((cout, 2 * HEAD_PAD), lambda i, k: (0, 0)),  # packed head weight
                pl.BlockSpec((1, 2 * HEAD_PAD), lambda i, k: (0, 0)),     # packed head bias
            ],
            out_specs=pl.BlockSpec((ROW_TILE, HEAD_PAD), lambda i, k: (i, 0)),
            scratch_shapes=[pltpu.VMEM((ROW_TILE, cout), jnp.float32)],
        ),
        compiler_params=pltpu.CompilerParams(
            dimension_semantics=("parallel", "arbitrary")),
    )(lhs, params["w_conv"], params["b_conv"], params["w_head"], params["b_head"])


# --------------------------- weight pre-packing --------------------------------
def prepare_rpn_params(w_conv, b_conv, w_cls, b_cls, w_reg, b_reg):
    """Pre-transpose / pre-pack all weights ONCE (outside the per-forward hot path)."""
    A = NUM_ANCHORS
    cout, cin = w_conv.shape[0], w_conv.shape[1]

    # (Cout, Cin, 3, 3) -> (kh, kw, Cin, Cout) -> (9*Cin, Cout), bf16.
    # Matches the wrapper's im2col order (kh-major, kw-minor, channel-minor).
    w_conv_p = jnp.transpose(w_conv, (2, 3, 1, 0)).reshape(9 * cin, cout).astype(jnp.bfloat16)
    b_conv_p = b_conv.reshape(1, cout).astype(jnp.float32)

    # 1x1 heads: (2A, Cout)/(4A, Cout) -> (Cout, 2A)/(Cout, 4A)
    wc = jnp.transpose(w_cls)          # cols [0:A)=bg, [A:2A)=fg
    wr = jnp.transpose(w_reg)
    w_main = jnp.concatenate(
        [wc[:, :A], wc[:, A:], wr, jnp.zeros((cout, HEAD_PAD - 6 * A), jnp.float32)], axis=1)
    w_part = jnp.concatenate(
        [wc[:, A:], wc[:, :A], jnp.zeros((cout, HEAD_PAD - 2 * A), jnp.float32)], axis=1)
    w_head_p = jnp.concatenate([w_main, w_part], axis=1).astype(jnp.bfloat16)   # (Cout, 256)

    b_main = jnp.concatenate([b_cls[:A], b_cls[A:], b_reg,
                              jnp.zeros((HEAD_PAD - 6 * A,), jnp.float32)])
    b_part = jnp.concatenate([b_cls[A:], b_cls[:A],
                              jnp.zeros((HEAD_PAD - 2 * A,), jnp.float32)])
    b_head_p = jnp.concatenate([b_main, b_part]).reshape(1, 2 * HEAD_PAD).astype(jnp.float32)

    return {"w_conv": w_conv_p, "b_conv": b_conv_p,
            "w_head": w_head_p, "b_head": b_head_p}


# ------------------------ bbox decode + clip (plain jnp) ------------------------
def _bbox_decode_clip(anchors, deltas, im_w, im_h):
    widths = anchors[:, 2] - anchors[:, 0] + 1.0
    heights = anchors[:, 3] - anchors[:, 1] + 1.0
    ctr_x = anchors[:, 0] + 0.5 * widths
    ctr_y = anchors[:, 1] + 0.5 * heights
    pred_ctr_x = deltas[:, 0] * widths + ctr_x
    pred_ctr_y = deltas[:, 1] * heights + ctr_y
    pred_w = jnp.exp(deltas[:, 2]) * widths
    pred_h = jnp.exp(deltas[:, 3]) * heights
    x1 = jnp.clip(pred_ctr_x - 0.5 * pred_w, 0.0, im_w - 1.0)
    y1 = jnp.clip(pred_ctr_y - 0.5 * pred_h, 0.0, im_h - 1.0)
    x2 = jnp.clip(pred_ctr_x + 0.5 * pred_w, 0.0, im_w - 1.0)
    y2 = jnp.clip(pred_ctr_y + 0.5 * pred_h, 0.0, im_h - 1.0)
    return jnp.stack([x1, y1, x2, y2], axis=1)


# ------------------------------ device-side forward -----------------------------
@jax.jit
def _rpn_device(feature, params, all_anchors, im_info):
    _, cin, H, W = feature.shape
    A = NUM_ANCHORS

    # NCHW -> HWC, cast to bf16 ONCE, zero-pad, im2col (HW, 9*Cin). The im2col LHS
    # lives in HBM and is streamed into the kernel in (ROW_TILE, Cin) blocks.
    x_hwc = jnp.transpose(feature[0], (1, 2, 0)).astype(jnp.bfloat16)       # (H, W, Cin)
    x_pad = jnp.pad(x_hwc, ((1, 1), (1, 1), (0, 0)))                        # (H+2, W+2, Cin)
    lhs = jnp.concatenate(
        [x_pad[kh:kh + H, kw:kw + W, :] for kh in range(3) for kw in range(3)],
        axis=-1).reshape(H * W, 9 * cin)
    hw = H * W
    rows_pad = pl.cdiv(hw, ROW_TILE) * ROW_TILE
    lhs = jnp.pad(lhs, ((0, rows_pad - hw), (0, 0)))

    out = fused_rpn_head(lhs, params, rows_pad, cin)                        # (rows_pad, 128)
    out = out[:hw].reshape(H, W, HEAD_PAD)
    p0 = out[..., :A]                   # bg prob  (H, W, A)
    p1 = out[..., A:2 * A]              # fg prob  (H, W, A)
    reg = out[..., 2 * A:6 * A]         # reg      (H, W, 4A)

    # NCHW-equivalent tensors (parity with the torch module outputs)
    rpn_cls_prob = jnp.transpose(jnp.concatenate([p0, p1], axis=-1), (2, 0, 1))[None]
    rpn_reg_nchw = jnp.transpose(reg, (2, 0, 1))[None]

    # NOTE: assumes the torch 4A reg channels are anchor-major [(dx,dy,dw,dh) per anchor]
    deltas = reg.reshape(-1, 4)
    im_h = im_info[0, 0].astype(jnp.float32)
    im_w = im_info[0, 1].astype(jnp.float32)
    boxes = _bbox_decode_clip(all_anchors, deltas, im_w, im_h)              # (HW*A, 4)
    scores = p1.reshape(-1)                                                 # fg probs
    return rpn_cls_prob, rpn_reg_nchw, boxes, scores


# -------------------------- proposal (host / numpy) ------------------------------
def proposal_host(boxes, scores, min_size, pre_nms_top_n, post_nms_top_n, nms_thresh):
    widths = boxes[:, 2] - boxes[:, 0] + 1
    heights = boxes[:, 3] - boxes[:, 1] + 1
    keep = (widths >= min_size) & (heights >= min_size)
    boxes_keep = boxes[keep]
    scores_keep = scores[keep]
    order = np.argsort(-scores_keep, kind="stable")
    top = order[:pre_nms_top_n]
    boxes_keep = boxes_keep[top]
    scores_keep = scores_keep[top]
    keep_nms = nms_numpy(np.hstack([boxes_keep, scores_keep[:, None]]), nms_thresh)
    keep_nms = keep_nms[:post_nms_top_n]
    boxes_keep = boxes_keep[keep_nms]
    rois = np.zeros((boxes_keep.shape[0], 5), dtype=np.float32)
    rois[:, 1:] = boxes_keep
    return rois


# ------------------------------- RPN forward -------------------------------------
def rpn_forward(feature, gt_boxes, im_info, params, training=False):
    batch, _, H, W = feature.shape
    assert batch == 1, "only support single batch (matches the torch proposal())"
    A = NUM_ANCHORS

    # anchor grid (numpy glue, shape-static)
    anchors = generate_anchors(FEAT_STRIDE, ANCHOR_RATIOS, ANCHOR_SCALES)        # (A, 4)
    shift_x = np.arange(W) * FEAT_STRIDE
    shift_y = np.arange(H) * FEAT_STRIDE
    sx, sy = np.meshgrid(shift_x, shift_y)
    shifts = np.vstack((sx.ravel(), sy.ravel(), sx.ravel(), sy.ravel())).transpose()
    all_anchors = (anchors.reshape(1, A, 4) +
                   shifts.reshape(-1, 1, 4)).reshape(-1, 4).astype(np.float32)   # (HW*A, 4)

    rpn_cls_prob, rpn_reg_nchw, boxes, scores = _rpn_device(
        feature, params, jnp.asarray(all_anchors), im_info)

    boxes.block_until_ready()
    scores.block_until_ready()

    # TODO(synk): data-dependent min-size filter / descending sort / NMS have no clean
    # fixed-shape Pallas equivalent; done on host in numpy.
    rois = proposal_host(np.asarray(boxes), np.asarray(scores), MIN_SIZE,
                         PRE_NMS_TOP_N, POST_NMS_TOP_N, NMS_THRESH)

    # TODO(synk): training branch (anchor_target, cross_entropy, smooth_L1) omitted — eval only.
    rpn_cls_loss = 0.0
    rpn_reg_loss = 0.0
    aux = {"rpn_cls_prob": rpn_cls_prob, "rpn_reg": rpn_reg_nchw}
    return rois, rpn_cls_loss, rpn_reg_loss, aux


# -------------------------- pure-JAX reference (f32) ------------------------------
def _reference_head(feature, w_conv, b_conv, w_cls, b_cls, w_reg, b_reg):
    _, cin, H, W = feature.shape
    A = NUM_ANCHORS
    x = jnp.transpose(feature[0], (1, 2, 0))
    xp = jnp.pad(x, ((1, 1), (1, 1), (0, 0)))
    lhs = jnp.concatenate(
        [xp[kh:kh + H, kw:kw + W, :] for kh in range(3) for kw in range(3)],
        axis=-1).reshape(H * W, 9 * cin)
    wk = jnp.transpose(w_conv, (2, 3, 1, 0)).reshape(9 * cin, -1)
    feats = jnp.maximum(lhs @ wk + b_conv, 0.0)
    cls = feats @ w_cls.T + b_cls
    reg = feats @ w_reg.T + b_reg
    s0, s1 = cls[:, :A], cls[:, A:]
    m = jnp.maximum(s0, s1)
    e0, e1 = jnp.exp(s0 - m), jnp.exp(s1 - m)
    p0 = e0 / (e0 + e1)
    p1 = e1 / (e0 + e1)
    return (p0.reshape(H, W, A), p1.reshape(H, W, A), reg.reshape(H, W, 4 * A))


# ------------------------------------ main ----------------------------------------
if __name__ == "__main__":
    H = W = 16
    CIN, CMID = 1024, 512          # fixed by the module's __init__ (1024 -> 512)
    A = NUM_ANCHORS

    key = jax.random.PRNGKey(0)
    k_feat, k_conv, k_cls, k_reg = jax.random.split(key, 4)

    feature = jax.random.normal(k_feat, (1, CIN, H, W), jnp.float32)
    gt_boxes = jnp.zeros((1, 1, 5), jnp.float32)   # unused in eval mode
    im_info = jnp.array([[H * FEAT_STRIDE, W * FEAT_STRIDE, 1.0]], jnp.float32)

    # deterministic synthetic parameters (shapes per the torch module)
    w_conv = 0.01 * jax.random.normal(k_conv, (CMID, CIN, 3, 3), jnp.float32)
    b_conv = jnp.zeros((CMID,), jnp.float32)
    w_cls = 0.01 * jax.random.normal(k_cls, (2 * A, CMID), jnp.float32)   # 1x1 conv
    b_cls = jnp.zeros((2 * A,), jnp.float32)
    w_reg = 0.01 * jax.random.normal(k_reg, (4 * A, CMID), jnp.float32)   # 1x1 conv
    b_reg = jnp.zeros((4 * A,), jnp.float32)

    # pre-pack weights once (bf16 K=9*Cin conv matrix + lane-dense fused head matrix)
    params = prepare_rpn_params(w_conv, b_conv, w_cls, b_cls, w_reg, b_reg)
    for v in params.values():
        v.block_until_ready()

    rois, cls_loss, reg_loss, aux = rpn_forward(
        feature, gt_boxes, im_info, params, training=False)
    aux["rpn_cls_prob"].block_until_ready()
    aux["rpn_reg"].block_until_ready()

    # parity vs f32 pure-JAX reference (loose tolerance: bf16 MXU + approx reciprocal)
    p0_ref, p1_ref, reg_ref = _reference_head(feature, w_conv, b_conv, w_cls, b_cls, w_reg, b_reg)
    cls_prob = np.asarray(aux["rpn_cls_prob"][0])                  # (2A, H, W)
    p0_k = np.transpose(cls_prob[:A], (1, 2, 0))
    p1_k = np.transpose(cls_prob[A:], (1, 2, 0))
    reg_k = np.transpose(np.asarray(aux["rpn_reg"][0]), (1, 2, 0))
    np.testing.assert_allclose(p0_k, np.asarray(p0_ref), atol=5e-2, rtol=5e-2)
    np.testing.assert_allclose(p1_k, np.asarray(p1_ref), atol=5e-2, rtol=5e-2)
    np.testing.assert_allclose(reg_k, np.asarray(reg_ref), atol=5e-2, rtol=5e-2)

    assert rois.ndim == 2 and rois.shape[1] == 5
    assert np.all(np.isfinite(rois))
    print("KERNEL_OK")
</pallas_src>

<mosaic_0001>
module attributes {stable_mosaic.version = 11 : i64} {
  func.func @_fused_rpn_kernel(%arg0: i32, %arg1: i32, %arg2: memref<128x1024xbf16, #tpu.memory_space<vmem>>, %arg3: memref<1024x512xbf16, #tpu.memory_space<vmem>>, %arg4: memref<1x512xf32, #tpu.memory_space<vmem>>, %arg5: memref<512x256xbf16, #tpu.memory_space<vmem>>, %arg6: memref<1x256xf32, #tpu.memory_space<vmem>>, %arg7: memref<128x128xf32, #tpu.memory_space<vmem>>, %arg8: memref<128x512xf32, #tpu.memory_space<vmem>>) attributes {dimension_semantics = [#tpu.dimension_semantics<parallel>, #tpu.dimension_semantics<arbitrary>], iteration_bounds = array<i64: 2, 9>, scalar_prefetch = 0 : i64, scratch_operands = 1 : i64, tpu.core_type = #tpu.core_type<tc>, window_params = [{transform_indices = @transform_0, window_bounds = array<i64: 128, 1024>}, {transform_indices = @transform_1, window_bounds = array<i64: 1024, 512>}, {pipeline_mode = #tpu.pipeline_mode<synchronous>, transform_indices = @transform_2, window_bounds = array<i64: 1, 512>}, {pipeline_mode = #tpu.pipeline_mode<synchronous>, transform_indices = @transform_3, window_bounds = array<i64: 512, 256>}, {pipeline_mode = #tpu.pipeline_mode<synchronous>, transform_indices = @transform_4, window_bounds = array<i64: 1, 256>}, {transform_indices = @transform_5, window_bounds = array<i64: 128, 128>}]} {
    %c0_i32 = arith.constant 0 : i32
    %0 = arith.cmpi eq, %arg1, %c0_i32 : i32
    %1 = arith.extui %0 : i1 to i32
    %c0_i32_0 = arith.constant 0 : i32
    %2 = arith.cmpi ne, %1, %c0_i32_0 : i32
    scf.if %2 {
      %cst_9 = arith.constant 0.000000e+00 : f32
      %12 = vector.broadcast %cst_9 : f32 to vector<128x512xf32>
      %c0_10 = arith.constant 0 : index
      %c0_11 = arith.constant 0 : index
      %13 = vector.load %arg8[%c0_10, %c0_11] : memref<128x512xf32, #tpu.memory_space<vmem>>, vector<128x512xf32>
      tpu.vector_store %arg8[%c0_10, %c0_11], %12 {strides = array<i32>} : memref<128x512xf32, #tpu.memory_space<vmem>>, vector<128x512xf32>,
    } else {
    }
    %c0 = arith.constant 0 : index
    %c0_1 = arith.constant 0 : index
    %3 = vector.load %arg8[%c0, %c0_1] : memref<128x512xf32, #tpu.memory_space<vmem>>, vector<128x512xf32>
    %c0_2 = arith.constant 0 : index
    %c0_3 = arith.constant 0 : index
    %4 = vector.load %arg2[%c0_2, %c0_3] : memref<128x1024xbf16, #tpu.memory_space<vmem>>, vector<128x1024xbf16>
    %c0_4 = arith.constant 0 : index
    %c0_5 = arith.constant 0 : index
    %5 = vector.load %arg3[%c0_4, %c0_5] : memref<1024x512xbf16, #tpu.memory_space<vmem>>, vector<1024x512xbf16>
    %cst = arith.constant dense<0.000000e+00> : vector<128x512xf32>
    %6 = tpu.matmul %4, %5, %cst {dimension_numbers = #tpu.dot_dimension_numbers<[1], [0], [0], [1], [0, 0, 1, 1], [], []>} : vector<128x1024xbf16>, vector<1024x512xbf16>, vector<128x512xf32> -> vector<128x512xf32>
    %7 = arith.addf %3, %6 : vector<128x512xf32>
    %c0_6 = arith.constant 0 : index
    %c0_7 = arith.constant 0 : index
    %8 = vector.load %arg8[%c0_6, %c0_7] : memref<128x512xf32, #tpu.memory_space<vmem>>, vector<128x512xf32>
    tpu.vector_store %arg8[%c0_6, %c0_7], %7 {strides = array<i32>} : memref<128x512xf32, #tpu.memory_space<vmem>>, vector<128x512xf32>,
    %c8_i32 = arith.constant 8 : i32
    %9 = arith.cmpi eq, %arg1, %c8_i32 : i32
    %10 = arith.extui %9 : i1 to i32
    %c0_i32_8 = arith.constant 0 : i32
    %11 = arith.cmpi ne, %10, %c0_i32_8 : i32
    scf.if %11 {
      %c0_9 = arith.constant 0 : index
      %c0_10 = arith.constant 0 : index
      %12 = vector.load %arg8[%c0_9, %c0_10] : memref<128x512xf32, #tpu.memory_space<vmem>>, vector<128x512xf32>
      %c0_11 = arith.constant 0 : index
      %c0_12 = arith.constant 0 : index
      %13 = vector.load %arg4[%c0_11, %c0_12] : memref<1x512xf32, #tpu.memory_space<vmem>>, vector<1x512xf32>
      %14 = vector.broadcast %13 : vector<1x512xf32> to vector<128x512xf32>
      %15 = arith.addf %12, %14 : vector<128x512xf32>
      %cst_13 = arith.constant 0.000000e+00 : f32
      %16 = vector.broadcast %cst_13 : f32 to vector<128x512xf32>
      %17 = arith.maximumf %15, %16 : vector<128x512xf32>
      %18 = arith.truncf %17 : vector<128x512xf32> to vector<128x512xbf16>
      %c0_14 = arith.constant 0 : index
      %c0_15 = arith.constant 0 : index
      %19 = vector.load %arg5[%c0_14, %c0_15] : memref<512x256xbf16, #tpu.memory_space<vmem>>, vector<512x256xbf16>
      %cst_16 = arith.constant dense<0.000000e+00> : vector<128x256xf32>
      %20 = tpu.matmul %18, %19, %cst_16 {dimension_numbers = #tpu.dot_dimension_numbers<[1], [0], [0], [1], [0, 0, 1, 1], [], []>} : vector<128x512xbf16>, vector<512x256xbf16>, vector<128x256xf32> -> vector<128x256xf32>
      %c0_17 = arith.constant 0 : index
      %c0_18 = arith.constant 0 : index
      %21 = vector.load %arg6[%c0_17, %c0_18] : memref<1x256xf32, #tpu.memory_space<vmem>>, vector<1x256xf32>
      %22 = vector.broadcast %21 : vector<1x256xf32> to vector<128x256xf32>
      %23 = arith.addf %20, %22 : vector<128x256xf32>
      %24 = vector.extract_strided_slice %23 {offsets = [0, 0], sizes = [128, 128], strides = [1, 1]} : vector<128x256xf32> to vector<128x128xf32>
      %25 = vector.extract_strided_slice %23 {offsets = [0, 128], sizes = [128, 128], strides = [1, 1]} : vector<128x256xf32> to vector<128x128xf32>
      %26 = arith.maximumf %24, %25 : vector<128x128xf32>
      %27 = arith.subf %24, %26 : vector<128x128xf32>
      %28 = math.exp %27 : vector<128x128xf32>
      %29 = arith.subf %25, %26 : vector<128x128xf32>
      %30 = math.exp %29 : vector<128x128xf32>
      %31 = arith.addf %28, %30 : vector<128x128xf32>
      %32 = tpu.reciprocal %31 {approx = true} : vector<128x128xf32> -> vector<128x128xf32>
      %33 = arith.mulf %28, %32 : vector<128x128xf32>
      %34 = tpu.iota {dimensions = array<i32: 1>} : vector<128x128xi32>
      %c18_i32 = arith.constant 18 : i32
      %35 = vector.broadcast %c18_i32 : i32 to vector<128x128xi32>
      %36 = arith.cmpi slt, %34, %35 : vector<128x128xi32>
      %37 = arith.select %36, %33, %24 : vector<128x128xi1>, vector<128x128xf32>
      %c0_19 = arith.constant 0 : index
      %c0_20 = arith.constant 0 : index
      %38 = vector.load %arg7[%c0_19, %c0_20] : memref<128x128xf32, #tpu.memory_space<vmem>>, vector<128x128xf32>
      tpu.vector_store %arg7[%c0_19, %c0_20], %37 {strides = array<i32>} : memref<128x128xf32, #tpu.memory_space<vmem>>, vector<128x128xf32>,
    } else {
    }
    return
  }
  func.func @transform_0(%arg0: i32, %arg1: i32) -> (i32, i32) {
    %c0_i32 = arith.constant 0 : i32
    return %arg0, %arg1 : i32, i32
  }
  func.func @transform_1(%arg0: i32, %arg1: i32) -> (i32, i32) {
    %c0_i32 = arith.constant 0 : i32
    %c0_i32_0 = arith.constant 0 : i32
    return %arg1, %c0_i32 : i32, i32
  }
  func.func @transform_2(%arg0: i32, %arg1: i32) -> (i32, i32) {
    %c0_i32 = arith.constant 0 : i32
    %c0_i32_0 = arith.constant 0 : i32
    %c0_i32_1 = arith.constant 0 : i32
    return %c0_i32, %c0_i32_0 : i32, i32
  }
  func.func @transform_3(%arg0: i32, %arg1: i32) -> (i32, i32) {
    %c0_i32 = arith.constant 0 : i32
    %c0_i32_0 = arith.constant 0 : i32
    %c0_i32_1 = arith.constant 0 : i32
    return %c0_i32, %c0_i32_0 : i32, i32
  }
  func.func @transform_4(%arg0: i32, %arg1: i32) -> (i32, i32) {
    %c0_i32 = arith.constant 0 : i32
    %c0_i32_0 = arith.constant 0 : i32
    %c0_i32_1 = arith.constant 0 : i32
    return %c0_i32, %c0_i32_0 : i32, i32
  }
  func.func @transform_5(%arg0: i32, %arg1: i32) -> (i32, i32) {
    %c0_i32 = arith.constant 0 : i32
    %c0_i32_0 = arith.constant 0 : i32
    return %arg0, %c0_i32 : i32, i32
  }
}

</mosaic_0001>

<llo_original>
// kernel: _rpn_device.1
$region0: #{_rpn_device.1}
  #allocation0 [shape = 'u32[]', space=smem, size = 0x4, offset = 0x4, fixed_abs, tag = 'smem constant byte address 0x4 - core index']
  #allocation1 [shape = 'u32[144,128]{1,0:T(1,128)}', space=vmem, size = 0x12000, scoped, tag = 'internal scratch']
  #allocation2 [shape = 'f32[128,512]{1,0:T(8,128)}', space=vmem, size = 0x40000, scoped, tag = 'scratch operand']
  %s0 = inlined_call_operand.vmem [shape: bf16[256,9216], index: 0, kind: input, shape index: {}]
  %s1 = inlined_call_operand.vmem [shape: bf16[9216,512], index: 1, kind: input, shape index: {}]
  %s2 = inlined_call_operand.vmem [shape: f32[1,512], index: 2, kind: input, shape index: {}]
  %s3 = inlined_call_operand.vmem [shape: bf16[512,256], index: 3, kind: input, shape index: {}]
  %s4 = inlined_call_operand.vmem [shape: f32[1,256], index: 4, kind: input, shape index: {}]
  %s5 = inlined_call_operand.vmem [shape: f32[256,128], index: 5, kind: output, shape index: {}]
  %s6 = sld [smem:[#allocation0]]
  $region84: #{_rpn_device.1} parent=0
    _
  %s8 = ssub.s32 1, %s6
  %s9 = scalar_select 0, %s8, %s6
  $region1: #{_rpn_device.1} parent=0
    #allocation3 [shape = 'u8[524288]{0}', space=vmem, size = 0x80000, scoped, tag = 'input window, operand 0']
    loop: start=0, step=1, limit=20
    $region2: #{_rpn_device.1} parent=1 // loop_pre_header
      _
    $region3: #{_rpn_device.1} parent=1 // loop_header
      %s11 = sphi 0, %s15
      %p12 = scmp.ge.s32.totalorder %s11, 20
      %s18 = sphi 0, %s30
      %s19 = sphi 0, %s26
      %s20 = sphi 0, %s18
      %s21 = sphi 0, %s19
      %s22 = sphi 0, %s20
      %s23 = sphi 0, %s21
      %s35 = sphi 0, %s37
      %s38 = sphi 0, %s35
      %s39 = sphi 0, %s38
      %s55 = sphi 0, %s39
      %s61 = sphi 0, %s63
      %s64 = sphi 0, %s61
      %s65 = sphi 0, %s64
      %s81 = sphi 0, %s65
      %s85 = sphi 0, %s85
      %s87 = sphi 0, %s85
      %s88 = sphi 0, %s87
      %s102 = sphi 0, %s88
      %s106 = sphi 0, %s106
      %s108 = sphi 0, %s106
      %s109 = sphi 0, %s108
      %s123 = sphi 0, %s109
      %s127 = sphi 0, %s127
      %s129 = sphi 0, %s127
      %s130 = sphi 0, %s129
      %s144 = sphi 0, %s130
      %s150 = sphi 0, %s152
      %s153 = sphi 0, %s150
      %s154 = sphi 0, %s153
      %s170 = sphi 0, %s154
    $region4: #{_rpn_device.1} parent=1 // loop_header_branch
      %14 = sbr.rel (%p12) target = $region8
    $region5: #{_rpn_device.1} parent=1 // loop_body
      %s16 = ssub.s32 %s11, 1
      %s17 = ssub.s32 %s11, 2
      %s24 = sadd.s32 1, %s19
      %p25 = scmp.ge.s32.totalorder %s24, 9
      %s26 = scalar_select %p25, 0, %s24
      %s27 = sadd.s32 1, %s18
      %s28 = scalar_select %p25, %s27, %s18
      %p29 = scmp.ge.s32.totalorder %s28, 2
      %s30 = scalar_select %p29, 0, %s28
      %s31 = ssub.s32 %s18, %s30
      %s32 = ssub.s32 %s19, %s26
      %s33 = sor.u32 %s31, %s32
      %p34 = scmp.eq.s32.totalorder %s33, 0
      %s36 = sadd.s32 %s35, 1
      %s37 = scalar_select %p34, %s35, %s36
      %p40 = pneg %p34
      %p41 = scmp.eq.s32.totalorder %s11, 17
      %p42 = por %p40, %p41
      %p43 = scmp.ne.s32.totalorder %s35, %s38
      %p44 = scmp.eq.s32.totalorder %s11, 0
      %p45 = por %p43, %p44
      %p46 = scmp.ne.s32.totalorder %s35, %s38
      %p47 = scmp.eq.s32.totalorder %s16, 17
      %p48 = por %p46, %p47
      %p49 = scmp.ne.s32.totalorder %s38, %s39
      %p50 = scmp.eq.s32.totalorder %s16, 0
      %p51 = por %p49, %p50
      %p52 = scmp.ne.s32.totalorder %s38, %s39
      %p53 = scmp.eq.s32.totalorder %s17, 17
      %p54 = por %p52, %p53
      %p56 = scmp.ne.s32.totalorder %s39, %s55
      %p57 = scmp.eq.s32.totalorder %s17, 0
      %p58 = por %p56, %p57
      %s59 = ssub.s32 %s19, %s26
      %p60 = scmp.eq.s32.totalorder %s59, 0
      %s62 = sadd.s32 %s61, 1
      %s63 = scalar_select %p60, %s61, %s62
      %p66 = pneg %p60
      %p67 = scmp.eq.s32.totalorder %s11, 17
      %p68 = por %p66, %p67
      %p69 = scmp.ne.s32.totalorder %s61, %s64
      %p70 = scmp.eq.s32.totalorder %s11, 0
      %p71 = por %p69, %p70
      %p72 = scmp.ne.s32.totalorder %s61, %s64
      %p73 = scmp.eq.s32.totalorder %s16, 17
      %p74 = por %p72, %p73
      %p75 = scmp.ne.s32.totalorder %s64, %s65
      %p76 = scmp.eq.s32.totalorder %s16, 0
      %p77 = por %p75, %p76
      %p78 = scmp.ne.s32.totalorder %s64, %s65
      %p79 = scmp.eq.s32.totalorder %s17, 17
      %p80 = por %p78, %p79
      %p82 = scmp.ne.s32.totalorder %s65, %s81
      %p83 = scmp.eq.s32.totalorder %s17, 0
      %p84 = por %p82, %p83
      %s86 = sadd.s32 %s85, 1
      %p89 = scmp.eq.s32.totalorder %s11, 17
      %p90 = scmp.ne.s32.totalorder %s85, %s87
      %p91 = scmp.eq.s32.totalorder %s11, 0
      %p92 = por %p90, %p91
      %p93 = scmp.ne.s32.totalorder %s85, %s87
      %p94 = scmp.eq.s32.totalorder %s16, 17
      %p95 = por %p93, %p94
      %p96 = scmp.ne.s32.totalorder %s87, %s88
      %p97 = scmp.eq.s32.totalorder %s16, 0
      %p98 = por %p96, %p97
      %p99 = scmp.ne.s32.totalorder %s87, %s88
      %p100 = scmp.eq.s32.totalorder %s17, 17
      %p101 = por %p99, %p100
      %p103 = scmp.ne.s32.totalorder %s88, %s102
      %p104 = scmp.eq.s32.totalorder %s17, 0
      %p105 = por %p103, %p104
      %s107 = sadd.s32 %s106, 1
      %p110 = scmp.eq.s32.totalorder %s11, 17
      %p111 = scmp.ne.s32.totalorder %s106, %s108
      %p112 = scmp.eq.s32.totalorder %s11, 0
      %p113 = por %p111, %p112
      %p114 = scmp.ne.s32.totalorder %s106, %s108
      %p115 = scmp.eq.s32.totalorder %s16, 17
      %p116 = por %p114, %p115
      %p117 = scmp.ne.s32.totalorder %s108, %s109
      %p118 = scmp.eq.s32.totalorder %s16, 0
      %p119 = por %p117, %p118
      %p120 = scmp.ne.s32.totalorder %s108, %s109
      %p121 = scmp.eq.s32.totalorder %s17, 17
      %p122 = por %p120, %p121
      %p124 = scmp.ne.s32.totalorder %s109, %s123
      %p125 = scmp.eq.s32.totalorder %s17, 0
      %p126 = por %p124, %p125
      %s128 = sadd.s32 %s127, 1
      %p131 = scmp.eq.s32.totalorder %s11, 17
      %p132 = scmp.ne.s32.totalorder %s127, %s129
      %p133 = scmp.eq.s32.totalorder %s11, 0
      %p134 = por %p132, %p133
      %p135 = scmp.ne.s32.totalorder %s127, %s129
      %p136 = scmp.eq.s32.totalorder %s16, 17
      %p137 = por %p135, %p136
      %p138 = scmp.ne.s32.totalorder %s129, %s130
      %p139 = scmp.eq.s32.totalorder %s16, 0
      %p140 = por %p138, %p139
      %p141 = scmp.ne.s32.totalorder %s129, %s130
      %p142 = scmp.eq.s32.totalorder %s17, 17
      %p143 = por %p141, %p142
      %p145 = scmp.ne.s32.totalorder %s130, %s144
      %p146 = scmp.eq.s32.totalorder %s17, 0
      %p147 = por %p145, %p146
      %s148 = ssub.s32 %s18, %s30
      %p149 = scmp.eq.s32.totalorder %s148, 0
      %s151 = sadd.s32 %s150, 1
      %s152 = scalar_select %p149, %s150, %s151
      %p155 = pneg %p149
      %p156 = scmp.eq.s32.totalorder %s11, 17
      %p157 = por %p155, %p156
      %p158 = scmp.ne.s32.totalorder %s150, %s153
      %p159 = scmp.eq.s32.totalorder %s11, 0
      %p160 = por %p158, %p159
      %p161 = scmp.ne.s32.totalorder %s150, %s153
      %p162 = scmp.eq.s32.totalorder %s16, 17
      %p163 = por %p161, %p162
      %p164 = scmp.ne.s32.totalorder %s153, %s154
      %p165 = scmp.eq.s32.totalorder %s16, 0
      %p166 = por %p164, %p165
      %p167 = scmp.ne.s32.totalorder %s153, %s154
      %p168 = scmp.eq.s32.totalorder %s17, 17
      %p169 = por %p167, %p168
      %p171 = scmp.ne.s32.totalorder %s154, %s170
      %p172 = scmp.eq.s32.totalorder %s17, 0
      %p173 = por %p171, %p172
      %p174 = scmp.le.s32.totalorder 1, %s11
      %p175 = scmp.lt.s32.totalorder %s11, 19
      %p176 = pnand %p174, %p175
      %p177 = pneg %p176
      // Predicated region
      $region9: #{_rpn_device.1} parent=5 // pred_check
        _
      $region10: #{_rpn_device.1} parent=5 // pred_check_branch
        %179 = sbr.rel (%p176) target = $region12
      $region11: #{_rpn_device.1} parent=5 // pred_region
        %s180 = ssub.s32 %s11, 1
        // Predicated region
        $region13: #{_rpn_device.1} parent=11 // pred_check
          %p181 = pneg %p98
        $region14: #{_rpn_device.1} parent=11 // pred_check_branch
          %183 = sbr.rel (%p181) target = $region16
        $region15: #{_rpn_device.1} parent=11 // pred_region
          _
        $region16: #{_rpn_device.1} parent=11 // pred_fallthru
          _
        // Predicated region
        $region17: #{_rpn_device.1} parent=11 // pred_check
          %p184 = pneg %p119
        $region18: #{_rpn_device.1} parent=11 // pred_check_branch
          %186 = sbr.rel (%p184) target = $region20
        $region19: #{_rpn_device.1} parent=11 // pred_region
          _
        $region20: #{_rpn_device.1} parent=11 // pred_fallthru
          _
        // Predicated region
        $region21: #{_rpn_device.1} parent=11 // pred_check
          %p187 = pneg %p140
        $region22: #{_rpn_device.1} parent=11 // pred_check_branch
          %189 = sbr.rel (%p187) target = $region24
        $region23: #{_rpn_device.1} parent=11 // pred_region
          _
        $region24: #{_rpn_device.1} parent=11 // pred_fallthru
          _
      $region12: #{_rpn_device.1} parent=5 // pred_fallthru
        _
      %p190 = scmp.lt.s32.totalorder %s11, 18
      // Predicated region
      $region25: #{_rpn_device.1} parent=5 // pred_check
        %p191 = pneg %p190
      $region26: #{_rpn_device.1} parent=5 // pred_check_branch
        %193 = sbr.rel (%p191) target = $region28
      $region27: #{_rpn_device.1} parent=5 // pred_region
        // Predicated region
        $region29: #{_rpn_device.1} parent=27 // pred_check
          %p194 = pneg %p45
        $region30: #{_rpn_device.1} parent=27 // pred_check_branch
          %196 = sbr.rel (%p194) target = $region32
        $region31: #{_rpn_device.1} parent=27 // pred_region
          %s197 = sand.u32 %s35, 1
          %s198 = sand.u32 %s35, 1
          %s199 = smul.addr %s198, 512
          %s200 = scalar_lea.vmem [#allocation3], %s199
          %s201 = smul.u32 16, %s18
          %s202 = smul.u32 8, %s19
          %s203 = smul.addr %s201, 72
          %s204 = sadd.s32 %s202, %s203
          %s205 = smul.addr %s204, 4
          %s206 = scalar_lea.vmem %s0, %s205
          // Predicated region
          $region33: #{_rpn_device.1} parent=31 // pred_check
            _
          $region34: #{_rpn_device.1} parent=31 // pred_check_branch
            %208 = sbr.rel (0) target = $region36
          $region35: #{_rpn_device.1} parent=31 // pred_region
            // Predicated region
            $region37: #{_rpn_device.1} parent=35 // pred_check
              _
            $region38: #{_rpn_device.1} parent=35 // pred_check_branch
              %210 = sbr.rel (0) target = $region40
            $region39: #{_rpn_device.1} parent=35 // pred_region
              loop: start=0, step=1, limit=1
              $region41: #{_rpn_device.1} parent=39 // loop_pre_header
                _
              $region42: #{_rpn_device.1} parent=39 // loop_header
                %s212 = sphi 0, %s216
                %p213 = scmp.ge.s32.totalorder %s212, 1
                %s217 = sphi %s206, %s206
                %s218 = sphi %s200, %s200
              $region43: #{_rpn_device.1} parent=39 // loop_header_branch
                %215 = sbr.rel (%p213) target = $region47
              $region44: #{_rpn_device.1} parent=39 // loop_body
                %v219 = vld [vmem:[%s217] sm:$0xff]
                %220 = vst [vmem:[%s218] sm:$0xff] %v219
                %v221 = vld [vmem:[%s217 + $0x8] sm:$0xff]
                %222 = vst [vmem:[%s218 + $0x8] sm:$0xff] %v221
                %v223 = vld [vmem:[%s217 + $0x10] sm:$0xff]
                %224 = vst [vmem:[%s218 + $0x10] sm:$0xff] %v223
                %v225 = vld [vmem:[%s217 + $0x18] sm:$0xff]
                %226 = vst [vmem:[%s218 + $0x18] sm:$0xff] %v225
                %v227 = vld [vmem:[%s217 + $0x120] sm:$0xff]
                %228 = vst [vmem:[%s218 + $0x20] sm:$0xff] %v227
                %v229 = vld [vmem:[%s217 + $0x128] sm:$0xff]
                %230 = vst [vmem:[%s218 + $0x28] sm:$0xff] %v229
                %v231 = vld [vmem:[%s217 + $0x130] sm:$0xff]
                %232 = vst [vmem:[%s218 + $0x30] sm:$0xff] %v231
                %v233 = vld [vmem:[%s217 + $0x138] sm:$0xff]
                %234 = vst [vmem:[%s218 + $0x38] sm:$0xff] %v233
                %v235 = vld [vmem:[%s217 + $0x240] sm:$0xff]
                %236 = vst [vmem:[%s218 + $0x40] sm:$0xff] %v235
                %v237 = vld [vmem:[%s217 + $0x248] sm:$0xff]
                %238 = vst [vmem:[%s218 + $0x48] sm:$0xff] %v237
                %v239 = vld [vmem:[%s217 + $0x250] sm:$0xff]
                %240 = vst [vmem:[%s218 + $0x50] sm:$0xff] %v239
                %v241 = vld [vmem:[%s217 + $0x258] sm:$0xff]
                %242 = vst [vmem:[%s218 + $0x58] sm:$0xff] %v241
                %v243 = vld [vmem:[%s217 + $0x360] sm:$0xff]
                %244 = vst [vmem:[%s218 + $0x60] sm:$0xff] %v243
                %v245 = vld [vmem:[%s217 + $0x368] sm:$0xff]
                %246 = vst [vmem:[%s218 + $0x68] sm:$0xff] %v245
                %v247 = vld [vmem:[%s217 + $0x370] sm:$0xff]
                %248 = vst [vmem:[%s218 + $0x70] sm:$0xff] %v247
                %v249 = vld [vmem:[%s217 + $0x378] sm:$0xff]
                %250 = vst [vmem:[%s218 + $0x78] sm:$0xff] %v249
                %v251 = vld [vmem:[%s217 + $0x480] sm:$0xff]
                %252 = vst [vmem:[%s218 + $0x80] sm:$0xff] %v251
                %v253 = vld [vmem:[%s217 + $0x488] sm:$0xff]
                %254 = vst [vmem:[%s218 + $0x88] sm:$0xff] %v253
                %v255 = vld [vmem:[%s217 + $0x490] sm:$0xff]
                %256 = vst [vmem:[%s218 + $0x90] sm:$0xff] %v255
                %v257 = vld [vmem:[%s217 + $0x498] sm:$0xff]
                %258 = vst [vmem:[%s218 + $0x98] sm:$0xff] %v257
                %v259 = vld [vmem:[%s217 + $0x5a0] sm:$0xff]
                %260 = vst [vmem:[%s218 + $0xa0] sm:$0xff] %v259
                %v261 = vld [vmem:[%s217 + $0x5a8] sm:$0xff]
                %262 = vst [vmem:[%s218 + $0xa8] sm:$0xff] %v261
                %v263 = vld [vmem:[%s217 + $0x5b0] sm:$0xff]
                %264 = vst [vmem:[%s218 + $0xb0] sm:$0xff] %v263
                %v265 = vld [vmem:[%s217 + $0x5b8] sm:$0xff]
                %266 = vst [vmem:[%s218 + $0xb8] sm:$0xff] %v265
                %v267 = vld [vmem:[%s217 + $0x6c0] sm:$0xff]
                %268 = vst [vmem:[%s218 + $0xc0] sm:$0xff] %v267
                %v269 = vld [vmem:[%s217 + $0x6c8] sm:$0xff]
                %270 = vst [vmem:[%s218 + $0xc8] sm:$0xff] %v269
                %v271 = vld [vmem:[%s217 + $0x6d0] sm:$0xff]
                %272 = vst [vmem:[%s218 + $0xd0] sm:$0xff] %v271
                %v273 = vld [vmem:[%s217 + $0x6d8] sm:$0xff]
                %274 = vst [vmem:[%s218 + $0xd8] sm:$0xff] %v273
                %v275 = vld [vmem:[%s217 + $0x7e0] sm:$0xff]
                %276 = vst [vmem:[%s218 + $0xe0] sm:$0xff] %v275
                %v277 = vld [vmem:[%s217 + $0x7e8] sm:$0xff]
                %278 = vst [vmem:[%s218 + $0xe8] sm:$0xff] %v277
                %v279 = vld [vmem:[%s217 + $0x7f0] sm:$0xff]
                %280 = vst [vmem:[%s218 + $0xf0] sm:$0xff] %v279
                %v281 = vld [vmem:[%s217 + $0x7f8] sm:$0xff]
                %282 = vst [vmem:[%s218 + $0xf8] sm:$0xff] %v281
                %v283 = vld [vmem:[%s217 + $0x900] sm:$0xff]
                %284 = vst [vmem:[%s218 + $0x100] sm:$0xff] %v283
                %v285 = vld [vmem:[%s217 + $0x908] sm:$0xff]
                %286 = vst [vmem:[%s218 + $0x108] sm:$0xff] %v285
                %v287 = vld [vmem:[%s217 + $0x910] sm:$0xff]
                %288 = vst [vmem:[%s218 + $0x110] sm:$0xff] %v287
                %v289 = vld [vmem:[%s217 + $0x918] sm:$0xff]
                %290 = vst [vmem:[%s218 + $0x118] sm:$0xff] %v289
                %v291 = vld [vmem:[%s217 + $0xa20] sm:$0xff]
                %292 = vst [vmem:[%s218 + $0x120] sm:$0xff] %v291
                %v293 = vld [vmem:[%s217 + $0xa28] sm:$0xff]
                %294 = vst [vmem:[%s218 + $0x128] sm:$0xff] %v293
                %v295 = vld [vmem:[%s217 + $0xa30] sm:$0xff]
                %296 = vst [vmem:[%s218 + $0x130] sm:$0xff] %v295
                %v297 = vld [vmem:[%s217 + $0xa38] sm:$0xff]
                %298 = vst [vmem:[%s218 + $0x138] sm:$0xff] %v297
                %v299 = vld [vmem:[%s217 + $0xb40] sm:$0xff]
                %300 = vst [vmem:[%s218 + $0x140] sm:$0xff] %v299
                %v301 = vld [vmem:[%s217 + $0xb48] sm:$0xff]
                %302 = vst [vmem:[%s218 + $0x148] sm:$0xff] %v301
                %v303 = vld [vmem:[%s217 + $0xb50] sm:$0xff]
                %304 = vst [vmem:[%s218 + $0x150] sm:$0xff] %v303
                %v305 = vld [vmem:[%s217 + $0xb58] sm:$0xff]
                %306 = vst [vmem:[%s218 + $0x158] sm:$0xff] %v305
                %v307 = vld [vmem:[%s217 + $0xc60] sm:$0xff]
                %308 = vst [vmem:[%s218 + $0x160] sm:$0xff] %v307
                %v309 = vld [vmem:[%s217 + $0xc68] sm:$0xff]
                %310 = vst [vmem:[%s218 + $0x168] sm:$0xff] %v309
                %v311 = vld [vmem:[%s217 + $0xc70] sm:$0xff]
                %312 = vst [vmem:[%s218 + $0x170] sm:$0xff] %v311
                %v313 = vld [vmem:[%s217 + $0xc78] sm:$0xff]
                %314 = vst [vmem:[%s218 + $0x178] sm:$0xff] %v313
                %v315 = vld [vmem:[%s217 + $0xd80] sm:$0xff]
                %316 = vst [vmem:[%s218 + $0x180] sm:$0xff] %v315
                %v317 = vld [vmem:[%s217 + $0xd88] sm:$0xff]
                %318 = vst [vmem:[%s218 + $0x188] sm:$0xff] %v317
                %v319 = vld [vmem:[%s217 + $0xd90] sm:$0xff]
                %320 = vst [vmem:[%s218 + $0x190] sm:$0xff] %v319
                %v321 = vld [vmem:[%s217 + $0xd98] sm:$0xff]
                %322 = vst [vmem:[%s218 + $0x198] sm:$0xff] %v321
                %v323 = vld [vmem:[%s217 + $0xea0] sm:$0xff]
                %324 = vst [vmem:[%s218 + $0x1a0] sm:$0xff] %v323
                %v325 = vld [vmem:[%s217 + $0xea8] sm:$0xff]
                %326 = vst [vmem:[%s218 + $0x1a8] sm:$0xff] %v325
                %v327 = vld [vmem:[%s217 + $0xeb0] sm:$0xff]
                %328 = vst [vmem:[%s218 + $0x1b0] sm:$0xff] %v327
                %v329 = vld [vmem:[%s217 + $0xeb8] sm:$0xff]
                %330 = vst [vmem:[%s218 + $0x1b8] sm:$0xff] %v329
                %v331 = vld [vmem:[%s217 + $0xfc0] sm:$0xff]
                %332 = vst [vmem:[%s218 + $0x1c0] sm:$0xff] %v331
                %v333 = vld [vmem:[%s217 + $0xfc8] sm:$0xff]
                %334 = vst [vmem:[%s218 + $0x1c8] sm:$0xff] %v333
                %v335 = vld [vmem:[%s217 + $0xfd0] sm:$0xff]
                %336 = vst [vmem:[%s218 + $0x1d0] sm:$0xff] %v335
                %v337 = vld [vmem:[%s217 + $0xfd8] sm:$0xff]
                %338 = vst [vmem:[%s218 + $0x1d8] sm:$0xff] %v337
                %v339 = vld [vmem:[%s217 + $0x10e0] sm:$0xff]
                %340 = vst [vmem:[%s218 + $0x1e0] sm:$0xff] %v339
                %v341 = vld [vmem:[%s217 + $0x10e8] sm:$0xff]
                %342 = vst [vmem:[%s218 + $0x1e8] sm:$0xff] %v341
                %v343 = vld [vmem:[%s217 + $0x10f0] sm:$0xff]
                %344 = vst [vmem:[%s218 + $0x1f0] sm:$0xff] %v343
                %v345 = vld [vmem:[%s217 + $0x10f8] sm:$0xff]
                %346 = vst [vmem:[%s218 + $0x1f8] sm:$0xff] %v345
              $region45: #{_rpn_device.1} parent=39 // loop_footer
                %s216 = sadd.s32 1, %s212
              $region46: #{_rpn_device.1} parent=39 // loop_footer_branch
                %211 = sbr.rel target = $region42
              $region47: #{_rpn_device.1} parent=39 // loop_exit
                _
            $region40: #{_rpn_device.1} parent=35 // pred_fallthru
              _
            // Predicated region
            $region48: #{_rpn_device.1} parent=35 // pred_check
              _
            $region49: #{_rpn_device.1} parent=35 // pred_check_branch
              %348 = sbr.rel target = $region51
            $region50: #{_rpn_device.1} parent=35 // pred_region
              _
            $region51: #{_rpn_device.1} parent=35 // pred_fallthru
              _
          $region36: #{_rpn_device.1} parent=31 // pred_fallthru
            _
          %349 = vnop
        $region32: #{_rpn_device.1} parent=27 // pred_fallthru
          _
        // Predicated region
        $region52: #{_rpn_device.1} parent=27 // pred_check
          %p350 = pneg %p71
        $region53: #{_rpn_device.1} parent=27 // pred_check_branch
          %352 = sbr.rel (%p350) target = $region55
        $region54: #{_rpn_device.1} parent=27 // pred_region
          %s353 = smul.u32 128, %s19
          %p354 = scmp.lt.s32.totalorder %s353, 1151
          %s355 = scalar_select %p354, %s353, 1151
          %s356 = smul.addr %s355, 4
          %s357 = smul.addr %s356, 4
          %s358 = scalar_lea.vmem %s1, %s357
          %s359 = smul.u32 128, %s19
        $region55: #{_rpn_device.1} parent=27 // pred_fallthru
          _
      $region28: #{_rpn_device.1} parent=5 // pred_fallthru
        _
      %p360 = scmp.le.s32.totalorder 1, %s11
      %p361 = scmp.lt.s32.totalorder %s11, 19
      %p362 = pnand %p360, %p361
      %p363 = pneg %p362
      // Predicated region
      $region56: #{_rpn_device.1} parent=5 // pred_check
        _
      $region57: #{_rpn_device.1} parent=5 // pred_check_branch
        %365 = sbr.rel (%p362) target = $region59
      $region58: #{_rpn_device.1} parent=5 // pred_region
        %s366 = ssub.s32 %s11, 1
        %s367 = sand.u32 %s38, 1
        %s368 = sand.u32 %s38, 1
        %s369 = smul.addr %s368, 512
        %s370 = scalar_lea.vmem [#allocation3], %s369
        // Predicated region
        $region60: #{_rpn_device.1} parent=58 // pred_check
          %p371 = pneg %p51
        $region61: #{_rpn_device.1} parent=58 // pred_check_branch
          %373 = sbr.rel (%p371) target = $region63
        $region62: #{_rpn_device.1} parent=58 // pred_region
          _
        $region63: #{_rpn_device.1} parent=58 // pred_fallthru
          _
        %s374 = sand.u32 %s38, 1
        %s375 = sand.u32 %s38, 1
        %s376 = smul.addr %s375, 512
        %s377 = scalar_lea.vmem [#allocation3], %s376
        %p378 = pneg %p51
        %p379 = pneg %p48
        %s380 = smul.u32 128, %s21
        %p381 = scmp.lt.s32.totalorder %s380, 1151
        %s382 = scalar_select %p381, %s380, 1151
        %s383 = smul.addr %s382, 4
        %s384 = smul.addr %s383, 4
        %s385 = scalar_lea.vmem %s1, %s384
        %p386 = pneg %p77
        %p387 = pneg %p74
        %p388 = pneg %p98
        %p389 = pneg %p95
        %p390 = pneg %p119
        %p391 = pneg %p116
        %p392 = pneg %p140
        %p393 = pneg %p137
        %p394 = pneg %p166
        %p395 = pneg %p163
        %s396 = smul.u32 16, %s20
        %p397 = scmp.lt.s32.totalorder %s396, 31
        %s398 = scalar_select %p397, %s396, 31
        %s399 = smul.addr %s398, 8
        %s400 = scalar_lea.vmem %s5, %s399
        %s401 = smul.u32 16, %s20
        %s402 = smul.u32 8, %s21
        %s403 = smul.u32 128, %s21
        %p404 = scmp.lt.s32.totalorder %s403, 1151
        %s405 = scalar_select %p404, %s403, 1151
        %s406 = smul.addr %s405, 4
        %s407 = smul.addr %s406, 4
        %s408 = scalar_lea.vmem %s1, %s407
        %s409 = smul.u32 128, %s21
        %s410 = smul.u32 16, %s20
        %p411 = scmp.lt.s32.totalorder %s410, 31
        %s412 = scalar_select %p411, %s410, 31
        %s413 = smul.addr %s412, 8
        %s414 = scalar_lea.vmem %s5, %s413
        %s415 = smul.u32 16, %s20
        %p416 = scmp.eq.s32.totalorder %s21, 0
        // Predicated region
        $region64: #{_rpn_device.1} parent=58 // pred_check
          %p417 = pneg %p416
        $region65: #{_rpn_device.1} parent=58 // pred_check_branch
          %419 = sbr.rel (%p417) target = $region67
        $region66: #{_rpn_device.1} parent=58 // pred_region
          %420 = vst [vmem:[#allocation2] sm:$0xff] 0.0
          %421 = vst [vmem:[#allocation2 + $0x8] sm:$0xff] 0.0
          %422 = vst [vmem:[#allocation2 + $0x10] sm:$0xff] 0.0
          %423 = vst [vmem:[#allocation2 + $0x18] sm:$0xff] 0.0
          %424 = vst [vmem:[#allocation2 + $0x20] sm:$0xff] 0.0
          %425 = vst [vmem:[#allocation2 + $0x28] sm:$0xff] 0.0
          %426 = vst [vmem:[#allocation2 + $0x30] sm:$0xff] 0.0
          %427 = vst [vmem:[#allocation2 + $0x38] sm:$0xff] 0.0
          %428 = vst [vmem:[#allocation2 + $0x40] sm:$0xff] 0.0
          %429 = vst [vmem:[#allocation2 + $0x48] sm:$0xff] 0.0
          %430 = vst [vmem:[#allocation2 + $0x50] sm:$0xff] 0.0
          %431 = vst [vmem:[#allocation2 + $0x58] sm:$0xff] 0.0
          %432 = vst [vmem:[#allocation2 + $0x60] sm:$0xff] 0.0
          %433 = vst [vmem:[#allocation2 + $0x68] sm:$0xff] 0.0
          %434 = vst [vmem:[#allocation2 + $0x70] sm:$0xff] 0.0
          %435 = vst [vmem:[#allocation2 + $0x78] sm:$0xff] 0.0
          %436 = vst [vmem:[#allocation2 + $0x80] sm:$0xff] 0.0
          %437 = vst [vmem:[#allocation2 + $0x88] sm:$0xff] 0.0
          %438 = vst [vmem:[#allocation2 + $0x90] sm:$0xff] 0.0
          %439 = vst [vmem:[#allocation2 + $0x98] sm:$0xff] 0.0
          %440 = vst [vmem:[#allocation2 + $0xa0] sm:$0xff] 0.0
          %441 = vst [vmem:[#allocation2 + $0xa8] sm:$0xff] 0.0
          %442 = vst [vmem:[#allocation2 + $0xb0] sm:$0xff] 0.0
          %443 = vst [vmem:[#allocation2 + $0xb8] sm:$0xff] 0.0
          %444 = vst [vmem:[#allocation2 + $0xc0] sm:$0xff] 0.0
          %445 = vst [vmem:[#allocation2 + $0xc8] sm:$0xff] 0.0
          %446 = vst [vmem:[#allocation2 + $0xd0] sm:$0xff] 0.0
          %447 = vst [vmem:[#allocation2 + $0xd8] sm:$0xff] 0.0
          %448 = vst [vmem:[#allocation2 + $0xe0] sm:$0xff] 0.0
          %449 = vst [vmem:[#allocation2 + $0xe8] sm:$0xff] 0.0
          %450 = vst [vmem:[#allocation2 + $0xf0] sm:$0xff] 0.0
          %451 = vst [vmem:[#allocation2 + $0xf8] sm:$0xff] 0.0
          %452 = vst [vmem:[#allocation2 + $0x100] sm:$0xff] 0.0
          %453 = vst [vmem:[#allocation2 + $0x108] sm:$0xff] 0.0
          %454 = vst [vmem:[#allocation2 + $0x110] sm:$0xff] 0.0
          %455 = vst [vmem:[#allocation2 + $0x118] sm:$0xff] 0.0
          %456 = vst [vmem:[#allocation2 + $0x120] sm:$0xff] 0.0
          %457 = vst [vmem:[#allocation2 + $0x128] sm:$0xff] 0.0
          %458 = vst [vmem:[#allocation2 + $0x130] sm:$0xff] 0.0
          %459 = vst [vmem:[#allocation2 + $0x138] sm:$0xff] 0.0
          %460 = vst [vmem:[#allocation2 + $0x140] sm:$0xff] 0.0
          %461 = vst [vmem:[#allocation2 + $0x148] sm:$0xff] 0.0
          %462 = vst [vmem:[#allocation2 + $0x150] sm:$0xff] 0.0
          %463 = vst [vmem:[#allocation2 + $0x158] sm:$0xff] 0.0
          %464 = vst [vmem:[#allocation2 + $0x160] sm:$0xff] 0.0
          %465 = vst [vmem:[#allocation2 + $0x168] sm:$0xff] 0.0
          %466 = vst [vmem:[#allocation2 + $0x170] sm:$0xff] 0.0
          %467 = vst [vmem:[#allocation2 + $0x178] sm:$0xff] 0.0
          %468 = vst [vmem:[#allocation2 + $0x180] sm:$0xff] 0.0
          %469 = vst [vmem:[#allocation2 + $0x188] sm:$0xff] 0.0
          %470 = vst [vmem:[#allocation2 + $0x190] sm:$0xff] 0.0
          %471 = vst [vmem:[#allocation2 + $0x198] sm:$0xff] 0.0
          %472 = vst [vmem:[#allocation2 + $0x1a0] sm:$0xff] 0.0
          %473 = vst [vmem:[#allocation2 + $0x1a8] sm:$0xff] 0.0
          %474 = vst [vmem:[#allocation2 + $0x1b0] sm:$0xff] 0.0
          %475 = vst [vmem:[#allocation2 + $0x1b8] sm:$0xff] 0.0
          %476 = vst [vmem:[#allocation2 + $0x1c0] sm:$0xff] 0.0
          %477 = vst [vmem:[#allocation2 + $0x1c8] sm:$0xff] 0.0
          %478 = vst [vmem:[#allocation2 + $0x1d0] sm:$0xff] 0.0
          %479 = vst [vmem:[#allocation2 + $0x1d8] sm:$0xff] 0.0
          %480 = vst [vmem:[#allocation2 + $0x1e0] sm:$0xff] 0.0
          %481 = vst [vmem:[#allocation2 + $0x1e8] sm:$0xff] 0.0
          %482 = vst [vmem:[#allocation2 + $0x1f0] sm:$0xff] 0.0
          %483 = vst [vmem:[#allocation2 + $0x1f8] sm:$0xff] 0.0
        $region67: #{_rpn_device.1} parent=58 // pred_fallthru
          _
        %v484 = vld [vmem:[#allocation2] sm:$0xff]
        %v485 = vld [vmem:[#allocation2 + $0x8] sm:$0xff]
        %v486 = vld [vmem:[#allocation2 + $0x10] sm:$0xff]
        %v487 = vld [vmem:[#allocation2 + $0x18] sm:$0xff]
        %v488 = vld [vmem:[#allocation2 + $0x20] sm:$0xff]
        %v489 = vld [vmem:[#allocation2 + $0x28] sm:$0xff]
        %v490 = vld [vmem:[#allocation2 + $0x30] sm:$0xff]
        %v491 = vld [vmem:[#allocation2 + $0x38] sm:$0xff]
        %v492 = vld [vmem:[#allocation2 + $0x40] sm:$0xff]
        %v493 = vld [vmem:[#allocation2 + $0x48] sm:$0xff]
        %v494 = vld [vmem:[#allocation2 + $0x50] sm:$0xff]
        %v495 = vld [vmem:[#allocation2 + $0x58] sm:$0xff]
        %v496 = vld [vmem:[#allocation2 + $0x60] sm:$0xff]
        %v497 = vld [vmem:[#allocation2 + $0x68] sm:$0xff]
        %v498 = vld [vmem:[#allocation2 + $0x70] sm:$0xff]
        %v499 = vld [vmem:[#allocation2 + $0x78] sm:$0xff]
        %v500 = vld [vmem:[#allocation2 + $0x80] sm:$0xff]
        %v501 = vld [vmem:[#allocation2 + $0x88] sm:$0xff]
        %v502 = vld [vmem:[#allocation2 + $0x90] sm:$0xff]
        %v503 = vld [vmem:[#allocation2 + $0x98] sm:$0xff]
        %v504 = vld [vmem:[#allocation2 + $0xa0] sm:$0xff]
        %v505 = vld [vmem:[#allocation2 + $0xa8] sm:$0xff]
        %v506 = vld [vmem:[#allocation2 + $0xb0] sm:$0xff]
        %v507 = vld [vmem:[#allocation2 + $0xb8] sm:$0xff]
        %v508 = vld [vmem:[#allocation2 + $0xc0] sm:$0xff]
        %v509 = vld [vmem:[#allocation2 + $0xc8] sm:$0xff]
        %v510 = vld [vmem:[#allocation2 + $0xd0] sm:$0xff]
        %v511 = vld [vmem:[#allocation2 + $0xd8] sm:$0xff]
        %v512 = vld [vmem:[#allocation2 + $0xe0] sm:$0xff]
        %v513 = vld [vmem:[#allocation2 + $0xe8] sm:$0xff]
        %v514 = vld [vmem:[#allocation2 + $0xf0] sm:$0xff]
        %v515 = vld [vmem:[#allocation2 + $0xf8] sm:$0xff]
        %v516 = vld [vmem:[#allocation2 + $0x100] sm:$0xff]
        %v517 = vld [vmem:[#allocation2 + $0x108] sm:$0xff]
        %v518 = vld [vmem:[#allocation2 + $0x110] sm:$0xff]
        %v519 = vld [vmem:[#allocation2 + $0x118] sm:$0xff]
        %v520 = vld [vmem:[#allocation2 + $0x120] sm:$0xff]
        %v521 = vld [vmem:[#allocation2 + $0x128] sm:$0xff]
        %v522 = vld [vmem:[#allocation2 + $0x130] sm:$0xff]
        %v523 = vld [vmem:[#allocation2 + $0x138] sm:$0xff]
        %v524 = vld [vmem:[#allocation2 + $0x140] sm:$0xff]
        %v525 = vld [vmem:[#allocation2 + $0x148] sm:$0xff]
        %v526 = vld [vmem:[#allocation2 + $0x150] sm:$0xff]
        %v527 = vld [vmem:[#allocation2 + $0x158] sm:$0xff]
        %v528 = vld [vmem:[#allocation2 + $0x160] sm:$0xff]
        %v529 = vld [vmem:[#allocation2 + $0x168] sm:$0xff]
        %v530 = vld [vmem:[#allocation2 + $0x170] sm:$0xff]
        %v531 = vld [vmem:[#allocation2 + $0x178] sm:$0xff]
        %v532 = vld [vmem:[#allocation2 + $0x180] sm:$0xff]
        %v533 = vld [vmem:[#allocation2 + $0x188] sm:$0xff]
        %v534 = vld [vmem:[#allocation2 + $0x190] sm:$0xff]
        %v535 = vld [vmem:[#allocation2 + $0x198] sm:$0xff]
        %v536 = vld [vmem:[#allocation2 + $0x1a0] sm:$0xff]
        %v537 = vld [vmem:[#allocation2 + $0x1a8] sm:$0xff]
        %v538 = vld [vmem:[#allocation2 + $0x1b0] sm:$0xff]
        %v539 = vld [vmem:[#allocation2 + $0x1b8] sm:$0xff]
        %v540 = vld [vmem:[#allocation2 + $0x1c0] sm:$0xff]
        %v541 = vld [vmem:[#allocation2 + $0x1c8] sm:$0xff]
        %v542 = vld [vmem:[#allocation2 + $0x1d0] sm:$0xff]
        %v543 = vld [vmem:[#allocation2 + $0x1d8] sm:$0xff]
        %v544 = vld [vmem:[#allocation2 + $0x1e0] sm:$0xff]
        %v545 = vld [vmem:[#allocation2 + $0x1e8] sm:$0xff]
        %v546 = vld [vmem:[#allocation2 + $0x1f0] sm:$0xff]
        %v547 = vld [vmem:[#allocation2 + $0x1f8] sm:$0xff]
        %v548 = vld [vmem:[%s370] sm:$0xff]
        %v549 = vld [vmem:[%s370 + $0x8] sm:$0xff]
        %v550 = vld [vmem:[%s370 + $0x10] sm:$0xff]
        %v551 = vld [vmem:[%s370 + $0x18] sm:$0xff]
        %v552 = vld [vmem:[%s370 + $0x20] sm:$0xff]
        %v553 = vld [vmem:[%s370 + $0x28] sm:$0xff]
        %v554 = vld [vmem:[%s370 + $0x30] sm:$0xff]
        %v555 = vld [vmem:[%s370 + $0x38] sm:$0xff]
        %v556 = vld [vmem:[%s370 + $0x40] sm:$0xff]
        %v557 = vld [vmem:[%s370 + $0x48] sm:$0xff]
        %v558 = vld [vmem:[%s370 + $0x50] sm:$0xff]
        %v559 = vld [vmem:[%s370 + $0x58] sm:$0xff]
        %v560 = vld [vmem:[%s370 + $0x60] sm:$0xff]
        %v561 = vld [vmem:[%s370 + $0x68] sm:$0xff]
        %v562 = vld [vmem:[%s370 + $0x70] sm:$0xff]
        %v563 = vld [vmem:[%s370 + $0x78] sm:$0xff]
        %v564 = vld [vmem:[%s370 + $0x80] sm:$0xff]
        %v565 = vld [vmem:[%s370 + $0x88] sm:$0xff]
        %v566 = vld [vmem:[%s370 + $0x90] sm:$0xff]
        %v567 = vld [vmem:[%s370 + $0x98] sm:$0xff]
        %v568 = vld [vmem:[%s370 + $0xa0] sm:$0xff]
        %v569 = vld [vmem:[%s370 + $0xa8] sm:$0xff]
        %v570 = vld [vmem:[%s370 + $0xb0] sm:$0xff]
        %v571 = vld [vmem:[%s370 + $0xb8] sm:$0xff]
        %v572 = vld [vmem:[%s370 + $0xc0] sm:$0xff]
        %v573 = vld [vmem:[%s370 + $0xc8] sm:$0xff]
        %v574 = vld [vmem:[%s370 + $0xd0] sm:$0xff]
        %v575 = vld [vmem:[%s370 + $0xd8] sm:$0xff]
        %v576 = vld [vmem:[%s370 + $0xe0] sm:$0xff]
        %v577 = vld [vmem:[%s370 + $0xe8] sm:$0xff]
        %v578 = vld [vmem:[%s370 + $0xf0] sm:$0xff]
        %v579 = vld [vmem:[%s370 + $0xf8] sm:$0xff]
        %v580 = vld [vmem:[%s370 + $0x100] sm:$0xff]
        %v581 = vld [vmem:[%s370 + $0x108] sm:$0xff]
        %v582 = vld [vmem:[%s370 + $0x110] sm:$0xff]
        %v583 = vld [vmem:[%s370 + $0x118] sm:$0xff]
        %v584 = vld [vmem:[%s370 + $0x120] sm:$0xff]
        %v585 = vld [vmem:[%s370 + $0x128] sm:$0xff]
        %v586 = vld [vmem:[%s370 + $0x130] sm:$0xff]
        %v587 = vld [vmem:[%s370 + $0x138] sm:$0xff]
        %v588 = vld [vmem:[%s370 + $0x140] sm:$0xff]
        %v589 = vld [vmem:[%s370 + $0x148] sm:$0xff]
        %v590 = vld [vmem:[%s370 + $0x150] sm:$0xff]
        %v591 = vld [vmem:[%s370 + $0x158] sm:$0xff]
        %v592 = vld [vmem:[%s370 + $0x160] sm:$0xff]
        %v593 = vld [vmem:[%s370 + $0x168] sm:$0xff]
        %v594 = vld [vmem:[%s370 + $0x170] sm:$0xff]
        %v595 = vld [vmem:[%s370 + $0x178] sm:$0xff]
        %v596 = vld [vmem:[%s370 + $0x180] sm:$0xff]
        %v597 = vld [vmem:[%s370 + $0x188] sm:$0xff]
        %v598 = vld [vmem:[%s370 + $0x190] sm:$0xff]
        %v599 = vld [vmem:[%s370 + $0x198] sm:$0xff]
        %v600 = vld [vmem:[%s370 + $0x1a0] sm:$0xff]
        %v601 = vld [vmem:[%s370 + $0x1a8] sm:$0xff]
        %v602 = vld [vmem:[%s370 + $0x1b0] sm:$0xff]
        %v603 = vld [vmem:[%s370 + $0x1b8] sm:$0xff]
        %v604 = vld [vmem:[%s370 + $0x1c0] sm:$0xff]
        %v605 = vld [vmem:[%s370 + $0x1c8] sm:$0xff]
        %v606 = vld [vmem:[%s370 + $0x1d0] sm:$0xff]
        %v607 = vld [vmem:[%s370 + $0x1d8] sm:$0xff]
        %v608 = vld [vmem:[%s370 + $0x1e0] sm:$0xff]
        %v609 = vld [vmem:[%s370 + $0x1e8] sm:$0xff]
        %v610 = vld [vmem:[%s370 + $0x1f0] sm:$0xff]
        %v611 = vld [vmem:[%s370 + $0x1f8] sm:$0xff]
        %v612 = vld [vmem:[%s408] sm:$0xff]
        %v613 = vld [vmem:[%s408 + $0x8] sm:$0xff]
        %v614 = vld [vmem:[%s408 + $0x10] sm:$0xff]
        %v615 = vld [vmem:[%s408 + $0x18] sm:$0xff]
        %v616 = vld [vmem:[%s408 + $0x20] sm:$0xff]
        %v617 = vld [vmem:[%s408 + $0x28] sm:$0xff]
        %v618 = vld [vmem:[%s408 + $0x30] sm:$0xff]
        %v619 = vld [vmem:[%s408 + $0x38] sm:$0xff]
        %v620 = vld [vmem:[%s408 + $0x40] sm:$0xff]
        %v621 = vld [vmem:[%s408 + $0x48] sm:$0xff]
        %v622 = vld [vmem:[%s408 + $0x50] sm:$0xff]
        %v623 = vld [vmem:[%s408 + $0x58] sm:$0xff]
        %v624 = vld [vmem:[%s408 + $0x60] sm:$0xff]
        %v625 = vld [vmem:[%s408 + $0x68] sm:$0xff]
        %v626 = vld [vmem:[%s408 + $0x70] sm:$0xff]
        %v627 = vld [vmem:[%s408 + $0x78] sm:$0xff]
        %v628 = vld [vmem:[%s408 + $0x80] sm:$0xff]
        %v629 = vld [vmem:[%s408 + $0x88] sm:$0xff]
        %v630 = vld [vmem:[%s408 + $0x90] sm:$0xff]
        %v631 = vld [vmem:[%s408 + $0x98] sm:$0xff]
        %v632 = vld [vmem:[%s408 + $0xa0] sm:$0xff]
        %v633 = vld [vmem:[%s408 + $0xa8] sm:$0xff]
        %v634 = vld [vmem:[%s408 + $0xb0] sm:$0xff]
        %v635 = vld [vmem:[%s408 + $0xb8] sm:$0xff]
        %v636 = vld [vmem:[%s408 + $0xc0] sm:$0xff]
        %v637 = vld [vmem:[%s408 + $0xc8] sm:$0xff]
        %v638 = vld [vmem:[%s408 + $0xd0] sm:$0xff]
        %v639 = vld [vmem:[%s408 + $0xd8] sm:$0xff]
        %v640 = vld [vmem:[%s408 + $0xe0] sm:$0xff]
        %v641 = vld [vmem:[%s408 + $0xe8] sm:$0xff]
        %v642 = vld [vmem:[%s408 + $0xf0] sm:$0xff]
        %v643 = vld [vmem:[%s408 + $0xf8] sm:$0xff]
        %v644 = vld [vmem:[%s408 + $0x100] sm:$0xff]
        %v645 = vld [vmem:[%s408 + $0x108] sm:$0xff]
        %v646 = vld [vmem:[%s408 + $0x110] sm:$0xff]
        %v647 = vld [vmem:[%s408 + $0x118] sm:$0xff]
        %v648 = vld [vmem:[%s408 + $0x120] sm:$0xff]
        %v649 = vld [vmem:[%s408 + $0x128] sm:$0xff]
        %v650 = vld [vmem:[%s408 + $0x130] sm:$0xff]
        %v651 = vld [vmem:[%s408 + $0x138] sm:$0xff]
        %v652 = vld [vmem:[%s408 + $0x140] sm:$0xff]
        %v653 = vld [vmem:[%s408 + $0x148] sm:$0xff]
        %v654 = vld [vmem:[%s408 + $0x150] sm:$0xff]
        %v655 = vld [vmem:[%s408 + $0x158] sm:$0xff]
        %v656 = vld [vmem:[%s408 + $0x160] sm:$0xff]
        %v657 = vld [vmem:[%s408 + $0x168] sm:$0xff]
        %v658 = vld [vmem:[%s408 + $0x170] sm:$0xff]
        %v659 = vld [vmem:[%s408 + $0x178] sm:$0xff]
        %v660 = vld [vmem:[%s408 + $0x180] sm:$0xff]
        %v661 = vld [vmem:[%s408 + $0x188] sm:$0xff]
        %v662 = vld [vmem:[%s408 + $0x190] sm:$0xff]
        %v663 = vld [vmem:[%s408 + $0x198] sm:$0xff]
        %v664 = vld [vmem:[%s408 + $0x1a0] sm:$0xff]
        %v665 = vld [vmem:[%s408 + $0x1a8] sm:$0xff]
        %v666 = vld [vmem:[%s408 + $0x1b0] sm:$0xff]
        %v667 = vld [vmem:[%s408 + $0x1b8] sm:$0xff]
        %v668 = vld [vmem:[%s408 + $0x1c0] sm:$0xff]
        %v669 = vld [vmem:[%s408 + $0x1c8] sm:$0xff]
        %v670 = vld [vmem:[%s408 + $0x1d0] sm:$0xff]
        %v671 = vld [vmem:[%s408 + $0x1d8] sm:$0xff]
        %v672 = vld [vmem:[%s408 + $0x1e0] sm:$0xff]
        %v673 = vld [vmem:[%s408 + $0x1e8] sm:$0xff]
        %v674 = vld [vmem:[%s408 + $0x1f0] sm:$0xff]
        %v675 = vld [vmem:[%s408 + $0x1f8] sm:$0xff]
        %v676 = vld [vmem:[%s408 + $0x200] sm:$0xff]
        %v677 = vld [vmem:[%s408 + $0x208] sm:$0xff]
        %v678 = vld [vmem:[%s408 + $0x210] sm:$0xff]
        %v679 = vld [vmem:[%s408 + $0x218] sm:$0xff]
        %v680 = vld [vmem:[%s408 + $0x220] sm:$0xff]
        %v681 = vld [vmem:[%s408 + $0x228] sm:$0xff]
        %v682 = vld [vmem:[%s408 + $0x230] sm:$0xff]
        %v683 = vld [vmem:[%s408 + $0x238] sm:$0xff]
        %v684 = vld [vmem:[%s408 + $0x240] sm:$0xff]
        %v685 = vld [vmem:[%s408 + $0x248] sm:$0xff]
        %v686 = vld [vmem:[%s408 + $0x250] sm:$0xff]
        %v687 = vld [vmem:[%s408 + $0x258] sm:$0xff]
        %v688 = vld [vmem:[%s408 + $0x260] sm:$0xff]
        %v689 = vld [vmem:[%s408 + $0x268] sm:$0xff]
        %v690 = vld [vmem:[%s408 + $0x270] sm:$0xff]
        %v691 = vld [vmem:[%s408 + $0x278] sm:$0xff]
        %v692 = vld [vmem:[%s408 + $0x280] sm:$0xff]
        %v693 = vld [vmem:[%s408 + $0x288] sm:$0xff]
        %v694 = vld [vmem:[%s408 + $0x290] sm:$0xff]
        %v695 = vld [vmem:[%s408 + $0x298] sm:$0xff]
        %v696 = vld [vmem:[%s408 + $0x2a0] sm:$0xff]
        %v697 = vld [vmem:[%s408 + $0x2a8] sm:$0xff]
        %v698 = vld [vmem:[%s408 + $0x2b0] sm:$0xff]
        %v699 = vld [vmem:[%s408 + $0x2b8] sm:$0xff]
        %v700 = vld [vmem:[%s408 + $0x2c0] sm:$0xff]
        %v701 = vld [vmem:[%s408 + $0x2c8] sm:$0xff]
        %v702 = vld [vmem:[%s408 + $0x2d0] sm:$0xff]
        %v703 = vld [vmem:[%s408 + $0x2d8] sm:$0xff]
        %v704 = vld [vmem:[%s408 + $0x2e0] sm:$0xff]
        %v705 = vld [vmem:[%s408 + $0x2e8] sm:$0xff]
        %v706 = vld [vmem:[%s408 + $0x2f0] sm:$0xff]
        %v707 = vld [vmem:[%s408 + $0x2f8] sm:$0xff]
        %v708 = vld [vmem:[%s408 + $0x300] sm:$0xff]
        %v709 = vld [vmem:[%s408 + $0x308] sm:$0xff]
        %v710 = vld [vmem:[%s408 + $0x310] sm:$0xff]
        %v711 = vld [vmem:[%s408 + $0x318] sm:$0xff]
        %v712 = vld [vmem:[%s408 + $0x320] sm:$0xff]
        %v713 = vld [vmem:[%s408 + $0x328] sm:$0xff]
        %v714 = vld [vmem:[%s408 + $0x330] sm:$0xff]
        %v715 = vld [vmem:[%s408 + $0x338] sm:$0xff]
        %v716 = vld [vmem:[%s408 + $0x340] sm:$0xff]
        %v717 = vld [vmem:[%s408 + $0x348] sm:$0xff]
        %v718 = vld [vmem:[%s408 + $0x350] sm:$0xff]
        %v719 = vld [vmem:[%s408 + $0x358] sm:$0xff]
        %v720 = vld [vmem:[%s408 + $0x360] sm:$0xff]
        %v721 = vld [vmem:[%s408 + $0x368] sm:$0xff]
        %v722 = vld [vmem:[%s408 + $0x370] sm:$0xff]
        %v723 = vld [vmem:[%s408 + $0x378] sm:$0xff]
        %v724 = vld [vmem:[%s408 + $0x380] sm:$0xff]
        %v725 = vld [vmem:[%s408 + $0x388] sm:$0xff]
        %v726 = vld [vmem:[%s408 + $0x390] sm:$0xff]
        %v727 = vld [vmem:[%s408 + $0x398] sm:$0xff]
        %v728 = vld [vmem:[%s408 + $0x3a0] sm:$0xff]
        %v729 = vld [vmem:[%s408 + $0x3a8] sm:$0xff]
        %v730 = vld [vmem:[%s408 + $0x3b0] sm:$0xff]
        %v731 = vld [vmem:[%s408 + $0x3b8] sm:$0xff]
        %v732 = vld [vmem:[%s408 + $0x3c0] sm:$0xff]
        %v733 = vld [vmem:[%s408 + $0x3c8] sm:$0xff]
        %v734 = vld [vmem:[%s408 + $0x3d0] sm:$0xff]
        %v735 = vld [vmem:[%s408 + $0x3d8] sm:$0xff]
        %v736 = vld [vmem:[%s408 + $0x3e0] sm:$0xff]
        %v737 = vld [vmem:[%s408 + $0x3e8] sm:$0xff]
        %v738 = vld [vmem:[%s408 + $0x3f0] sm:$0xff]
        %v739 = vld [vmem:[%s408 + $0x3f8] sm:$0xff]
        %v740 = vld [vmem:[%s408 + $0x400] sm:$0xff]
        %v741 = vld [vmem:[%s408 + $0x408] sm:$0xff]
        %v742 = vld [vmem:[%s408 + $0x410] sm:$0xff]
        %v743 = vld [vmem:[%s408 + $0x418] sm:$0xff]
        %v744 = vld [vmem:[%s408 + $0x420] sm:$0xff]
        %v745 = vld [vmem:[%s408 + $0x428] sm:$0xff]
        %v746 = vld [vmem:[%s408 + $0x430] sm:$0xff]
        %v747 = vld [vmem:[%s408 + $0x438] sm:$0xff]
        %v748 = vld [vmem:[%s408 + $0x440] sm:$0xff]
        %v749 = vld [vmem:[%s408 + $0x448] sm:$0xff]
        %v750 = vld [vmem:[%s408 + $0x450] sm:$0xff]
        %v751 = vld [vmem:[%s408 + $0x458] sm:$0xff]
        %v752 = vld [vmem:[%s408 + $0x460] sm:$0xff]
        %v753 = vld [vmem:[%s408 + $0x468] sm:$0xff]
        %v754 = vld [vmem:[%s408 + $0x470] sm:$0xff]
        %v755 = vld [vmem:[%s408 + $0x478] sm:$0xff]
        %v756 = vld [vmem:[%s408 + $0x480] sm:$0xff]
        %v757 = vld [vmem:[%s408 + $0x488] sm:$0xff]
        %v758 = vld [vmem:[%s408 + $0x490] sm:$0xff]
        %v759 = vld [vmem:[%s408 + $0x498] sm:$0xff]
        %v760 = vld [vmem:[%s408 + $0x4a0] sm:$0xff]
        %v761 = vld [vmem:[%s408 + $0x4a8] sm:$0xff]
        %v762 = vld [vmem:[%s408 + $0x4b0] sm:$0xff]
        %v763 = vld [vmem:[%s408 + $0x4b8] sm:$0xff]
        %v764 = vld [vmem:[%s408 + $0x4c0] sm:$0xff]
        %v765 = vld [vmem:[%s408 + $0x4c8] sm:$0xff]
        %v766 = vld [vmem:[%s408 + $0x4d0] sm:$0xff]
        %v767 = vld [vmem:[%s408 + $0x4d8] sm:$0xff]
        %v768 = vld [vmem:[%s408 + $0x4e0] sm:$0xff]
        %v769 = vld [vmem:[%s408 + $0x4e8] sm:$0xff]
        %v770 = vld [vmem:[%s408 + $0x4f0] sm:$0xff]
        %v771 = vld [vmem:[%s408 + $0x4f8] sm:$0xff]
        %v772 = vld [vmem:[%s408 + $0x500] sm:$0xff]
        %v773 = vld [vmem:[%s408 + $0x508] sm:$0xff]
        %v774 = vld [vmem:[%s408 + $0x510] sm:$0xff]
        %v775 = vld [vmem:[%s408 + $0x518] sm:$0xff]
        %v776 = vld [vmem:[%s408 + $0x520] sm:$0xff]
        %v777 = vld [vmem:[%s408 + $0x528] sm:$0xff]
        %v778 = vld [vmem:[%s408 + $0x530] sm:$0xff]
        %v779 = vld [vmem:[%s408 + $0x538] sm:$0xff]
        %v780 = vld [vmem:[%s408 + $0x540] sm:$0xff]
        %v781 = vld [vmem:[%s408 + $0x548] sm:$0xff]
        %v782 = vld [vmem:[%s408 + $0x550] sm:$0xff]
        %v783 = vld [vmem:[%s408 + $0x558] sm:$0xff]
        %v784 = vld [vmem:[%s408 + $0x560] sm:$0xff]
        %v785 = vld [vmem:[%s408 + $0x568] sm:$0xff]
        %v786 = vld [vmem:[%s408 + $0x570] sm:$0xff]
        %v787 = vld [vmem:[%s408 + $0x578] sm:$0xff]
        %v788 = vld [vmem:[%s408 + $0x580] sm:$0xff]
        %v789 = vld [vmem:[%s408 + $0x588] sm:$0xff]
        %v790 = vld [vmem:[%s408 + $0x590] sm:$0xff]
        %v791 = vld [vmem:[%s408 + $0x598] sm:$0xff]
        %v792 = vld [vmem:[%s408 + $0x5a0] sm:$0xff]
        %v793 = vld [vmem:[%s408 + $0x5a8] sm:$0xff]
        %v794 = vld [vmem:[%s408 + $0x5b0] sm:$0xff]
        %v795 = vld [vmem:[%s408 + $0x5b8] sm:$0xff]
        %v796 = vld [vmem:[%s408 + $0x5c0] sm:$0xff]
        %v797 = vld [vmem:[%s408 + $0x5c8] sm:$0xff]
        %v798 = vld [vmem:[%s408 + $0x5d0] sm:$0xff]
        %v799 = vld [vmem:[%s408 + $0x5d8] sm:$0xff]
        %v800 = vld [vmem:[%s408 + $0x5e0] sm:$0xff]
        %v801 = vld [vmem:[%s408 + $0x5e8] sm:$0xff]
        %v802 = vld [vmem:[%s408 + $0x5f0] sm:$0xff]
        %v803 = vld [vmem:[%s408 + $0x5f8] sm:$0xff]
        %v804 = vld [vmem:[%s408 + $0x600] sm:$0xff]
        %v805 = vld [vmem:[%s408 + $0x608] sm:$0xff]
        %v806 = vld [vmem:[%s408 + $0x610] sm:$0xff]
        %v807 = vld [vmem:[%s408 + $0x618] sm:$0xff]
        %v808 = vld [vmem:[%s408 + $0x620] sm:$0xff]
        %v809 = vld [vmem:[%s408 + $0x628] sm:$0xff]
        %v810 = vld [vmem:[%s408 + $0x630] sm:$0xff]
        %v811 = vld [vmem:[%s408 + $0x638] sm:$0xff]
        %v812 = vld [vmem:[%s408 + $0x640] sm:$0xff]
        %v813 = vld [vmem:[%s408 + $0x648] sm:$0xff]
        %v814 = vld [vmem:[%s408 + $0x650] sm:$0xff]
        %v815 = vld [vmem:[%s408 + $0x658] sm:$0xff]
        %v816 = vld [vmem:[%s408 + $0x660] sm:$0xff]
        %v817 = vld [vmem:[%s408 + $0x668] sm:$0xff]
        %v818 = vld [vmem:[%s408 + $0x670] sm:$0xff]
        %v819 = vld [vmem:[%s408 + $0x678] sm:$0xff]
        %v820 = vld [vmem:[%s408 + $0x680] sm:$0xff]
        %v821 = vld [vmem:[%s408 + $0x688] sm:$0xff]
        %v822 = vld [vmem:[%s408 + $0x690] sm:$0xff]
        %v823 = vld [vmem:[%s408 + $0x698] sm:$0xff]
        %v824 = vld [vmem:[%s408 + $0x6a0] sm:$0xff]
        %v825 = vld [vmem:[%s408 + $0x6a8] sm:$0xff]
        %v826 = vld [vmem:[%s408 + $0x6b0] sm:$0xff]
        %v827 = vld [vmem:[%s408 + $0x6b8] sm:$0xff]
        %v828 = vld [vmem:[%s408 + $0x6c0] sm:$0xff]
        %v829 = vld [vmem:[%s408 + $0x6c8] sm:$0xff]
        %v830 = vld [vmem:[%s408 + $0x6d0] sm:$0xff]
        %v831 = vld [vmem:[%s408 + $0x6d8] sm:$0xff]
        %v832 = vld [vmem:[%s408 + $0x6e0] sm:$0xff]
        %v833 = vld [vmem:[%s408 + $0x6e8] sm:$0xff]
        %v834 = vld [vmem:[%s408 + $0x6f0] sm:$0xff]
        %v835 = vld [vmem:[%s408 + $0x6f8] sm:$0xff]
        %v836 = vld [vmem:[%s408 + $0x700] sm:$0xff]
        %v837 = vld [vmem:[%s408 + $0x708] sm:$0xff]
        %v838 = vld [vmem:[%s408 + $0x710] sm:$0xff]
        %v839 = vld [vmem:[%s408 + $0x718] sm:$0xff]
        %v840 = vld [vmem:[%s408 + $0x720] sm:$0xff]
        %v841 = vld [vmem:[%s408 + $0x728] sm:$0xff]
        %v842 = vld [vmem:[%s408 + $0x730] sm:$0xff]
        %v843 = vld [vmem:[%s408 + $0x738] sm:$0xff]
        %v844 = vld [vmem:[%s408 + $0x740] sm:$0xff]
        %v845 = vld [vmem:[%s408 + $0x748] sm:$0xff]
        %v846 = vld [vmem:[%s408 + $0x750] sm:$0xff]
        %v847 = vld [vmem:[%s408 + $0x758] sm:$0xff]
        %v848 = vld [vmem:[%s408 + $0x760] sm:$0xff]
        %v849 = vld [vmem:[%s408 + $0x768] sm:$0xff]
        %v850 = vld [vmem:[%s408 + $0x770] sm:$0xff]
        %v851 = vld [vmem:[%s408 + $0x778] sm:$0xff]
        %v852 = vld [vmem:[%s408 + $0x780] sm:$0xff]
        %v853 = vld [vmem:[%s408 + $0x788] sm:$0xff]
        %v854 = vld [vmem:[%s408 + $0x790] sm:$0xff]
        %v855 = vld [vmem:[%s408 + $0x798] sm:$0xff]
        %v856 = vld [vmem:[%s408 + $0x7a0] sm:$0xff]
        %v857 = vld [vmem:[%s408 + $0x7a8] sm:$0xff]
        %v858 = vld [vmem:[%s408 + $0x7b0] sm:$0xff]
        %v859 = vld [vmem:[%s408 + $0x7b8] sm:$0xff]
        %v860 = vld [vmem:[%s408 + $0x7c0] sm:$0xff]
        %v861 = vld [vmem:[%s408 + $0x7c8] sm:$0xff]
        %v862 = vld [vmem:[%s408 + $0x7d0] sm:$0xff]
        %v863 = vld [vmem:[%s408 + $0x7d8] sm:$0xff]
        %v864 = vld [vmem:[%s408 + $0x7e0] sm:$0xff]
        %v865 = vld [vmem:[%s408 + $0x7e8] sm:$0xff]
        %v866 = vld [vmem:[%s408 + $0x7f0] sm:$0xff]
        %v867 = vld [vmem:[%s408 + $0x7f8] sm:$0xff]
        %v932 = vunpack.c.l.b16 %v548
        %v933 = vunpack.c.h.b16 %v548
        %v934 = vunpack.c.l.b16 %v549
        %v935 = vunpack.c.h.b16 %v549
        %v936 = vunpack.c.l.b16 %v550
        %v937 = vunpack.c.h.b16 %v550
        %v938 = vunpack.c.l.b16 %v551
        %v939 = vunpack.c.h.b16 %v551
        %v940 = vunpack.c.l.b16 %v552
        %v941 = vunpack.c.h.b16 %v552
        %v942 = vunpack.c.l.b16 %v553
        %v943 = vunpack.c.h.b16 %v553
        %v944 = vunpack.c.l.b16 %v554
        %v945 = vunpack.c.h.b16 %v554
        %v946 = vunpack.c.l.b16 %v555
        %v947 = vunpack.c.h.b16 %v555
        %v948 = vunpack.c.l.b16 %v556
        %v949 = vunpack.c.h.b16 %v556
        %v950 = vunpack.c.l.b16 %v557
        %v951 = vunpack.c.h.b16 %v557
        %v952 = vunpack.c.l.b16 %v558
        %v953 = vunpack.c.h.b16 %v558
        %v954 = vunpack.c.l.b16 %v559
        %v955 = vunpack.c.h.b16 %v559
        %v956 = vunpack.c.l.b16 %v560
        %v957 = vunpack.c.h.b16 %v560
        %v958 = vunpack.c.l.b16 %v561
        %v959 = vunpack.c.h.b16 %v561
        %v960 = vunpack.c.l.b16 %v562
        %v961 = vunpack.c.h.b16 %v562
        %v962 = vunpack.c.l.b16 %v563
        %v963 = vunpack.c.h.b16 %v563
        %v964 = vunpack.c.l.b16 %v564
        %v965 = vunpack.c.h.b16 %v564
        %v966 = vunpack.c.l.b16 %v565
        %v967 = vunpack.c.h.b16 %v565
        %v968 = vunpack.c.l.b16 %v566
        %v969 = vunpack.c.h.b16 %v566
        %v970 = vunpack.c.l.b16 %v567
        %v971 = vunpack.c.h.b16 %v567
        %v972 = vunpack.c.l.b16 %v568
        %v973 = vunpack.c.h.b16 %v568
        %v974 = vunpack.c.l.b16 %v569
        %v975 = vunpack.c.h.b16 %v569
        %v976 = vunpack.c.l.b16 %v570
        %v977 = vunpack.c.h.b16 %v570
        %v978 = vunpack.c.l.b16 %v571
        %v979 = vunpack.c.h.b16 %v571
        %v980 = vunpack.c.l.b16 %v572
        %v981 = vunpack.c.h.b16 %v572
        %v982 = vunpack.c.l.b16 %v573
        %v983 = vunpack.c.h.b16 %v573
        %v984 = vunpack.c.l.b16 %v574
        %v985 = vunpack.c.h.b16 %v574
        %v986 = vunpack.c.l.b16 %v575
        %v987 = vunpack.c.h.b16 %v575
        %v988 = vunpack.c.l.b16 %v576
        %v989 = vunpack.c.h.b16 %v576
        %v990 = vunpack.c.l.b16 %v577
        %v991 = vunpack.c.h.b16 %v577
        %v992 = vunpack.c.l.b16 %v578
        %v993 = vunpack.c.h.b16 %v578
        %v994 = vunpack.c.l.b16 %v579
        %v995 = vunpack.c.h.b16 %v579
        %v996 = vunpack.c.l.b16 %v580
        %v997 = vunpack.c.h.b16 %v580
        %v998 = vunpack.c.l.b16 %v581
        %v999 = vunpack.c.h.b16 %v581
        %v1000 = vunpack.c.l.b16 %v582
        %v1001 = vunpack.c.h.b16 %v582
        %v1002 = vunpack.c.l.b16 %v583
        %v1003 = vunpack.c.h.b16 %v583
        %v1004 = vunpack.c.l.b16 %v584
        %v1005 = vunpack.c.h.b16 %v584
        %v1006 = vunpack.c.l.b16 %v585
        %v1007 = vunpack.c.h.b16 %v585
        %v1008 = vunpack.c.l.b16 %v586
        %v1009 = vunpack.c.h.b16 %v586
        %v1010 = vunpack.c.l.b16 %v587
        %v1011 = vunpack.c.h.b16 %v587
        %v1012 = vunpack.c.l.b16 %v588
        %v1013 = vunpack.c.h.b16 %v588
        %v1014 = vunpack.c.l.b16 %v589
        %v1015 = vunpack.c.h.b16 %v589
        %v1016 = vunpack.c.l.b16 %v590
        %v1017 = vunpack.c.h.b16 %v590
        %v1018 = vunpack.c.l.b16 %v591
        %v1019 = vunpack.c.h.b16 %v591
        %v1020 = vunpack.c.l.b16 %v592
        %v1021 = vunpack.c.h.b16 %v592
        %v1022 = vunpack.c.l.b16 %v593
        %v1023 = vunpack.c.h.b16 %v593
        %v1024 = vunpack.c.l.b16 %v594
        %v1025 = vunpack.c.h.b16 %v594
        %v1026 = vunpack.c.l.b16 %v595
        %v1027 = vunpack.c.h.b16 %v595
        %v1028 = vunpack.c.l.b16 %v596
        %v1029 = vunpack.c.h.b16 %v596
        %v1030 = vunpack.c.l.b16 %v597
        %v1031 = vunpack.c.h.b16 %v597
        %v1032 = vunpack.c.l.b16 %v598
        %v1033 = vunpack.c.h.b16 %v598
        %v1034 = vunpack.c.l.b16 %v599
        %v1035 = vunpack.c.h.b16 %v599
        %v1036 = vunpack.c.l.b16 %v600
        %v1037 = vunpack.c.h.b16 %v600
        %v1038 = vunpack.c.l.b16 %v601
        %v1039 = vunpack.c.h.b16 %v601
        %v1040 = vunpack.c.l.b16 %v602
        %v1041 = vunpack.c.h.b16 %v602
        %v1042 = vunpack.c.l.b16 %v603
        %v1043 = vunpack.c.h.b16 %v603
        %v1044 = vunpack.c.l.b16 %v604
        %v1045 = vunpack.c.h.b16 %v604
        %v1046 = vunpack.c.l.b16 %v605
        %v1047 = vunpack.c.h.b16 %v605
        %v1048 = vunpack.c.l.b16 %v606
        %v1049 = vunpack.c.h.b16 %v606
        %v1050 = vunpack.c.l.b16 %v607
        %v1051 = vunpack.c.h.b16 %v607
        %v1052 = vunpack.c.l.b16 %v608
        %v1053 = vunpack.c.h.b16 %v608
        %v1054 = vunpack.c.l.b16 %v609
        %v1055 = vunpack.c.h.b16 %v609
        %v1056 = vunpack.c.l.b16 %v610
        %v1057 = vunpack.c.h.b16 %v610
        %v1058 = vunpack.c.l.b16 %v611
        %v1059 = vunpack.c.h.b16 %v611
        %v1060 = vpack.c.b16 %v940, %v932
        %v1061 = vpack.c.b16 %v941, %v933
        %v1062 = vpack.c.b16 %v942, %v934
        %v1063 = vpack.c.b16 %v943, %v935
        %v1064 = vpack.c.b16 %v944, %v936
        %v1065 = vpack.c.b16 %v945, %v937
        %v1066 = vpack.c.b16 %v946, %v938
        %v1067 = vpack.c.b16 %v947, %v939
        %v1068 = vpack.c.b16 %v956, %v948
        %v1069 = vpack.c.b16 %v957, %v949
        %v1070 = vpack.c.b16 %v958, %v950
        %v1071 = vpack.c.b16 %v959, %v951
        %v1072 = vpack.c.b16 %v960, %v952
        %v1073 = vpack.c.b16 %v961, %v953
        %v1074 = vpack.c.b16 %v962, %v954
        %v1075 = vpack.c.b16 %v963, %v955
        %v1076 = vpack.c.b16 %v972, %v964
        %v1077 = vpack.c.b16 %v973, %v965
        %v1078 = vpack.c.b16 %v974, %v966
        %v1079 = vpack.c.b16 %v975, %v967
        %v1080 = vpack.c.b16 %v976, %v968
        %v1081 = vpack.c.b16 %v977, %v969
        %v1082 = vpack.c.b16 %v978, %v970
        %v1083 = vpack.c.b16 %v979, %v971
        %v1084 = vpack.c.b16 %v988, %v980
        %v1085 = vpack.c.b16 %v989, %v981
        %v1086 = vpack.c.b16 %v990, %v982
        %v1087 = vpack.c.b16 %v991, %v983
        %v1088 = vpack.c.b16 %v992, %v984
        %v1089 = vpack.c.b16 %v993, %v985
        %v1090 = vpack.c.b16 %v994, %v986
        %v1091 = vpack.c.b16 %v995, %v987
        %v1092 = vpack.c.b16 %v1004, %v996
        %v1093 = vpack.c.b16 %v1005, %v997
        %v1094 = vpack.c.b16 %v1006, %v998
        %v1095 = vpack.c.b16 %v1007, %v999
        %v1096 = vpack.c.b16 %v1008, %v1000
        %v1097 = vpack.c.b16 %v1009, %v1001
        %v1098 = vpack.c.b16 %v1010, %v1002
        %v1099 = vpack.c.b16 %v1011, %v1003
        %v1100 = vpack.c.b16 %v1020, %v1012
        %v1101 = vpack.c.b16 %v1021, %v1013
        %v1102 = vpack.c.b16 %v1022, %v1014
        %v1103 = vpack.c.b16 %v1023, %v1015
        %v1104 = vpack.c.b16 %v1024, %v1016
        %v1105 = vpack.c.b16 %v1025, %v1017
        %v1106 = vpack.c.b16 %v1026, %v1018
        %v1107 = vpack.c.b16 %v1027, %v1019
        %v1108 = vpack.c.b16 %v1036, %v1028
        %v1109 = vpack.c.b16 %v1037, %v1029
        %v1110 = vpack.c.b16 %v1038, %v1030
        %v1111 = vpack.c.b16 %v1039, %v1031
        %v1112 = vpack.c.b16 %v1040, %v1032
        %v1113 = vpack.c.b16 %v1041, %v1033
        %v1114 = vpack.c.b16 %v1042, %v1034
        %v1115 = vpack.c.b16 %v1043, %v1035
        %v1116 = vpack.c.b16 %v1052, %v1044
        %v1117 = vpack.c.b16 %v1053, %v1045
        %v1118 = vpack.c.b16 %v1054, %v1046
        %v1119 = vpack.c.b16 %v1055, %v1047
        %v1120 = vpack.c.b16 %v1056, %v1048
        %v1121 = vpack.c.b16 %v1057, %v1049
        %v1122 = vpack.c.b16 %v1058, %v1050
        %v1123 = vpack.c.b16 %v1059, %v1051
        %v1444 = vunpack.c.l.b16 %v612
        %v1445 = vunpack.c.h.b16 %v612
        %v1446 = vunpack.c.l.b16 %v613
        %v1447 = vunpack.c.h.b16 %v613
        %v1448 = vunpack.c.l.b16 %v614
        %v1449 = vunpack.c.h.b16 %v614
        %v1450 = vunpack.c.l.b16 %v615
        %v1451 = vunpack.c.h.b16 %v615
        %v1452 = vunpack.c.l.b16 %v616
        %v1453 = vunpack.c.h.b16 %v616
        %v1454 = vunpack.c.l.b16 %v617
        %v1455 = vunpack.c.h.b16 %v617
        %v1456 = vunpack.c.l.b16 %v618
        %v1457 = vunpack.c.h.b16 %v618
        %v1458 = vunpack.c.l.b16 %v619
        %v1459 = vunpack.c.h.b16 %v619
        %v1460 = vunpack.c.l.b16 %v620
        %v1461 = vunpack.c.h.b16 %v620
        %v1462 = vunpack.c.l.b16 %v621
        %v1463 = vunpack.c.h.b16 %v621
        %v1464 = vunpack.c.l.b16 %v622
        %v1465 = vunpack.c.h.b16 %v622
        %v1466 = vunpack.c.l.b16 %v623
        %v1467 = vunpack.c.h.b16 %v623
        %v1468 = vunpack.c.l.b16 %v624
        %v1469 = vunpack.c.h.b16 %v624
        %v1470 = vunpack.c.l.b16 %v625
        %v1471 = vunpack.c.h.b16 %v625
        %v1472 = vunpack.c.l.b16 %v626
        %v1473 = vunpack.c.h.b16 %v626
        %v1474 = vunpack.c.l.b16 %v627
        %v1475 = vunpack.c.h.b16 %v627
        %v1476 = vunpack.c.l.b16 %v628
        %v1477 = vunpack.c.h.b16 %v628
        %v1478 = vunpack.c.l.b16 %v629
        %v1479 = vunpack.c.h.b16 %v629
        %v1480 = vunpack.c.l.b16 %v630
        %v1481 = vunpack.c.h.b16 %v630
        %v1482 = vunpack.c.l.b16 %v631
        %v1483 = vunpack.c.h.b16 %v631
        %v1484 = vunpack.c.l.b16 %v632
        %v1485 = vunpack.c.h.b16 %v632
        %v1486 = vunpack.c.l.b16 %v633
        %v1487 = vunpack.c.h.b16 %v633
        %v1488 = vunpack.c.l.b16 %v634
        %v1489 = vunpack.c.h.b16 %v634
        %v1490 = vunpack.c.l.b16 %v635
        %v1491 = vunpack.c.h.b16 %v635
        %v1492 = vunpack.c.l.b16 %v636
        %v1493 = vunpack.c.h.b16 %v636
        %v1494 = vunpack.c.l.b16 %v637
        %v1495 = vunpack.c.h.b16 %v637
        %v1496 = vunpack.c.l.b16 %v638
        %v1497 = vunpack.c.h.b16 %v638
        %v1498 = vunpack.c.l.b16 %v639
        %v1499 = vunpack.c.h.b16 %v639
        %v1500 = vunpack.c.l.b16 %v640
        %v1501 = vunpack.c.h.b16 %v640
        %v1502 = vunpack.c.l.b16 %v641
        %v1503 = vunpack.c.h.b16 %v641
        %v1504 = vunpack.c.l.b16 %v642
        %v1505 = vunpack.c.h.b16 %v642
        %v1506 = vunpack.c.l.b16 %v643
        %v1507 = vunpack.c.h.b16 %v643
        %v1508 = vunpack.c.l.b16 %v644
        %v1509 = vunpack.c.h.b16 %v644
        %v1510 = vunpack.c.l.b16 %v645
        %v1511 = vunpack.c.h.b16 %v645
        %v1512 = vunpack.c.l.b16 %v646
        %v1513 = vunpack.c.h.b16 %v646
        %v1514 = vunpack.c.l.b16 %v647
        %v1515 = vunpack.c.h.b16 %v647
        %v1516 = vunpack.c.l.b16 %v648
        %v1517 = vunpack.c.h.b16 %v648
        %v1518 = vunpack.c.l.b16 %v649
        %v1519 = vunpack.c.h.b16 %v649
        %v1520 = vunpack.c.l.b16 %v650
        %v1521 = vunpack.c.h.b16 %v650
        %v1522 = vunpack.c.l.b16 %v651
        %v1523 = vunpack.c.h.b16 %v651
        %v1524 = vunpack.c.l.b16 %v652
        %v1525 = vunpack.c.h.b16 %v652
        %v1526 = vunpack.c.l.b16 %v653
        %v1527 = vunpack.c.h.b16 %v653
        %v1528 = vunpack.c.l.b16 %v654
        %v1529 = vunpack.c.h.b16 %v654
        %v1530 = vunpack.c.l.b16 %v655
        %v1531 = vunpack.c.h.b16 %v655
        %v1532 = vunpack.c.l.b16 %v656
        %v1533 = vunpack.c.h.b16 %v656
        %v1534 = vunpack.c.l.b16 %v657
        %v1535 = vunpack.c.h.b16 %v657
        %v1536 = vunpack.c.l.b16 %v658
        %v1537 = vunpack.c.h.b16 %v658
        %v1538 = vunpack.c.l.b16 %v659
        %v1539 = vunpack.c.h.b16 %v659
        %v1540 = vunpack.c.l.b16 %v660
        %v1541 = vunpack.c.h.b16 %v660
        %v1542 = vunpack.c.l.b16 %v661
        %v1543 = vunpack.c.h.b16 %v661
        %v1544 = vunpack.c.l.b16 %v662
        %v1545 = vunpack.c.h.b16 %v662
        %v1546 = vunpack.c.l.b16 %v663
        %v1547 = vunpack.c.h.b16 %v663
        %v1548 = vunpack.c.l.b16 %v664
        %v1549 = vunpack.c.h.b16 %v664
        %v1550 = vunpack.c.l.b16 %v665
        %v1551 = vunpack.c.h.b16 %v665
        %v1552 = vunpack.c.l.b16 %v666
        %v1553 = vunpack.c.h.b16 %v666
        %v1554 = vunpack.c.l.b16 %v667
        %v1555 = vunpack.c.h.b16 %v667
        %v1556 = vunpack.c.l.b16 %v668
        %v1557 = vunpack.c.h.b16 %v668
        %v1558 = vunpack.c.l.b16 %v669
        %v1559 = vunpack.c.h.b16 %v669
        %v1560 = vunpack.c.l.b16 %v670
        %v1561 = vunpack.c.h.b16 %v670
        %v1562 = vunpack.c.l.b16 %v671
        %v1563 = vunpack.c.h.b16 %v671
        %v1564 = vunpack.c.l.b16 %v672
        %v1565 = vunpack.c.h.b16 %v672
        %v1566 = vunpack.c.l.b16 %v673
        %v1567 = vunpack.c.h.b16 %v673
        %v1568 = vunpack.c.l.b16 %v674
        %v1569 = vunpack.c.h.b16 %v674
        %v1570 = vunpack.c.l.b16 %v675
        %v1571 = vunpack.c.h.b16 %v675
        %v1572 = vunpack.c.l.b16 %v676
        %v1573 = vunpack.c.h.b16 %v676
        %v1574 = vunpack.c.l.b16 %v677
        %v1575 = vunpack.c.h.b16 %v677
        %v1576 = vunpack.c.l.b16 %v678
        %v1577 = vunpack.c.h.b16 %v678
        %v1578 = vunpack.c.l.b16 %v679
        %v1579 = vunpack.c.h.b16 %v679
        %v1580 = vunpack.c.l.b16 %v680
        %v1581 = vunpack.c.h.b16 %v680
        %v1582 = vunpack.c.l.b16 %v681
        %v1583 = vunpack.c.h.b16 %v681
        %v1584 = vunpack.c.l.b16 %v682
        %v1585 = vunpack.c.h.b16 %v682
        %v1586 = vunpack.c.l.b16 %v683
        %v1587 = vunpack.c.h.b16 %v683
        %v1588 = vunpack.c.l.b16 %v684
        %v1589 = vunpack.c.h.b16 %v684
        %v1590 = vunpack.c.l.b16 %v685
        %v1591 = vunpack.c.h.b16 %v685
        %v1592 = vunpack.c.l.b16 %v686
        %v1593 = vunpack.c.h.b16 %v686
        %v1594 = vunpack.c.l.b16 %v687
        %v1595 = vunpack.c.h.b16 %v687
        %v1596 = vunpack.c.l.b16 %v688
        %v1597 = vunpack.c.h.b16 %v688
        %v1598 = vunpack.c.l.b16 %v689
        %v1599 = vunpack.c.h.b16 %v689
        %v1600 = vunpack.c.l.b16 %v690
        %v1601 = vunpack.c.h.b16 %v690
        %v1602 = vunpack.c.l.b16 %v691
        %v1603 = vunpack.c.h.b16 %v691
        %v1604 = vunpack.c.l.b16 %v692
        %v1605 = vunpack.c.h.b16 %v692
        %v1606 = vunpack.c.l.b16 %v693
        %v1607 = vunpack.c.h.b16 %v693
        %v1608 = vunpack.c.l.b16 %v694
        %v1609 = vunpack.c.h.b16 %v694
        %v1610 = vunpack.c.l.b16 %v695
        %v1611 = vunpack.c.h.b16 %v695
        %v1612 = vunpack.c.l.b16 %v696
        %v1613 = vunpack.c.h.b16 %v696
        %v1614 = vunpack.c.l.b16 %v697
        %v1615 = vunpack.c.h.b16 %v697
        %v1616 = vunpack.c.l.b16 %v698
        %v1617 = vunpack.c.h.b16 %v698
        %v1618 = vunpack.c.l.b16 %v699
        %v1619 = vunpack.c.h.b16 %v699
        %v1620 = vunpack.c.l.b16 %v700
        %v1621 = vunpack.c.h.b16 %v700
        %v1622 = vunpack.c.l.b16 %v701
        %v1623 = vunpack.c.h.b16 %v701
        %v1624 = vunpack.c.l.b16 %v702
        %v1625 = vunpack.c.h.b16 %v702
        %v1626 = vunpack.c.l.b16 %v703
        %v1627 = vunpack.c.h.b16 %v703
        %v1628 = vunpack.c.l.b16 %v704
        %v1629 = vunpack.c.h.b16 %v704
        %v1630 = vunpack.c.l.b16 %v705
        %v1631 = vunpack.c.h.b16 %v705
        %v1632 = vunpack.c.l.b16 %v706
        %v1633 = vunpack.c.h.b16 %v706
        %v1634 = vunpack.c.l.b16 %v707
        %v1635 = vunpack.c.h.b16 %v707
        %v1636 = vunpack.c.l.b16 %v708
        %v1637 = vunpack.c.h.b16 %v708
        %v1638 = vunpack.c.l.b16 %v709
        %v1639 = vunpack.c.h.b16 %v709
        %v1640 = vunpack.c.l.b16 %v710
        %v1641 = vunpack.c.h.b16 %v710
        %v1642 = vunpack.c.l.b16 %v711
        %v1643 = vunpack.c.h.b16 %v711
        %v1644 = vunpack.c.l.b16 %v712
        %v1645 = vunpack.c.h.b16 %v712
        %v1646 = vunpack.c.l.b16 %v713
        %v1647 = vunpack.c.h.b16 %v713
        %v1648 = vunpack.c.l.b16 %v714
        %v1649 = vunpack.c.h.b16 %v714
        %v1650 = vunpack.c.l.b16 %v715
        %v1651 = vunpack.c.h.b16 %v715
        %v1652 = vunpack.c.l.b16 %v716
        %v1653 = vunpack.c.h.b16 %v716
        %v1654 = vunpack.c.l.b16 %v717
        %v1655 = vunpack.c.h.b16 %v717
        %v1656 = vunpack.c.l.b16 %v718
        %v1657 = vunpack.c.h.b16 %v718
        %v1658 = vunpack.c.l.b16 %v719
        %v1659 = vunpack.c.h.b16 %v719
        %v1660 = vunpack.c.l.b16 %v720
        %v1661 = vunpack.c.h.b16 %v720
        %v1662 = vunpack.c.l.b16 %v721
        %v1663 = vunpack.c.h.b16 %v721
        %v1664 = vunpack.c.l.b16 %v722
        %v1665 = vunpack.c.h.b16 %v722
        %v1666 = vunpack.c.l.b16 %v723
        %v1667 = vunpack.c.h.b16 %v723
        %v1668 = vunpack.c.l.b16 %v724
        %v1669 = vunpack.c.h.b16 %v724
        %v1670 = vunpack.c.l.b16 %v725
        %v1671 = vunpack.c.h.b16 %v725
        %v1672 = vunpack.c.l.b16 %v726
        %v1673 = vunpack.c.h.b16 %v726
        %v1674 = vunpack.c.l.b16 %v727
        %v1675 = vunpack.c.h.b16 %v727
        %v1676 = vunpack.c.l.b16 %v728
        %v1677 = vunpack.c.h.b16 %v728
        %v1678 = vunpack.c.l.b16 %v729
        %v1679 = vunpack.c.h.b16 %v729
        %v1680 = vunpack.c.l.b16 %v730
        %v1681 = vunpack.c.h.b16 %v730
        %v1682 = vunpack.c.l.b16 %v731
        %v1683 = vunpack.c.h.b16 %v731
        %v1684 = vunpack.c.l.b16 %v732
        %v1685 = vunpack.c.h.b16 %v732
        %v1686 = vunpack.c.l.b16 %v733
        %v1687 = vunpack.c.h.b16 %v733
        %v1688 = vunpack.c.l.b16 %v734
        %v1689 = vunpack.c.h.b16 %v734
        %v1690 = vunpack.c.l.b16 %v735
        %v1691 = vunpack.c.h.b16 %v735
        %v1692 = vunpack.c.l.b16 %v736
        %v1693 = vunpack.c.h.b16 %v736
        %v1694 = vunpack.c.l.b16 %v737
        %v1695 = vunpack.c.h.b16 %v737
        %v1696 = vunpack.c.l.b16 %v738
        %v1697 = vunpack.c.h.b16 %v738
        %v1698 = vunpack.c.l.b16 %v739
        %v1699 = vunpack.c.h.b16 %v739
        %v1700 = vunpack.c.l.b16 %v740
        %v1701 = vunpack.c.h.b16 %v740
        %v1702 = vunpack.c.l.b16 %v741
        %v1703 = vunpack.c.h.b16 %v741
        %v1704 = vunpack.c.l.b16 %v742
        %v1705 = vunpack.c.h.b16 %v742
        %v1706 = vunpack.c.l.b16 %v743
        %v1707 = vunpack.c.h.b16 %v743
        %v1708 = vunpack.c.l.b16 %v744
        %v1709 = vunpack.c.h.b16 %v744
        %v1710 = vunpack.c.l.b16 %v745
        %v1711 = vunpack.c.h.b16 %v745
        %v1712 = vunpack.c.l.b16 %v746
        %v1713 = vunpack.c.h.b16 %v746
        %v1714 = vunpack.c.l.b16 %v747
        %v1715 = vunpack.c.h.b16 %v747
        %v1716 = vunpack.c.l.b16 %v748
        %v1717 = vunpack.c.h.b16 %v748
        %v1718 = vunpack.c.l.b16 %v749
        %v1719 = vunpack.c.h.b16 %v749
        %v1720 = vunpack.c.l.b16 %v750
        %v1721 = vunpack.c.h.b16 %v750
        %v1722 = vunpack.c.l.b16 %v751
        %v1723 = vunpack.c.h.b16 %v751
        %v1724 = vunpack.c.l.b16 %v752
        %v1725 = vunpack.c.h.b16 %v752
        %v1726 = vunpack.c.l.b16 %v753
        %v1727 = vunpack.c.h.b16 %v753
        %v1728 = vunpack.c.l.b16 %v754
        %v1729 = vunpack.c.h.b16 %v754
        %v1730 = vunpack.c.l.b16 %v755
        %v1731 = vunpack.c.h.b16 %v755
        %v1732 = vunpack.c.l.b16 %v756
        %v1733 = vunpack.c.h.b16 %v756
        %v1734 = vunpack.c.l.b16 %v757
        %v1735 = vunpack.c.h.b16 %v757
        %v1736 = vunpack.c.l.b16 %v758
        %v1737 = vunpack.c.h.b16 %v758
        %v1738 = vunpack.c.l.b16 %v759
        %v1739 = vunpack.c.h.b16 %v759
        %v1740 = vunpack.c.l.b16 %v760
        %v1741 = vunpack.c.h.b16 %v760
        %v1742 = vunpack.c.l.b16 %v761
        %v1743 = vunpack.c.h.b16 %v761
        %v1744 = vunpack.c.l.b16 %v762
        %v1745 = vunpack.c.h.b16 %v762
        %v1746 = vunpack.c.l.b16 %v763
        %v1747 = vunpack.c.h.b16 %v763
        %v1748 = vunpack.c.l.b16 %v764
        %v1749 = vunpack.c.h.b16 %v764
        %v1750 = vunpack.c.l.b16 %v765
        %v1751 = vunpack.c.h.b16 %v765
        %v1752 = vunpack.c.l.b16 %v766
        %v1753 = vunpack.c.h.b16 %v766
        %v1754 = vunpack.c.l.b16 %v767
        %v1755 = vunpack.c.h.b16 %v767
        %v1756 = vunpack.c.l.b16 %v768
        %v1757 = vunpack.c.h.b16 %v768
        %v1758 = vunpack.c.l.b16 %v769
        %v1759 = vunpack.c.h.b16 %v769
        %v1760 = vunpack.c.l.b16 %v770
        %v1761 = vunpack.c.h.b16 %v770
        %v1762 = vunpack.c.l.b16 %v771
        %v1763 = vunpack.c.h.b16 %v771
        %v1764 = vunpack.c.l.b16 %v772
        %v1765 = vunpack.c.h.b16 %v772
        %v1766 = vunpack.c.l.b16 %v773
        %v1767 = vunpack.c.h.b16 %v773
        %v1768 = vunpack.c.l.b16 %v774
        %v1769 = vunpack.c.h.b16 %v774
        %v1770 = vunpack.c.l.b16 %v775
        %v1771 = vunpack.c.h.b16 %v775
        %v1772 = vunpack.c.l.b16 %v776
        %v1773 = vunpack.c.h.b16 %v776
        %v1774 = vunpack.c.l.b16 %v777
        %v1775 = vunpack.c.h.b16 %v777
        %v1776 = vunpack.c.l.b16 %v778
        %v1777 = vunpack.c.h.b16 %v778
        %v1778 = vunpack.c.l.b16 %v779
        %v1779 = vunpack.c.h.b16 %v779
        %v1780 = vunpack.c.l.b16 %v780
        %v1781 = vunpack.c.h.b16 %v780
        %v1782 = vunpack.c.l.b16 %v781
        %v1783 = vunpack.c.h.b16 %v781
        %v1784 = vunpack.c.l.b16 %v782
        %v1785 = vunpack.c.h.b16 %v782
        %v1786 = vunpack.c.l.b16 %v783
        %v1787 = vunpack.c.h.b16 %v783
        %v1788 = vunpack.c.l.b16 %v784
        %v1789 = vunpack.c.h.b16 %v784
        %v1790 = vunpack.c.l.b16 %v785
        %v1791 = vunpack.c.h.b16 %v785
        %v1792 = vunpack.c.l.b16 %v786
        %v1793 = vunpack.c.h.b16 %v786
        %v1794 = vunpack.c.l.b16 %v787
        %v1795 = vunpack.c.h.b16 %v787
        %v1796 = vunpack.c.l.b16 %v788
        %v1797 = vunpack.c.h.b16 %v788
        %v1798 = vunpack.c.l.b16 %v789
        %v1799 = vunpack.c.h.b16 %v789
        %v1800 = vunpack.c.l.b16 %v790
        %v1801 = vunpack.c.h.b16 %v790
        %v1802 = vunpack.c.l.b16 %v791
        %v1803 = vunpack.c.h.b16 %v791
        %v1804 = vunpack.c.l.b16 %v792
        %v1805 = vunpack.c.h.b16 %v792
        %v1806 = vunpack.c.l.b16 %v793
        %v1807 = vunpack.c.h.b16 %v793
        %v1808 = vunpack.c.l.b16 %v794
        %v1809 = vunpack.c.h.b16 %v794
        %v1810 = vunpack.c.l.b16 %v795
        %v1811 = vunpack.c.h.b16 %v795
        %v1812 = vunpack.c.l.b16 %v796
        %v1813 = vunpack.c.h.b16 %v796
        %v1814 = vunpack.c.l.b16 %v797
        %v1815 = vunpack.c.h.b16 %v797
        %v1816 = vunpack.c.l.b16 %v798
        %v1817 = vunpack.c.h.b16 %v798
        %v1818 = vunpack.c.l.b16 %v799
        %v1819 = vunpack.c.h.b16 %v799
        %v1820 = vunpack.c.l.b16 %v800
        %v1821 = vunpack.c.h.b16 %v800
        %v1822 = vunpack.c.l.b16 %v801
        %v1823 = vunpack.c.h.b16 %v801
        %v1824 = vunpack.c.l.b16 %v802
        %v1825 = vunpack.c.h.b16 %v802
        %v1826 = vunpack.c.l.b16 %v803
        %v1827 = vunpack.c.h.b16 %v803
        %v1828 = vunpack.c.l.b16 %v804
        %v1829 = vunpack.c.h.b16 %v804
        %v1830 = vunpack.c.l.b16 %v805
        %v1831 = vunpack.c.h.b16 %v805
        %v1832 = vunpack.c.l.b16 %v806
        %v1833 = vunpack.c.h.b16 %v806
        %v1834 = vunpack.c.l.b16 %v807
        %v1835 = vunpack.c.h.b16 %v807
        %v1836 = vunpack.c.l.b16 %v808
        %v1837 = vunpack.c.h.b16 %v808
        %v1838 = vunpack.c.l.b16 %v809
        %v1839 = vunpack.c.h.b16 %v809
        %v1840 = vunpack.c.l.b16 %v810
        %v1841 = vunpack.c.h.b16 %v810
        %v1842 = vunpack.c.l.b16 %v811
        %v1843 = vunpack.c.h.b16 %v811
        %v1844 = vunpack.c.l.b16 %v812
        %v1845 = vunpack.c.h.b16 %v812
        %v1846 = vunpack.c.l.b16 %v813
        %v1847 = vunpack.c.h.b16 %v813
        %v1848 = vunpack.c.l.b16 %v814
        %v1849 = vunpack.c.h.b16 %v814
        %v1850 = vunpack.c.l.b16 %v815
        %v1851 = vunpack.c.h.b16 %v815
        %v1852 = vunpack.c.l.b16 %v816
        %v1853 = vunpack.c.h.b16 %v816
        %v1854 = vunpack.c.l.b16 %v817
        %v1855 = vunpack.c.h.b16 %v817
        %v1856 = vunpack.c.l.b16 %v818
        %v1857 = vunpack.c.h.b16 %v818
        %v1858 = vunpack.c.l.b16 %v819
        %v1859 = vunpack.c.h.b16 %v819
        %v1860 = vunpack.c.l.b16 %v820
        %v1861 = vunpack.c.h.b16 %v820
        %v1862 = vunpack.c.l.b16 %v821
        %v1863 = vunpack.c.h.b16 %v821
        %v1864 = vunpack.c.l.b16 %v822
        %v1865 = vunpack.c.h.b16 %v822
        %v1866 = vunpack.c.l.b16 %v823
        %v1867 = vunpack.c.h.b16 %v823
        %v1868 = vunpack.c.l.b16 %v824
        %v1869 = vunpack.c.h.b16 %v824
        %v1870 = vunpack.c.l.b16 %v825
        %v1871 = vunpack.c.h.b16 %v825
        %v1872 = vunpack.c.l.b16 %v826
        %v1873 = vunpack.c.h.b16 %v826
        %v1874 = vunpack.c.l.b16 %v827
        %v1875 = vunpack.c.h.b16 %v827
        %v1876 = vunpack.c.l.b16 %v828
        %v1877 = vunpack.c.h.b16 %v828
        %v1878 = vunpack.c.l.b16 %v829
        %v1879 = vunpack.c.h.b16 %v829
        %v1880 = vunpack.c.l.b16 %v830
        %v1881 = vunpack.c.h.b16 %v830
        %v1882 = vunpack.c.l.b16 %v831
        %v1883 = vunpack.c.h.b16 %v831
        %v1884 = vunpack.c.l.b16 %v832
        %v1885 = vunpack.c.h.b16 %v832
        %v1886 = vunpack.c.l.b16 %v833
        %v1887 = vunpack.c.h.b16 %v833
        %v1888 = vunpack.c.l.b16 %v834
        %v1889 = vunpack.c.h.b16 %v834
        %v1890 = vunpack.c.l.b16 %v835
        %v1891 = vunpack.c.h.b16 %v835
        %v1892 = vunpack.c.l.b16 %v836
        %v1893 = vunpack.c.h.b16 %v836
        %v1894 = vunpack.c.l.b16 %v837
        %v1895 = vunpack.c.h.b16 %v837
        %v1896 = vunpack.c.l.b16 %v838
        %v1897 = vunpack.c.h.b16 %v838
        %v1898 = vunpack.c.l.b16 %v839
        %v1899 = vunpack.c.h.b16 %v839
        %v1900 = vunpack.c.l.b16 %v840
        %v1901 = vunpack.c.h.b16 %v840
        %v1902 = vunpack.c.l.b16 %v841
        %v1903 = vunpack.c.h.b16 %v841
        %v1904 = vunpack.c.l.b16 %v842
        %v1905 = vunpack.c.h.b16 %v842
        %v1906 = vunpack.c.l.b16 %v843
        %v1907 = vunpack.c.h.b16 %v843
        %v1908 = vunpack.c.l.b16 %v844
        %v1909 = vunpack.c.h.b16 %v844
        %v1910 = vunpack.c.l.b16 %v845
        %v1911 = vunpack.c.h.b16 %v845
        %v1912 = vunpack.c.l.b16 %v846
        %v1913 = vunpack.c.h.b16 %v846
        %v1914 = vunpack.c.l.b16 %v847
        %v1915 = vunpack.c.h.b16 %v847
        %v1916 = vunpack.c.l.b16 %v848
        %v1917 = vunpack.c.h.b16 %v848
        %v1918 = vunpack.c.l.b16 %v849
        %v1919 = vunpack.c.h.b16 %v849
        %v1920 = vunpack.c.l.b16 %v850
        %v1921 = vunpack.c.h.b16 %v850
        %v1922 = vunpack.c.l.b16 %v851
        %v1923 = vunpack.c.h.b16 %v851
        %v1924 = vunpack.c.l.b16 %v852
        %v1925 = vunpack.c.h.b16 %v852
        %v1926 = vunpack.c.l.b16 %v853
        %v1927 = vunpack.c.h.b16 %v853
        %v1928 = vunpack.c.l.b16 %v854
        %v1929 = vunpack.c.h.b16 %v854
        %v1930 = vunpack.c.l.b16 %v855
        %v1931 = vunpack.c.h.b16 %v855
        %v1932 = vunpack.c.l.b16 %v856
        %v1933 = vunpack.c.h.b16 %v856
        %v1934 = vunpack.c.l.b16 %v857
        %v1935 = vunpack.c.h.b16 %v857
        %v1936 = vunpack.c.l.b16 %v858
        %v1937 = vunpack.c.h.b16 %v858
        %v1938 = vunpack.c.l.b16 %v859
        %v1939 = vunpack.c.h.b16 %v859
        %v1940 = vunpack.c.l.b16 %v860
        %v1941 = vunpack.c.h.b16 %v860
        %v1942 = vunpack.c.l.b16 %v861
        %v1943 = vunpack.c.h.b16 %v861
        %v1944 = vunpack.c.l.b16 %v862
        %v1945 = vunpack.c.h.b16 %v862
        %v1946 = vunpack.c.l.b16 %v863
        %v1947 = vunpack.c.h.b16 %v863
        %v1948 = vunpack.c.l.b16 %v864
        %v1949 = vunpack.c.h.b16 %v864
        %v1950 = vunpack.c.l.b16 %v865
        %v1951 = vunpack.c.h.b16 %v865
        %v1952 = vunpack.c.l.b16 %v866
        %v1953 = vunpack.c.h.b16 %v866
        %v1954 = vunpack.c.l.b16 %v867
        %v1955 = vunpack.c.h.b16 %v867
        %v1956 = vpack.c.b16 %v1448, %v1444
        %v1957 = vpack.c.b16 %v1449, %v1445
        %v1958 = vpack.c.b16 %v1450, %v1446
        %v1959 = vpack.c.b16 %v1451, %v1447
        %v1960 = vpack.c.b16 %v1456, %v1452
        %v1961 = vpack.c.b16 %v1457, %v1453
        %v1962 = vpack.c.b16 %v1458, %v1454
        %v1963 = vpack.c.b16 %v1459, %v1455
        %v1964 = vpack.c.b16 %v1464, %v1460
        %v1965 = vpack.c.b16 %v1465, %v1461
        %v1966 = vpack.c.b16 %v1466, %v1462
        %v1967 = vpack.c.b16 %v1467, %v1463
        %v1968 = vpack.c.b16 %v1472, %v1468
        %v1969 = vpack.c.b16 %v1473, %v1469
        %v1970 = vpack.c.b16 %v1474, %v1470
        %v1971 = vpack.c.b16 %v1475, %v1471
        %v1972 = vpack.c.b16 %v1480, %v1476
        %v1973 = vpack.c.b16 %v1481, %v1477
        %v1974 = vpack.c.b16 %v1482, %v1478
        %v1975 = vpack.c.b16 %v1483, %v1479
        %v1976 = vpack.c.b16 %v1488, %v1484
        %v1977 = vpack.c.b16 %v1489, %v1485
        %v1978 = vpack.c.b16 %v1490, %v1486
        %v1979 = vpack.c.b16 %v1491, %v1487
        %v1980 = vpack.c.b16 %v1496, %v1492
        %v1981 = vpack.c.b16 %v1497, %v1493
        %v1982 = vpack.c.b16 %v1498, %v1494
        %v1983 = vpack.c.b16 %v1499, %v1495
        %v1984 = vpack.c.b16 %v1504, %v1500
        %v1985 = vpack.c.b16 %v1505, %v1501
        %v1986 = vpack.c.b16 %v1506, %v1502
        %v1987 = vpack.c.b16 %v1507, %v1503
        %v1988 = vpack.c.b16 %v1512, %v1508
        %v1989 = vpack.c.b16 %v1513, %v1509
        %v1990 = vpack.c.b16 %v1514, %v1510
        %v1991 = vpack.c.b16 %v1515, %v1511
        %v1992 = vpack.c.b16 %v1520, %v1516
        %v1993 = vpack.c.b16 %v1521, %v1517
        %v1994 = vpack.c.b16 %v1522, %v1518
        %v1995 = vpack.c.b16 %v1523, %v1519
        %v1996 = vpack.c.b16 %v1528, %v1524
        %v1997 = vpack.c.b16 %v1529, %v1525
        %v1998 = vpack.c.b16 %v1530, %v1526
        %v1999 = vpack.c.b16 %v1531, %v1527
        %v2000 = vpack.c.b16 %v1536, %v1532
        %v2001 = vpack.c.b16 %v1537, %v1533
        %v2002 = vpack.c.b16 %v1538, %v1534
        %v2003 = vpack.c.b16 %v1539, %v1535
        %v2004 = vpack.c.b16 %v1544, %v1540
        %v2005 = vpack.c.b16 %v1545, %v1541
        %v2006 = vpack.c.b16 %v1546, %v1542
        %v2007 = vpack.c.b16 %v1547, %v1543
        %v2008 = vpack.c.b16 %v1552, %v1548
        %v2009 = vpack.c.b16 %v1553, %v1549
        %v2010 = vpack.c.b16 %v1554, %v1550
        %v2011 = vpack.c.b16 %v1555, %v1551
        %v2012 = vpack.c.b16 %v1560, %v1556
        %v2013 = vpack.c.b16 %v1561, %v1557
        %v2014 = vpack.c.b16 %v1562, %v1558
        %v2015 = vpack.c.b16 %v1563, %v1559
        %v2016 = vpack.c.b16 %v1568, %v1564
        %v2017 = vpack.c.b16 %v1569, %v1565
        %v2018 = vpack.c.b16 %v1570, %v1566
        %v2019 = vpack.c.b16 %v1571, %v1567
        %v2020 = vpack.c.b16 %v1576, %v1572
        %v2021 = vpack.c.b16 %v1577, %v1573
        %v2022 = vpack.c.b16 %v1578, %v1574
        %v2023 = vpack.c.b16 %v1579, %v1575
        %v2024 = vpack.c.b16 %v1584, %v1580
        %v2025 = vpack.c.b16 %v1585, %v1581
        %v2026 = vpack.c.b16 %v1586, %v1582
        %v2027 = vpack.c.b16 %v1587, %v1583
        %v2028 = vpack.c.b16 %v1592, %v1588
        %v2029 = vpack.c.b16 %v1593, %v1589
        %v2030 = vpack.c.b16 %v1594, %v1590
        %v2031 = vpack.c.b16 %v1595, %v1591
        %v2032 = vpack.c.b16 %v1600, %v1596
        %v2033 = vpack.c.b16 %v1601, %v1597
        %v2034 = vpack.c.b16 %v1602, %v1598
        %v2035 = vpack.c.b16 %v1603, %v1599
        %v2036 = vpack.c.b16 %v1608, %v1604
        %v2037 = vpack.c.b16 %v1609, %v1605
        %v2038 = vpack.c.b16 %v1610, %v1606
        %v2039 = vpack.c.b16 %v1611, %v1607
        %v2040 = vpack.c.b16 %v1616, %v1612
        %v2041 = vpack.c.b16 %v1617, %v1613
        %v2042 = vpack.c.b16 %v1618, %v1614
        %v2043 = vpack.c.b16 %v1619, %v1615
        %v2044 = vpack.c.b16 %v1624, %v1620
        %v2045 = vpack.c.b16 %v1625, %v1621
        %v2046 = vpack.c.b16 %v1626, %v1622
        %v2047 = vpack.c.b16 %v1627, %v1623
        %v2048 = vpack.c.b16 %v1632, %v1628
        %v2049 = vpack.c.b16 %v1633, %v1629
        %v2050 = vpack.c.b16 %v1634, %v1630
        %v2051 = vpack.c.b16 %v1635, %v1631
        %v2052 = vpack.c.b16 %v1640, %v1636
        %v2053 = vpack.c.b16 %v1641, %v1637
        %v2054 = vpack.c.b16 %v1642, %v1638
        %v2055 = vpack.c.b16 %v1643, %v1639
        %v2056 = vpack.c.b16 %v1648, %v1644
        %v2057 = vpack.c.b16 %v1649, %v1645
        %v2058 = vpack.c.b16 %v1650, %v1646
        %v2059 = vpack.c.b16 %v1651, %v1647
        %v2060 = vpack.c.b16 %v1656, %v1652
        %v2061 = vpack.c.b16 %v1657, %v1653
        %v2062 = vpack.c.b16 %v1658, %v1654
        %v2063 = vpack.c.b16 %v1659, %v1655
        %v2064 = vpack.c.b16 %v1664, %v1660
        %v2065 = vpack.c.b16 %v1665, %v1661
        %v2066 = vpack.c.b16 %v1666, %v1662
        %v2067 = vpack.c.b16 %v1667, %v1663
        %v2068 = vpack.c.b16 %v1672, %v1668
        %v2069 = vpack.c.b16 %v1673, %v1669
        %v2070 = vpack.c.b16 %v1674, %v1670
        %v2071 = vpack.c.b16 %v1675, %v1671
        %v2072 = vpack.c.b16 %v1680, %v1676
        %v2073 = vpack.c.b16 %v1681, %v1677
        %v2074 = vpack.c.b16 %v1682, %v1678
        %v2075 = vpack.c.b16 %v1683, %v1679
        %v2076 = vpack.c.b16 %v1688, %v1684
        %v2077 = vpack.c.b16 %v1689, %v1685
        %v2078 = vpack.c.b16 %v1690, %v1686
        %v2079 = vpack.c.b16 %v1691, %v1687
        %v2080 = vpack.c.b16 %v1696, %v1692
        %v2081 = vpack.c.b16 %v1697, %v1693
        %v2082 = vpack.c.b16 %v1698, %v1694
        %v2083 = vpack.c.b16 %v1699, %v1695
        %v2084 = vpack.c.b16 %v1704, %v1700
        %v2085 = vpack.c.b16 %v1705, %v1701
        %v2086 = vpack.c.b16 %v1706, %v1702
        %v2087 = vpack.c.b16 %v1707, %v1703
        %v2088 = vpack.c.b16 %v1712, %v1708
        %v2089 = vpack.c.b16 %v1713, %v1709
        %v2090 = vpack.c.b16 %v1714, %v1710
        %v2091 = vpack.c.b16 %v1715, %v1711
        %v2092 = vpack.c.b16 %v1720, %v1716
        %v2093 = vpack.c.b16 %v1721, %v1717
        %v2094 = vpack.c.b16 %v1722, %v1718
        %v2095 = vpack.c.b16 %v1723, %v1719
        %v2096 = vpack.c.b16 %v1728, %v1724
        %v2097 = vpack.c.b16 %v1729, %v1725
        %v2098 = vpack.c.b16 %v1730, %v1726
        %v2099 = vpack.c.b16 %v1731, %v1727
        %v2100 = vpack.c.b16 %v1736, %v1732
        %v2101 = vpack.c.b16 %v1737, %v1733
        %v2102 = vpack.c.b16 %v1738, %v1734
        %v2103 = vpack.c.b16 %v1739, %v1735
        %v2104 = vpack.c.b16 %v1744, %v1740
        %v2105 = vpack.c.b16 %v1745, %v1741
        %v2106 = vpack.c.b16 %v1746, %v1742
        %v2107 = vpack.c.b16 %v1747, %v1743
        %v2108 = vpack.c.b16 %v1752, %v1748
        %v2109 = vpack.c.b16 %v1753, %v1749
        %v2110 = vpack.c.b16 %v1754, %v1750
        %v2111 = vpack.c.b16 %v1755, %v1751
        %v2112 = vpack.c.b16 %v1760, %v1756
        %v2113 = vpack.c.b16 %v1761, %v1757
        %v2114 = vpack.c.b16 %v1762, %v1758
        %v2115 = vpack.c.b16 %v1763, %v1759
        %v2116 = vpack.c.b16 %v1768, %v1764
        %v2117 = vpack.c.b16 %v1769, %v1765
        %v2118 = vpack.c.b16 %v1770, %v1766
        %v2119 = vpack.c.b16 %v1771, %v1767
        %v2120 = vpack.c.b16 %v1776, %v1772
        %v2121 = vpack.c.b16 %v1777, %v1773
        %v2122 = vpack.c.b16 %v1778, %v1774
        %v2123 = vpack.c.b16 %v1779, %v1775
        %v2124 = vpack.c.b16 %v1784, %v1780
        %v2125 = vpack.c.b16 %v1785, %v1781
        %v2126 = vpack.c.b16 %v1786, %v1782
        %v2127 = vpack.c.b16 %v1787, %v1783
        %v2128 = vpack.c.b16 %v1792, %v1788
        %v2129 = vpack.c.b16 %v1793, %v1789
        %v2130 = vpack.c.b16 %v1794, %v1790
        %v2131 = vpack.c.b16 %v1795, %v1791
        %v2132 = vpack.c.b16 %v1800, %v1796
        %v2133 = vpack.c.b16 %v1801, %v1797
        %v2134 = vpack.c.b16 %v1802, %v1798
        %v2135 = vpack.c.b16 %v1803, %v1799
        %v2136 = vpack.c.b16 %v1808, %v1804
        %v2137 = vpack.c.b16 %v1809, %v1805
        %v2138 = vpack.c.b16 %v1810, %v1806
        %v2139 = vpack.c.b16 %v1811, %v1807
        %v2140 = vpack.c.b16 %v1816, %v1812
        %v2141 = vpack.c.b16 %v1817, %v1813
        %v2142 = vpack.c.b16 %v1818, %v1814
        %v2143 = vpack.c.b16 %v1819, %v1815
        %v2144 = vpack.c.b16 %v1824, %v1820
        %v2145 = vpack.c.b16 %v1825, %v1821
        %v2146 = vpack.c.b16 %v1826, %v1822
        %v2147 = vpack.c.b16 %v1827, %v1823
        %v2148 = vpack.c.b16 %v1832, %v1828
        %v2149 = vpack.c.b16 %v1833, %v1829
        %v2150 = vpack.c.b16 %v1834, %v1830
        %v2151 = vpack.c.b16 %v1835, %v1831
        %v2152 = vpack.c.b16 %v1840, %v1836
        %v2153 = vpack.c.b16 %v1841, %v1837
        %v2154 = vpack.c.b16 %v1842, %v1838
        %v2155 = vpack.c.b16 %v1843, %v1839
        %v2156 = vpack.c.b16 %v1848, %v1844
        %v2157 = vpack.c.b16 %v1849, %v1845
        %v2158 = vpack.c.b16 %v1850, %v1846
        %v2159 = vpack.c.b16 %v1851, %v1847
        %v2160 = vpack.c.b16 %v1856, %v1852
        %v2161 = vpack.c.b16 %v1857, %v1853
        %v2162 = vpack.c.b16 %v1858, %v1854
        %v2163 = vpack.c.b16 %v1859, %v1855
        %v2164 = vpack.c.b16 %v1864, %v1860
        %v2165 = vpack.c.b16 %v1865, %v1861
        %v2166 = vpack.c.b16 %v1866, %v1862
        %v2167 = vpack.c.b16 %v1867, %v1863
        %v2168 = vpack.c.b16 %v1872, %v1868
        %v2169 = vpack.c.b16 %v1873, %v1869
        %v2170 = vpack.c.b16 %v1874, %v1870
        %v2171 = vpack.c.b16 %v1875, %v1871
        %v2172 = vpack.c.b16 %v1880, %v1876
        %v2173 = vpack.c.b16 %v1881, %v1877
        %v2174 = vpack.c.b16 %v1882, %v1878
        %v2175 = vpack.c.b16 %v1883, %v1879
        %v2176 = vpack.c.b16 %v1888, %v1884
        %v2177 = vpack.c.b16 %v1889, %v1885
        %v2178 = vpack.c.b16 %v1890, %v1886
        %v2179 = vpack.c.b16 %v1891, %v1887
        %v2180 = vpack.c.b16 %v1896, %v1892
        %v2181 = vpack.c.b16 %v1897, %v1893
        %v2182 = vpack.c.b16 %v1898, %v1894
        %v2183 = vpack.c.b16 %v1899, %v1895
        %v2184 = vpack.c.b16 %v1904, %v1900
        %v2185 = vpack.c.b16 %v1905, %v1901
        %v2186 = vpack.c.b16 %v1906, %v1902
        %v2187 = vpack.c.b16 %v1907, %v1903
        %v2188 = vpack.c.b16 %v1912, %v1908
        %v2189 = vpack.c.b16 %v1913, %v1909
        %v2190 = vpack.c.b16 %v1914, %v1910
        %v2191 = vpack.c.b16 %v1915, %v1911
        %v2192 = vpack.c.b16 %v1920, %v1916
        %v2193 = vpack.c.b16 %v1921, %v1917
        %v2194 = vpack.c.b16 %v1922, %v1918
        %v2195 = vpack.c.b16 %v1923, %v1919
        %v2196 = vpack.c.b16 %v1928, %v1924
        %v2197 = vpack.c.b16 %v1929, %v1925
        %v2198 = vpack.c.b16 %v1930, %v1926
        %v2199 = vpack.c.b16 %v1931, %v1927
        %v2200 = vpack.c.b16 %v1936, %v1932
        %v2201 = vpack.c.b16 %v1937, %v1933
        %v2202 = vpack.c.b16 %v1938, %v1934
        %v2203 = vpack.c.b16 %v1939, %v1935
        %v2204 = vpack.c.b16 %v1944, %v1940
        %v2205 = vpack.c.b16 %v1945, %v1941
        %v2206 = vpack.c.b16 %v1946, %v1942
        %v2207 = vpack.c.b16 %v1947, %v1943
        %v2208 = vpack.c.b16 %v1952, %v1948
        %v2209 = vpack.c.b16 %v1953, %v1949
        %v2210 = vpack.c.b16 %v1954, %v1950
        %v2211 = vpack.c.b16 %v1955, %v1951
        %2468 = vmatprep.subr.bf16.mxu0 %v1985
        %2469 = vmatpush1.bf16.msra.mxu0 %v1984
        %2470 = vmatprep.subr.bf16.mxu0 %v1981
        %2471 = vmatpush1.bf16.msra.mxu0 %v1980
        %2472 = vmatprep.subr.bf16.mxu0 %v1977
        %2473 = vmatpush1.bf16.msra.mxu0 %v1976
        %2474 = vmatprep.subr.bf16.mxu0 %v1973
        %2475 = vmatpush1.bf16.msra.mxu0 %v1972
        %2476 = vmatprep.subr.bf16.mxu0 %v1969
        %2477 = vmatpush1.bf16.msra.mxu0 %v1968
        %2478 = vmatprep.subr.bf16.mxu0 %v1965
        %2479 = vmatpush1.bf16.msra.mxu0 %v1964
        %2480 = vmatprep.subr.bf16.mxu0 %v1961
        %2481 = vmatpush1.bf16.msra.mxu0 %v1960
        %2482 = vmatprep.subr.bf16.mxu0 %v1957
        %2483 = vmatpush1.bf16.msra.mxu0 %v1956
        %2484 = vmatprep.subr.bf16.mxu0 %v2017
        %2485 = vmatpush2.bf16.msra.mxu0 %v2016
        %2486 = vmatprep.subr.bf16.mxu0 %v2013
        %2487 = vmatpush2.bf16.msra.mxu0 %v2012
        %2488 = vmatprep.subr.bf16.mxu0 %v2009
        %2489 = vmatpush2.bf16.msra.mxu0 %v2008
        %2490 = vmatprep.subr.bf16.mxu0 %v2005
        %2491 = vmatpush2.bf16.msra.mxu0 %v2004
        %2492 = vmatprep.subr.bf16.mxu0 %v2001
        %2493 = vmatpush2.bf16.msra.mxu0 %v2000
        %2494 = vmatprep.subr.bf16.mxu0 %v1997
        %2495 = vmatpush2.bf16.msra.mxu0 %v1996
        %2496 = vmatprep.subr.bf16.mxu0 %v1993
        %2497 = vmatpush2.bf16.msra.mxu0 %v1992
        %2498 = vmatprep.subr.bf16.mxu0 %v1989
        %2499 = vmatpush2.bf16.msra.mxu0 %v1988
        %2500 = vmatprep.mubr.bf16.mxu0 %v1061
        %2501 = vmatmul.mubr.bf16.gmra.mxu0 %v1060
        %v2502 = vpop.f32.mrf.mxu0
        %v2503 = vadd.f32 0.0, %v2502
        %v2504 = vpop.f32.mrf.mxu0
        %v2505 = vadd.f32 0.0, %v2504
        %v2506 = vpop.f32.mrf.mxu0
        %v2507 = vadd.f32 0.0, %v2506
        %v2508 = vpop.f32.mrf.mxu0
        %v2509 = vadd.f32 0.0, %v2508
        %2510 = vmatprep.mubr.bf16.mxu0 %v1069
        %2511 = vmatmul.mubr.bf16.gmra.mxu0 %v1068
        %v2512 = vpop.f32.mrf.mxu0
        %v2513 = vadd.f32 0.0, %v2512
        %v2514 = vpop.f32.mrf.mxu0
        %v2515 = vadd.f32 0.0, %v2514
        %v2516 = vpop.f32.mrf.mxu0
        %v2517 = vadd.f32 0.0, %v2516
        %v2518 = vpop.f32.mrf.mxu0
        %v2519 = vadd.f32 0.0, %v2518
        %2520 = vmatprep.mubr.bf16.mxu0 %v1077
        %2521 = vmatmul.mubr.bf16.gmra.mxu0 %v1076
        %v2522 = vpop.f32.mrf.mxu0
        %v2523 = vadd.f32 0.0, %v2522
        %v2524 = vpop.f32.mrf.mxu0
        %v2525 = vadd.f32 0.0, %v2524
        %v2526 = vpop.f32.mrf.mxu0
        %v2527 = vadd.f32 0.0, %v2526
        %v2528 = vpop.f32.mrf.mxu0
        %v2529 = vadd.f32 0.0, %v2528
        %2530 = vmatprep.mubr.bf16.mxu0 %v1085
        %2531 = vmatmul.mubr.bf16.gmra.mxu0 %v1084
        %v2532 = vpop.f32.mrf.mxu0
        %v2533 = vadd.f32 0.0, %v2532
        %v2534 = vpop.f32.mrf.mxu0
        %v2535 = vadd.f32 0.0, %v2534
        %v2536 = vpop.f32.mrf.mxu0
        %v2537 = vadd.f32 0.0, %v2536
        %v2538 = vpop.f32.mrf.mxu0
        %v2539 = vadd.f32 0.0, %v2538
        %2540 = vmatprep.mubr.bf16.mxu0 %v1093
        %2541 = vmatmul.mubr.bf16.gmra.mxu0 %v1092
        %v2542 = vpop.f32.mrf.mxu0
        %v2543 = vadd.f32 0.0, %v2542
        %v2544 = vpop.f32.mrf.mxu0
        %v2545 = vadd.f32 0.0, %v2544
        %v2546 = vpop.f32.mrf.mxu0
        %v2547 = vadd.f32 0.0, %v2546
        %v2548 = vpop.f32.mrf.mxu0
        %v2549 = vadd.f32 0.0, %v2548
        %2550 = vmatprep.mubr.bf16.mxu0 %v1101
        %2551 = vmatmul.mubr.bf16.gmra.mxu0 %v1100
        %v2552 = vpop.f32.mrf.mxu0
        %v2553 = vadd.f32 0.0, %v2552
        %v2554 = vpop.f32.mrf.mxu0
        %v2555 = vadd.f32 0.0, %v2554
        %v2556 = vpop.f32.mrf.mxu0
        %v2557 = vadd.f32 0.0, %v2556
        %v2558 = vpop.f32.mrf.mxu0
        %v2559 = vadd.f32 0.0, %v2558
        %2560 = vmatprep.mubr.bf16.mxu0 %v1109
        %2561 = vmatmul.mubr.bf16.gmra.mxu0 %v1108
        %v2562 = vpop.f32.mrf.mxu0
        %v2563 = vadd.f32 0.0, %v2562
        %v2564 = vpop.f32.mrf.mxu0
        %v2565 = vadd.f32 0.0, %v2564
        %v2566 = vpop.f32.mrf.mxu0
        %v2567 = vadd.f32 0.0, %v2566
        %v2568 = vpop.f32.mrf.mxu0
        %v2569 = vadd.f32 0.0, %v2568
        %2570 = vmatprep.mubr.bf16.mxu0 %v1117
        %2571 = vmatmul.mubr.bf16.gmra.mxu0 %v1116
        %v2572 = vpop.f32.mrf.mxu0
        %v2573 = vadd.f32 0.0, %v2572
        %v2574 = vpop.f32.mrf.mxu0
        %v2575 = vadd.f32 0.0, %v2574
        %v2576 = vpop.f32.mrf.mxu0
        %v2577 = vadd.f32 0.0, %v2576
        %v2578 = vpop.f32.mrf.mxu0
        %v2579 = vadd.f32 0.0, %v2578
        %2580 = vdwg.mxu0
        %2581 = vmatprep.subr.bf16.mxu0 %v2049
        %2582 = vmatpush1.bf16.msra.mxu0 %v2048
        %2583 = vmatprep.subr.bf16.mxu0 %v2045
        %2584 = vmatpush1.bf16.msra.mxu0 %v2044
        %2585 = vmatprep.subr.bf16.mxu0 %v2041
        %2586 = vmatpush1.bf16.msra.mxu0 %v2040
        %2587 = vmatprep.subr.bf16.mxu0 %v2037
        %2588 = vmatpush1.bf16.msra.mxu0 %v2036
        %2589 = vmatprep.subr.bf16.mxu0 %v2033
        %2590 = vmatpush1.bf16.msra.mxu0 %v2032
        %2591 = vmatprep.subr.bf16.mxu0 %v2029
        %2592 = vmatpush1.bf16.msra.mxu0 %v2028
        %2593 = vmatprep.subr.bf16.mxu0 %v2025
        %2594 = vmatpush1.bf16.msra.mxu0 %v2024
        %2595 = vmatprep.subr.bf16.mxu0 %v2021
        %2596 = vmatpush1.bf16.msra.mxu0 %v2020
        %2597 = vmatprep.subr.bf16.mxu0 %v2081
        %2598 = vmatpush2.bf16.msra.mxu0 %v2080
        %2599 = vmatprep.subr.bf16.mxu0 %v2077
        %2600 = vmatpush2.bf16.msra.mxu0 %v2076
        %2601 = vmatprep.subr.bf16.mxu0 %v2073
        %2602 = vmatpush2.bf16.msra.mxu0 %v2072
        %2603 = vmatprep.subr.bf16.mxu0 %v2069
        %2604 = vmatpush2.bf16.msra.mxu0 %v2068
        %2605 = vmatprep.subr.bf16.mxu0 %v2065
        %2606 = vmatpush2.bf16.msra.mxu0 %v2064
        %2607 = vmatprep.subr.bf16.mxu0 %v2061
        %2608 = vmatpush2.bf16.msra.mxu0 %v2060
        %2609 = vmatprep.subr.bf16.mxu0 %v2057
        %2610 = vmatpush2.bf16.msra.mxu0 %v2056
        %2611 = vmatprep.subr.bf16.mxu0 %v2053
        %2612 = vmatpush2.bf16.msra.mxu0 %v2052
        %2613 = vmatprep.mubr.bf16.mxu0 %v1063
        %2614 = vmatmul.mubr.bf16.gmra.mxu0 %v1062
        %v2615 = vpop.f32.mrf.mxu0
        %v2616 = vadd.f32 %v2503, %v2615
        %v2617 = vpop.f32.mrf.mxu0
        %v2618 = vadd.f32 %v2505, %v2617
        %v2619 = vpop.f32.mrf.mxu0
        %v2620 = vadd.f32 %v2507, %v2619
        %v2621 = vpop.f32.mrf.mxu0
        %v2622 = vadd.f32 %v2509, %v2621
        %2623 = vmatprep.mubr.bf16.mxu0 %v1071
        %2624 = vmatmul.mubr.bf16.gmra.mxu0 %v1070
        %v2625 = vpop.f32.mrf.mxu0
        %v2626 = vadd.f32 %v2513, %v2625
        %v2627 = vpop.f32.mrf.mxu0
        %v2628 = vadd.f32 %v2515, %v2627
        %v2629 = vpop.f32.mrf.mxu0
        %v2630 = vadd.f32 %v2517, %v2629
        %v2631 = vpop.f32.mrf.mxu0
        %v2632 = vadd.f32 %v2519, %v2631
        %2633 = vmatprep.mubr.bf16.mxu0 %v1079
        %2634 = vmatmul.mubr.bf16.gmra.mxu0 %v1078
        %v2635 = vpop.f32.mrf.mxu0
        %v2636 = vadd.f32 %v2523, %v2635
        %v2637 = vpop.f32.mrf.mxu0
        %v2638 = vadd.f32 %v2525, %v2637
        %v2639 = vpop.f32.mrf.mxu0
        %v2640 = vadd.f32 %v2527, %v2639
        %v2641 = vpop.f32.mrf.mxu0
        %v2642 = vadd.f32 %v2529, %v2641
        %2643 = vmatprep.mubr.bf16.mxu0 %v1087
        %2644 = vmatmul.mubr.bf16.gmra.mxu0 %v1086
        %v2645 = vpop.f32.mrf.mxu0
        %v2646 = vadd.f32 %v2533, %v2645
        %v2647 = vpop.f32.mrf.mxu0
        %v2648 = vadd.f32 %v2535, %v2647
        %v2649 = vpop.f32.mrf.mxu0
        %v2650 = vadd.f32 %v2537, %v2649
        %v2651 = vpop.f32.mrf.mxu0
        %v2652 = vadd.f32 %v2539, %v2651
        %2653 = vmatprep.mubr.bf16.mxu0 %v1095
        %2654 = vmatmul.mubr.bf16.gmra.mxu0 %v1094
        %v2655 = vpop.f32.mrf.mxu0
        %v2656 = vadd.f32 %v2543, %v2655
        %v2657 = vpop.f32.mrf.mxu0
        %v2658 = vadd.f32 %v2545, %v2657
        %v2659 = vpop.f32.mrf.mxu0
        %v2660 = vadd.f32 %v2547, %v2659
        %v2661 = vpop.f32.mrf.mxu0
        %v2662 = vadd.f32 %v2549, %v2661
        %2663 = vmatprep.mubr.bf16.mxu0 %v1103
        %2664 = vmatmul.mubr.bf16.gmra.mxu0 %v1102
        %v2665 = vpop.f32.mrf.mxu0
        %v2666 = vadd.f32 %v2553, %v2665
        %v2667 = vpop.f32.mrf.mxu0
        %v2668 = vadd.f32 %v2555, %v2667
        %v2669 = vpop.f32.mrf.mxu0
        %v2670 = vadd.f32 %v2557, %v2669
        %v2671 = vpop.f32.mrf.mxu0
        %v2672 = vadd.f32 %v2559, %v2671
        %2673 = vmatprep.mubr.bf16.mxu0 %v1111
        %2674 = vmatmul.mubr.bf16.gmra.mxu0 %v1110
        %v2675 = vpop.f32.mrf.mxu0
        %v2676 = vadd.f32 %v2563, %v2675
        %v2677 = vpop.f32.mrf.mxu0
        %v2678 = vadd.f32 %v2565, %v2677
        %v2679 = vpop.f32.mrf.mxu0
        %v2680 = vadd.f32 %v2567, %v2679
        %v2681 = vpop.f32.mrf.mxu0
        %v2682 = vadd.f32 %v2569, %v2681
        %2683 = vmatprep.mubr.bf16.mxu0 %v1119
        %2684 = vmatmul.mubr.bf16.gmra.mxu0 %v1118
        %v2685 = vpop.f32.mrf.mxu0
        %v2686 = vadd.f32 %v2573, %v2685
        %v2687 = vpop.f32.mrf.mxu0
        %v2688 = vadd.f32 %v2575, %v2687
        %v2689 = vpop.f32.mrf.mxu0
        %v2690 = vadd.f32 %v2577, %v2689
        %v2691 = vpop.f32.mrf.mxu0
        %v2692 = vadd.f32 %v2579, %v2691
        %2693 = vdwg.mxu0
        %2694 = vmatprep.subr.bf16.mxu0 %v2113
        %2695 = vmatpush1.bf16.msra.mxu0 %v2112
        %2696 = vmatprep.subr.bf16.mxu0 %v2109
        %2697 = vmatpush1.bf16.msra.mxu0 %v2108
        %2698 = vmatprep.subr.bf16.mxu0 %v2105
        %2699 = vmatpush1.bf16.msra.mxu0 %v2104
        %2700 = vmatprep.subr.bf16.mxu0 %v2101
        %2701 = vmatpush1.bf16.msra.mxu0 %v2100
        %2702 = vmatprep.subr.bf16.mxu0 %v2097
        %2703 = vmatpush1.bf16.msra.mxu0 %v2096
        %2704 = vmatprep.subr.bf16.mxu0 %v2093
        %2705 = vmatpush1.bf16.msra.mxu0 %v2092
        %2706 = vmatprep.subr.bf16.mxu0 %v2089
        %2707 = vmatpush1.bf16.msra.mxu0 %v2088
        %2708 = vmatprep.subr.bf16.mxu0 %v2085
        %2709 = vmatpush1.bf16.msra.mxu0 %v2084
        %2710 = vmatprep.subr.bf16.mxu0 %v2145
        %2711 = vmatpush2.bf16.msra.mxu0 %v2144
        %2712 = vmatprep.subr.bf16.mxu0 %v2141
        %2713 = vmatpush2.bf16.msra.mxu0 %v2140
        %2714 = vmatprep.subr.bf16.mxu0 %v2137
        %2715 = vmatpush2.bf16.msra.mxu0 %v2136
        %2716 = vmatprep.subr.bf16.mxu0 %v2133
        %2717 = vmatpush2.bf16.msra.mxu0 %v2132
        %2718 = vmatprep.subr.bf16.mxu0 %v2129
        %2719 = vmatpush2.bf16.msra.mxu0 %v2128
        %2720 = vmatprep.subr.bf16.mxu0 %v2125
        %2721 = vmatpush2.bf16.msra.mxu0 %v2124
        %2722 = vmatprep.subr.bf16.mxu0 %v2121
        %2723 = vmatpush2.bf16.msra.mxu0 %v2120
        %2724 = vmatprep.subr.bf16.mxu0 %v2117
        %2725 = vmatpush2.bf16.msra.mxu0 %v2116
        %2726 = vmatprep.mubr.bf16.mxu0 %v1065
        %2727 = vmatmul.mubr.bf16.gmra.mxu0 %v1064
        %v2728 = vpop.f32.mrf.mxu0
        %v2729 = vadd.f32 %v2616, %v2728
        %v2730 = vpop.f32.mrf.mxu0
        %v2731 = vadd.f32 %v2618, %v2730
        %v2732 = vpop.f32.mrf.mxu0
        %v2733 = vadd.f32 %v2620, %v2732
        %v2734 = vpop.f32.mrf.mxu0
        %v2735 = vadd.f32 %v2622, %v2734
        %2736 = vmatprep.mubr.bf16.mxu0 %v1073
        %2737 = vmatmul.mubr.bf16.gmra.mxu0 %v1072
        %v2738 = vpop.f32.mrf.mxu0
        %v2739 = vadd.f32 %v2626, %v2738
        %v2740 = vpop.f32.mrf.mxu0
        %v2741 = vadd.f32 %v2628, %v2740
        %v2742 = vpop.f32.mrf.mxu0
        %v2743 = vadd.f32 %v2630, %v2742
        %v2744 = vpop.f32.mrf.mxu0
        %v2745 = vadd.f32 %v2632, %v2744
        %2746 = vmatprep.mubr.bf16.mxu0 %v1081
        %2747 = vmatmul.mubr.bf16.gmra.mxu0 %v1080
        %v2748 = vpop.f32.mrf.mxu0
        %v2749 = vadd.f32 %v2636, %v2748
        %v2750 = vpop.f32.mrf.mxu0
        %v2751 = vadd.f32 %v2638, %v2750
        %v2752 = vpop.f32.mrf.mxu0
        %v2753 = vadd.f32 %v2640, %v2752
        %v2754 = vpop.f32.mrf.mxu0
        %v2755 = vadd.f32 %v2642, %v2754
        %2756 = vmatprep.mubr.bf16.mxu0 %v1089
        %2757 = vmatmul.mubr.bf16.gmra.mxu0 %v1088
        %v2758 = vpop.f32.mrf.mxu0
        %v2759 = vadd.f32 %v2646, %v2758
        %v2760 = vpop.f32.mrf.mxu0
        %v2761 = vadd.f32 %v2648, %v2760
        %v2762 = vpop.f32.mrf.mxu0
        %v2763 = vadd.f32 %v2650, %v2762
        %v2764 = vpop.f32.mrf.mxu0
        %v2765 = vadd.f32 %v2652, %v2764
        %2766 = vmatprep.mubr.bf16.mxu0 %v1097
        %2767 = vmatmul.mubr.bf16.gmra.mxu0 %v1096
        %v2768 = vpop.f32.mrf.mxu0
        %v2769 = vadd.f32 %v2656, %v2768
        %v2770 = vpop.f32.mrf.mxu0
        %v2771 = vadd.f32 %v2658, %v2770
        %v2772 = vpop.f32.mrf.mxu0
        %v2773 = vadd.f32 %v2660, %v2772
        %v2774 = vpop.f32.mrf.mxu0
        %v2775 = vadd.f32 %v2662, %v2774
        %2776 = vmatprep.mubr.bf16.mxu0 %v1105
        %2777 = vmatmul.mubr.bf16.gmra.mxu0 %v1104
        %v2778 = vpop.f32.mrf.mxu0
        %v2779 = vadd.f32 %v2666, %v2778
        %v2780 = vpop.f32.mrf.mxu0
        %v2781 = vadd.f32 %v2668, %v2780
        %v2782 = vpop.f32.mrf.mxu0
        %v2783 = vadd.f32 %v2670, %v2782
        %v2784 = vpop.f32.mrf.mxu0
        %v2785 = vadd.f32 %v2672, %v2784
        %2786 = vmatprep.mubr.bf16.mxu0 %v1113
        %2787 = vmatmul.mubr.bf16.gmra.mxu0 %v1112
        %v2788 = vpop.f32.mrf.mxu0
        %v2789 = vadd.f32 %v2676, %v2788
        %v2790 = vpop.f32.mrf.mxu0
        %v2791 = vadd.f32 %v2678, %v2790
        %v2792 = vpop.f32.mrf.mxu0
        %v2793 = vadd.f32 %v2680, %v2792
        %v2794 = vpop.f32.mrf.mxu0
        %v2795 = vadd.f32 %v2682, %v2794
        %2796 = vmatprep.mubr.bf16.mxu0 %v1121
        %2797 = vmatmul.mubr.bf16.gmra.mxu0 %v1120
        %v2798 = vpop.f32.mrf.mxu0
        %v2799 = vadd.f32 %v2686, %v2798
        %v2800 = vpop.f32.mrf.mxu0
        %v2801 = vadd.f32 %v2688, %v2800
        %v2802 = vpop.f32.mrf.mxu0
        %v2803 = vadd.f32 %v2690, %v2802
        %v2804 = vpop.f32.mrf.mxu0
        %v2805 = vadd.f32 %v2692, %v2804
        %2806 = vdwg.mxu0
        %2807 = vmatprep.subr.bf16.mxu0 %v2177
        %2808 = vmatpush1.bf16.msra.mxu0 %v2176
        %2809 = vmatprep.subr.bf16.mxu0 %v2173
        %2810 = vmatpush1.bf16.msra.mxu0 %v2172
        %2811 = vmatprep.subr.bf16.mxu0 %v2169
        %2812 = vmatpush1.bf16.msra.mxu0 %v2168
        %2813 = vmatprep.subr.bf16.mxu0 %v2165
        %2814 = vmatpush1.bf16.msra.mxu0 %v2164
        %2815 = vmatprep.subr.bf16.mxu0 %v2161
        %2816 = vmatpush1.bf16.msra.mxu0 %v2160
        %2817 = vmatprep.subr.bf16.mxu0 %v2157
        %2818 = vmatpush1.bf16.msra.mxu0 %v2156
        %2819 = vmatprep.subr.bf16.mxu0 %v2153
        %2820 = vmatpush1.bf16.msra.mxu0 %v2152
        %2821 = vmatprep.subr.bf16.mxu0 %v2149
        %2822 = vmatpush1.bf16.msra.mxu0 %v2148
        %2823 = vmatprep.subr.bf16.mxu0 %v2209
        %2824 = vmatpush2.bf16.msra.mxu0 %v2208
        %2825 = vmatprep.subr.bf16.mxu0 %v2205
        %2826 = vmatpush2.bf16.msra.mxu0 %v2204
        %2827 = vmatprep.subr.bf16.mxu0 %v2201
        %2828 = vmatpush2.bf16.msra.mxu0 %v2200
        %2829 = vmatprep.subr.bf16.mxu0 %v2197
        %2830 = vmatpush2.bf16.msra.mxu0 %v2196
        %2831 = vmatprep.subr.bf16.mxu0 %v2193
        %2832 = vmatpush2.bf16.msra.mxu0 %v2192
        %2833 = vmatprep.subr.bf16.mxu0 %v2189
        %2834 = vmatpush2.bf16.msra.mxu0 %v2188
        %2835 = vmatprep.subr.bf16.mxu0 %v2185
        %2836 = vmatpush2.bf16.msra.mxu0 %v2184
        %2837 = vmatprep.subr.bf16.mxu0 %v2181
        %2838 = vmatpush2.bf16.msra.mxu0 %v2180
        %2839 = vmatprep.mubr.bf16.mxu0 %v1067
        %2840 = vmatmul.mubr.bf16.gmra.mxu0 %v1066
        %v2841 = vpop.f32.mrf.mxu0
        %v2842 = vadd.f32 %v2729, %v2841
        %v2843 = vpop.f32.mrf.mxu0
        %v2844 = vadd.f32 %v2731, %v2843
        %v2845 = vpop.f32.mrf.mxu0
        %v2846 = vadd.f32 %v2733, %v2845
        %v2847 = vpop.f32.mrf.mxu0
        %v2848 = vadd.f32 %v2735, %v2847
        %2849 = vmatprep.mubr.bf16.mxu0 %v1075
        %2850 = vmatmul.mubr.bf16.gmra.mxu0 %v1074
        %v2851 = vpop.f32.mrf.mxu0
        %v2852 = vadd.f32 %v2739, %v2851
        %v2853 = vpop.f32.mrf.mxu0
        %v2854 = vadd.f32 %v2741, %v2853
        %v2855 = vpop.f32.mrf.mxu0
        %v2856 = vadd.f32 %v2743, %v2855
        %v2857 = vpop.f32.mrf.mxu0
        %v2858 = vadd.f32 %v2745, %v2857
        %2859 = vmatprep.mubr.bf16.mxu0 %v1083
        %2860 = vmatmul.mubr.bf16.gmra.mxu0 %v1082
        %v2861 = vpop.f32.mrf.mxu0
        %v2862 = vadd.f32 %v2749, %v2861
        %v2863 = vpop.f32.mrf.mxu0
        %v2864 = vadd.f32 %v2751, %v2863
        %v2865 = vpop.f32.mrf.mxu0
        %v2866 = vadd.f32 %v2753, %v2865
        %v2867 = vpop.f32.mrf.mxu0
        %v2868 = vadd.f32 %v2755, %v2867
        %2869 = vmatprep.mubr.bf16.mxu0 %v1091
        %2870 = vmatmul.mubr.bf16.gmra.mxu0 %v1090
        %v2871 = vpop.f32.mrf.mxu0
        %v2872 = vadd.f32 %v2759, %v2871
        %v2873 = vpop.f32.mrf.mxu0
        %v2874 = vadd.f32 %v2761, %v2873
        %v2875 = vpop.f32.mrf.mxu0
        %v2876 = vadd.f32 %v2763, %v2875
        %v2877 = vpop.f32.mrf.mxu0
        %v2878 = vadd.f32 %v2765, %v2877
        %2879 = vmatprep.mubr.bf16.mxu0 %v1099
        %2880 = vmatmul.mubr.bf16.gmra.mxu0 %v1098
        %v2881 = vpop.f32.mrf.mxu0
        %v2882 = vadd.f32 %v2769, %v2881
        %v2883 = vpop.f32.mrf.mxu0
        %v2884 = vadd.f32 %v2771, %v2883
        %v2885 = vpop.f32.mrf.mxu0
        %v2886 = vadd.f32 %v2773, %v2885
        %v2887 = vpop.f32.mrf.mxu0
        %v2888 = vadd.f32 %v2775, %v2887
        %2889 = vmatprep.mubr.bf16.mxu0 %v1107
        %2890 = vmatmul.mubr.bf16.gmra.mxu0 %v1106
        %v2891 = vpop.f32.mrf.mxu0
        %v2892 = vadd.f32 %v2779, %v2891
        %v2893 = vpop.f32.mrf.mxu0
        %v2894 = vadd.f32 %v2781, %v2893
        %v2895 = vpop.f32.mrf.mxu0
        %v2896 = vadd.f32 %v2783, %v2895
        %v2897 = vpop.f32.mrf.mxu0
        %v2898 = vadd.f32 %v2785, %v2897
        %2899 = vmatprep.mubr.bf16.mxu0 %v1115
        %2900 = vmatmul.mubr.bf16.gmra.mxu0 %v1114
        %v2901 = vpop.f32.mrf.mxu0
        %v2902 = vadd.f32 %v2789, %v2901
        %v2903 = vpop.f32.mrf.mxu0
        %v2904 = vadd.f32 %v2791, %v2903
        %v2905 = vpop.f32.mrf.mxu0
        %v2906 = vadd.f32 %v2793, %v2905
        %v2907 = vpop.f32.mrf.mxu0
        %v2908 = vadd.f32 %v2795, %v2907
        %2909 = vmatprep.mubr.bf16.mxu0 %v1123
        %2910 = vmatmul.mubr.bf16.gmra.mxu0 %v1122
        %v2911 = vpop.f32.mrf.mxu0
        %v2912 = vadd.f32 %v2799, %v2911
        %v2913 = vpop.f32.mrf.mxu0
        %v2914 = vadd.f32 %v2801, %v2913
        %v2915 = vpop.f32.mrf.mxu0
        %v2916 = vadd.f32 %v2803, %v2915
        %v2917 = vpop.f32.mrf.mxu0
        %v2918 = vadd.f32 %v2805, %v2917
        %2919 = vdwg.mxu0
        %2920 = vmatprep.subr.bf16.mxu0 %v1987
        %2921 = vmatpush1.bf16.msra.mxu0 %v1986
        %2922 = vmatprep.subr.bf16.mxu0 %v1983
        %2923 = vmatpush1.bf16.msra.mxu0 %v1982
        %2924 = vmatprep.subr.bf16.mxu0 %v1979
        %2925 = vmatpush1.bf16.msra.mxu0 %v1978
        %2926 = vmatprep.subr.bf16.mxu0 %v1975
        %2927 = vmatpush1.bf16.msra.mxu0 %v1974
        %2928 = vmatprep.subr.bf16.mxu0 %v1971
        %2929 = vmatpush1.bf16.msra.mxu0 %v1970
        %2930 = vmatprep.subr.bf16.mxu0 %v1967
        %2931 = vmatpush1.bf16.msra.mxu0 %v1966
        %2932 = vmatprep.subr.bf16.mxu0 %v1963
        %2933 = vmatpush1.bf16.msra.mxu0 %v1962
        %2934 = vmatprep.subr.bf16.mxu0 %v1959
        %2935 = vmatpush1.bf16.msra.mxu0 %v1958
        %2936 = vmatprep.subr.bf16.mxu0 %v2019
        %2937 = vmatpush2.bf16.msra.mxu0 %v2018
        %2938 = vmatprep.subr.bf16.mxu0 %v2015
        %2939 = vmatpush2.bf16.msra.mxu0 %v2014
        %2940 = vmatprep.subr.bf16.mxu0 %v2011
        %2941 = vmatpush2.bf16.msra.mxu0 %v2010
        %2942 = vmatprep.subr.bf16.mxu0 %v2007
        %2943 = vmatpush2.bf16.msra.mxu0 %v2006
        %2944 = vmatprep.subr.bf16.mxu0 %v2003
        %2945 = vmatpush2.bf16.msra.mxu0 %v2002
        %2946 = vmatprep.subr.bf16.mxu0 %v1999
        %2947 = vmatpush2.bf16.msra.mxu0 %v1998
        %2948 = vmatprep.subr.bf16.mxu0 %v1995
        %2949 = vmatpush2.bf16.msra.mxu0 %v1994
        %2950 = vmatprep.subr.bf16.mxu0 %v1991
        %2951 = vmatpush2.bf16.msra.mxu0 %v1990
        %2952 = vmatprep.mubr.bf16.mxu0 %v1061
        %2953 = vmatmul.mubr.bf16.gmra.mxu0 %v1060
        %v2954 = vpop.f32.mrf.mxu0
        %v2955 = vadd.f32 0.0, %v2954
        %v2956 = vpop.f32.mrf.mxu0
        %v2957 = vadd.f32 0.0, %v2956
        %v2958 = vpop.f32.mrf.mxu0
        %v2959 = vadd.f32 0.0, %v2958
        %v2960 = vpop.f32.mrf.mxu0
        %v2961 = vadd.f32 0.0, %v2960
        %2962 = vmatprep.mubr.bf16.mxu0 %v1069
        %2963 = vmatmul.mubr.bf16.gmra.mxu0 %v1068
        %v2964 = vpop.f32.mrf.mxu0
        %v2965 = vadd.f32 0.0, %v2964
        %v2966 = vpop.f32.mrf.mxu0
        %v2967 = vadd.f32 0.0, %v2966
        %v2968 = vpop.f32.mrf.mxu0
        %v2969 = vadd.f32 0.0, %v2968
        %v2970 = vpop.f32.mrf.mxu0
        %v2971 = vadd.f32 0.0, %v2970
        %2972 = vmatprep.mubr.bf16.mxu0 %v1077
        %2973 = vmatmul.mubr.bf16.gmra.mxu0 %v1076
        %v2974 = vpop.f32.mrf.mxu0
        %v2975 = vadd.f32 0.0, %v2974
        %v2976 = vpop.f32.mrf.mxu0
        %v2977 = vadd.f32 0.0, %v2976
        %v2978 = vpop.f32.mrf.mxu0
        %v2979 = vadd.f32 0.0, %v2978
        %v2980 = vpop.f32.mrf.mxu0
        %v2981 = vadd.f32 0.0, %v2980
        %2982 = vmatprep.mubr.bf16.mxu0 %v1085
        %2983 = vmatmul.mubr.bf16.gmra.mxu0 %v1084
        %v2984 = vpop.f32.mrf.mxu0
        %v2985 = vadd.f32 0.0, %v2984
        %v2986 = vpop.f32.mrf.mxu0
        %v2987 = vadd.f32 0.0, %v2986
        %v2988 = vpop.f32.mrf.mxu0
        %v2989 = vadd.f32 0.0, %v2988
        %v2990 = vpop.f32.mrf.mxu0
        %v2991 = vadd.f32 0.0, %v2990
        %2992 = vmatprep.mubr.bf16.mxu0 %v1093
        %2993 = vmatmul.mubr.bf16.gmra.mxu0 %v1092
        %v2994 = vpop.f32.mrf.mxu0
        %v2995 = vadd.f32 0.0, %v2994
        %v2996 = vpop.f32.mrf.mxu0
        %v2997 = vadd.f32 0.0, %v2996
        %v2998 = vpop.f32.mrf.mxu0
        %v2999 = vadd.f32 0.0, %v2998
        %v3000 = vpop.f32.mrf.mxu0
        %v3001 = vadd.f32 0.0, %v3000
        %3002 = vmatprep.mubr.bf16.mxu0 %v1101
        %3003 = vmatmul.mubr.bf16.gmra.mxu0 %v1100
        %v3004 = vpop.f32.mrf.mxu0
        %v3005 = vadd.f32 0.0, %v3004
        %v3006 = vpop.f32.mrf.mxu0
        %v3007 = vadd.f32 0.0, %v3006
        %v3008 = vpop.f32.mrf.mxu0
        %v3009 = vadd.f32 0.0, %v3008
        %v3010 = vpop.f32.mrf.mxu0
        %v3011 = vadd.f32 0.0, %v3010
        %3012 = vmatprep.mubr.bf16.mxu0 %v1109
        %3013 = vmatmul.mubr.bf16.gmra.mxu0 %v1108
        %v3014 = vpop.f32.mrf.mxu0
        %v3015 = vadd.f32 0.0, %v3014
        %v3016 = vpop.f32.mrf.mxu0
        %v3017 = vadd.f32 0.0, %v3016
        %v3018 = vpop.f32.mrf.mxu0
        %v3019 = vadd.f32 0.0, %v3018
        %v3020 = vpop.f32.mrf.mxu0
        %v3021 = vadd.f32 0.0, %v3020
        %3022 = vmatprep.mubr.bf16.mxu0 %v1117
        %3023 = vmatmul.mubr.bf16.gmra.mxu0 %v1116
        %v3024 = vpop.f32.mrf.mxu0
        %v3025 = vadd.f32 0.0, %v3024
        %v3026 = vpop.f32.mrf.mxu0
        %v3027 = vadd.f32 0.0, %v3026
        %v3028 = vpop.f32.mrf.mxu0
        %v3029 = vadd.f32 0.0, %v3028
        %v3030 = vpop.f32.mrf.mxu0
        %v3031 = vadd.f32 0.0, %v3030
        %3032 = vdwg.mxu0
        %3033 = vmatprep.subr.bf16.mxu0 %v2051
        %3034 = vmatpush1.bf16.msra.mxu0 %v2050
        %3035 = vmatprep.subr.bf16.mxu0 %v2047
        %3036 = vmatpush1.bf16.msra.mxu0 %v2046
        %3037 = vmatprep.subr.bf16.mxu0 %v2043
        %3038 = vmatpush1.bf16.msra.mxu0 %v2042
        %3039 = vmatprep.subr.bf16.mxu0 %v2039
        %3040 = vmatpush1.bf16.msra.mxu0 %v2038
        %3041 = vmatprep.subr.bf16.mxu0 %v2035
        %3042 = vmatpush1.bf16.msra.mxu0 %v2034
        %3043 = vmatprep.subr.bf16.mxu0 %v2031
        %3044 = vmatpush1.bf16.msra.mxu0 %v2030
        %3045 = vmatprep.subr.bf16.mxu0 %v2027
        %3046 = vmatpush1.bf16.msra.mxu0 %v2026
        %3047 = vmatprep.subr.bf16.mxu0 %v2023
        %3048 = vmatpush1.bf16.msra.mxu0 %v2022
        %3049 = vmatprep.subr.bf16.mxu0 %v2083
        %3050 = vmatpush2.bf16.msra.mxu0 %v2082
        %3051 = vmatprep.subr.bf16.mxu0 %v2079
        %3052 = vmatpush2.bf16.msra.mxu0 %v2078
        %3053 = vmatprep.subr.bf16.mxu0 %v2075
        %3054 = vmatpush2.bf16.msra.mxu0 %v2074
        %3055 = vmatprep.subr.bf16.mxu0 %v2071
        %3056 = vmatpush2.bf16.msra.mxu0 %v2070
        %3057 = vmatprep.subr.bf16.mxu0 %v2067
        %3058 = vmatpush2.bf16.msra.mxu0 %v2066
        %3059 = vmatprep.subr.bf16.mxu0 %v2063
        %3060 = vmatpush2.bf16.msra.mxu0 %v2062
        %3061 = vmatprep.subr.bf16.mxu0 %v2059
        %3062 = vmatpush2.bf16.msra.mxu0 %v2058
        %3063 = vmatprep.subr.bf16.mxu0 %v2055
        %3064 = vmatpush2.bf16.msra.mxu0 %v2054
        %3065 = vmatprep.mubr.bf16.mxu0 %v1063
        %3066 = vmatmul.mubr.bf16.gmra.mxu0 %v1062
        %v3067 = vpop.f32.mrf.mxu0
        %v3068 = vadd.f32 %v2955, %v3067
        %v3069 = vpop.f32.mrf.mxu0
        %v3070 = vadd.f32 %v2957, %v3069
        %v3071 = vpop.f32.mrf.mxu0
        %v3072 = vadd.f32 %v2959, %v3071
        %v3073 = vpop.f32.mrf.mxu0
        %v3074 = vadd.f32 %v2961, %v3073
        %3075 = vmatprep.mubr.bf16.mxu0 %v1071
        %3076 = vmatmul.mubr.bf16.gmra.mxu0 %v1070
        %v3077 = vpop.f32.mrf.mxu0
        %v3078 = vadd.f32 %v2965, %v3077
        %v3079 = vpop.f32.mrf.mxu0
        %v3080 = vadd.f32 %v2967, %v3079
        %v3081 = vpop.f32.mrf.mxu0
        %v3082 = vadd.f32 %v2969, %v3081
        %v3083 = vpop.f32.mrf.mxu0
        %v3084 = vadd.f32 %v2971, %v3083
        %3085 = vmatprep.mubr.bf16.mxu0 %v1079
        %3086 = vmatmul.mubr.bf16.gmra.mxu0 %v1078
        %v3087 = vpop.f32.mrf.mxu0
        %v3088 = vadd.f32 %v2975, %v3087
        %v3089 = vpop.f32.mrf.mxu0
        %v3090 = vadd.f32 %v2977, %v3089
        %v3091 = vpop.f32.mrf.mxu0
        %v3092 = vadd.f32 %v2979, %v3091
        %v3093 = vpop.f32.mrf.mxu0
        %v3094 = vadd.f32 %v2981, %v3093
        %3095 = vmatprep.mubr.bf16.mxu0 %v1087
        %3096 = vmatmul.mubr.bf16.gmra.mxu0 %v1086
        %v3097 = vpop.f32.mrf.mxu0
        %v3098 = vadd.f32 %v2985, %v3097
        %v3099 = vpop.f32.mrf.mxu0
        %v3100 = vadd.f32 %v2987, %v3099
        %v3101 = vpop.f32.mrf.mxu0
        %v3102 = vadd.f32 %v2989, %v3101
        %v3103 = vpop.f32.mrf.mxu0
        %v3104 = vadd.f32 %v2991, %v3103
        %3105 = vmatprep.mubr.bf16.mxu0 %v1095
        %3106 = vmatmul.mubr.bf16.gmra.mxu0 %v1094
        %v3107 = vpop.f32.mrf.mxu0
        %v3108 = vadd.f32 %v2995, %v3107
        %v3109 = vpop.f32.mrf.mxu0
        %v3110 = vadd.f32 %v2997, %v3109
        %v3111 = vpop.f32.mrf.mxu0
        %v3112 = vadd.f32 %v2999, %v3111
        %v3113 = vpop.f32.mrf.mxu0
        %v3114 = vadd.f32 %v3001, %v3113
        %3115 = vmatprep.mubr.bf16.mxu0 %v1103
        %3116 = vmatmul.mubr.bf16.gmra.mxu0 %v1102
        %v3117 = vpop.f32.mrf.mxu0
        %v3118 = vadd.f32 %v3005, %v3117
        %v3119 = vpop.f32.mrf.mxu0
        %v3120 = vadd.f32 %v3007, %v3119
        %v3121 = vpop.f32.mrf.mxu0
        %v3122 = vadd.f32 %v3009, %v3121
        %v3123 = vpop.f32.mrf.mxu0
        %v3124 = vadd.f32 %v3011, %v3123
        %3125 = vmatprep.mubr.bf16.mxu0 %v1111
        %3126 = vmatmul.mubr.bf16.gmra.mxu0 %v1110
        %v3127 = vpop.f32.mrf.mxu0
        %v3128 = vadd.f32 %v3015, %v3127
        %v3129 = vpop.f32.mrf.mxu0
        %v3130 = vadd.f32 %v3017, %v3129
        %v3131 = vpop.f32.mrf.mxu0
        %v3132 = vadd.f32 %v3019, %v3131
        %v3133 = vpop.f32.mrf.mxu0
        %v3134 = vadd.f32 %v3021, %v3133
        %3135 = vmatprep.mubr.bf16.mxu0 %v1119
        %3136 = vmatmul.mubr.bf16.gmra.mxu0 %v1118
        %v3137 = vpop.f32.mrf.mxu0
        %v3138 = vadd.f32 %v3025, %v3137
        %v3139 = vpop.f32.mrf.mxu0
        %v3140 = vadd.f32 %v3027, %v3139
        %v3141 = vpop.f32.mrf.mxu0
        %v3142 = vadd.f32 %v3029, %v3141
        %v3143 = vpop.f32.mrf.mxu0
        %v3144 = vadd.f32 %v3031, %v3143
        %3145 = vdwg.mxu0
        %3146 = vmatprep.subr.bf16.mxu0 %v2115
        %3147 = vmatpush1.bf16.msra.mxu0 %v2114
        %3148 = vmatprep.subr.bf16.mxu0 %v2111
        %3149 = vmatpush1.bf16.msra.mxu0 %v2110
        %3150 = vmatprep.subr.bf16.mxu0 %v2107
        %3151 = vmatpush1.bf16.msra.mxu0 %v2106
        %3152 = vmatprep.subr.bf16.mxu0 %v2103
        %3153 = vmatpush1.bf16.msra.mxu0 %v2102
        %3154 = vmatprep.subr.bf16.mxu0 %v2099
        %3155 = vmatpush1.bf16.msra.mxu0 %v2098
        %3156 = vmatprep.subr.bf16.mxu0 %v2095
        %3157 = vmatpush1.bf16.msra.mxu0 %v2094
        %3158 = vmatprep.subr.bf16.mxu0 %v2091
        %3159 = vmatpush1.bf16.msra.mxu0 %v2090
        %3160 = vmatprep.subr.bf16.mxu0 %v2087
        %3161 = vmatpush1.bf16.msra.mxu0 %v2086
        %3162 = vmatprep.subr.bf16.mxu0 %v2147
        %3163 = vmatpush2.bf16.msra.mxu0 %v2146
        %3164 = vmatprep.subr.bf16.mxu0 %v2143
        %3165 = vmatpush2.bf16.msra.mxu0 %v2142
        %3166 = vmatprep.subr.bf16.mxu0 %v2139
        %3167 = vmatpush2.bf16.msra.mxu0 %v2138
        %3168 = vmatprep.subr.bf16.mxu0 %v2135
        %3169 = vmatpush2.bf16.msra.mxu0 %v2134
        %3170 = vmatprep.subr.bf16.mxu0 %v2131
        %3171 = vmatpush2.bf16.msra.mxu0 %v2130
        %3172 = vmatprep.subr.bf16.mxu0 %v2127
        %3173 = vmatpush2.bf16.msra.mxu0 %v2126
        %3174 = vmatprep.subr.bf16.mxu0 %v2123
        %3175 = vmatpush2.bf16.msra.mxu0 %v2122
        %3176 = vmatprep.subr.bf16.mxu0 %v2119
        %3177 = vmatpush2.bf16.msra.mxu0 %v2118
        %3178 = vmatprep.mubr.bf16.mxu0 %v1065
        %3179 = vmatmul.mubr.bf16.gmra.mxu0 %v1064
        %v3180 = vpop.f32.mrf.mxu0
        %v3181 = vadd.f32 %v3068, %v3180
        %v3182 = vpop.f32.mrf.mxu0
        %v3183 = vadd.f32 %v3070, %v3182
        %v3184 = vpop.f32.mrf.mxu0
        %v3185 = vadd.f32 %v3072, %v3184
        %v3186 = vpop.f32.mrf.mxu0
        %v3187 = vadd.f32 %v3074, %v3186
        %3188 = vmatprep.mubr.bf16.mxu0 %v1073
        %3189 = vmatmul.mubr.bf16.gmra.mxu0 %v1072
        %v3190 = vpop.f32.mrf.mxu0
        %v3191 = vadd.f32 %v3078, %v3190
        %v3192 = vpop.f32.mrf.mxu0
        %v3193 = vadd.f32 %v3080, %v3192
        %v3194 = vpop.f32.mrf.mxu0
        %v3195 = vadd.f32 %v3082, %v3194
        %v3196 = vpop.f32.mrf.mxu0
        %v3197 = vadd.f32 %v3084, %v3196
        %3198 = vmatprep.mubr.bf16.mxu0 %v1081
        %3199 = vmatmul.mubr.bf16.gmra.mxu0 %v1080
        %v3200 = vpop.f32.mrf.mxu0
        %v3201 = vadd.f32 %v3088, %v3200
        %v3202 = vpop.f32.mrf.mxu0
        %v3203 = vadd.f32 %v3090, %v3202
        %v3204 = vpop.f32.mrf.mxu0
        %v3205 = vadd.f32 %v3092, %v3204
        %v3206 = vpop.f32.mrf.mxu0
        %v3207 = vadd.f32 %v3094, %v3206
        %3208 = vmatprep.mubr.bf16.mxu0 %v1089
        %3209 = vmatmul.mubr.bf16.gmra.mxu0 %v1088
        %v3210 = vpop.f32.mrf.mxu0
        %v3211 = vadd.f32 %v3098, %v3210
        %v3212 = vpop.f32.mrf.mxu0
        %v3213 = vadd.f32 %v3100, %v3212
        %v3214 = vpop.f32.mrf.mxu0
        %v3215 = vadd.f32 %v3102, %v3214
        %v3216 = vpop.f32.mrf.mxu0
        %v3217 = vadd.f32 %v3104, %v3216
        %3218 = vmatprep.mubr.bf16.mxu0 %v1097
        %3219 = vmatmul.mubr.bf16.gmra.mxu0 %v1096
        %v3220 = vpop.f32.mrf.mxu0
        %v3221 = vadd.f32 %v3108, %v3220
        %v3222 = vpop.f32.mrf.mxu0
        %v3223 = vadd.f32 %v3110, %v3222
        %v3224 = vpop.f32.mrf.mxu0
        %v3225 = vadd.f32 %v3112, %v3224
        %v3226 = vpop.f32.mrf.mxu0
        %v3227 = vadd.f32 %v3114, %v3226
        %3228 = vmatprep.mubr.bf16.mxu0 %v1105
        %3229 = vmatmul.mubr.bf16.gmra.mxu0 %v1104
        %v3230 = vpop.f32.mrf.mxu0
        %v3231 = vadd.f32 %v3118, %v3230
        %v3232 = vpop.f32.mrf.mxu0
        %v3233 = vadd.f32 %v3120, %v3232
        %v3234 = vpop.f32.mrf.mxu0
        %v3235 = vadd.f32 %v3122, %v3234
        %v3236 = vpop.f32.mrf.mxu0
        %v3237 = vadd.f32 %v3124, %v3236
        %3238 = vmatprep.mubr.bf16.mxu0 %v1113
        %3239 = vmatmul.mubr.bf16.gmra.mxu0 %v1112
        %v3240 = vpop.f32.mrf.mxu0
        %v3241 = vadd.f32 %v3128, %v3240
        %v3242 = vpop.f32.mrf.mxu0
        %v3243 = vadd.f32 %v3130, %v3242
        %v3244 = vpop.f32.mrf.mxu0
        %v3245 = vadd.f32 %v3132, %v3244
        %v3246 = vpop.f32.mrf.mxu0
        %v3247 = vadd.f32 %v3134, %v3246
        %3248 = vmatprep.mubr.bf16.mxu0 %v1121
        %3249 = vmatmul.mubr.bf16.gmra.mxu0 %v1120
        %v3250 = vpop.f32.mrf.mxu0
        %v3251 = vadd.f32 %v3138, %v3250
        %v3252 = vpop.f32.mrf.mxu0
        %v3253 = vadd.f32 %v3140, %v3252
        %v3254 = vpop.f32.mrf.mxu0
        %v3255 = vadd.f32 %v3142, %v3254
        %v3256 = vpop.f32.mrf.mxu0
        %v3257 = vadd.f32 %v3144, %v3256
        %3258 = vdwg.mxu0
        %3259 = vmatprep.subr.bf16.mxu0 %v2179
        %3260 = vmatpush1.bf16.msra.mxu0 %v2178
        %3261 = vmatprep.subr.bf16.mxu0 %v2175
        %3262 = vmatpush1.bf16.msra.mxu0 %v2174
        %3263 = vmatprep.subr.bf16.mxu0 %v2171
        %3264 = vmatpush1.bf16.msra.mxu0 %v2170
        %3265 = vmatprep.subr.bf16.mxu0 %v2167
        %3266 = vmatpush1.bf16.msra.mxu0 %v2166
        %3267 = vmatprep.subr.bf16.mxu0 %v2163
        %3268 = vmatpush1.bf16.msra.mxu0 %v2162
        %3269 = vmatprep.subr.bf16.mxu0 %v2159
        %3270 = vmatpush1.bf16.msra.mxu0 %v2158
        %3271 = vmatprep.subr.bf16.mxu0 %v2155
        %3272 = vmatpush1.bf16.msra.mxu0 %v2154
        %3273 = vmatprep.subr.bf16.mxu0 %v2151
        %3274 = vmatpush1.bf16.msra.mxu0 %v2150
        %3275 = vmatprep.subr.bf16.mxu0 %v2211
        %3276 = vmatpush2.bf16.msra.mxu0 %v2210
        %3277 = vmatprep.subr.bf16.mxu0 %v2207
        %3278 = vmatpush2.bf16.msra.mxu0 %v2206
        %3279 = vmatprep.subr.bf16.mxu0 %v2203
        %3280 = vmatpush2.bf16.msra.mxu0 %v2202
        %3281 = vmatprep.subr.bf16.mxu0 %v2199
        %3282 = vmatpush2.bf16.msra.mxu0 %v2198
        %3283 = vmatprep.subr.bf16.mxu0 %v2195
        %3284 = vmatpush2.bf16.msra.mxu0 %v2194
        %3285 = vmatprep.subr.bf16.mxu0 %v2191
        %3286 = vmatpush2.bf16.msra.mxu0 %v2190
        %3287 = vmatprep.subr.bf16.mxu0 %v2187
        %3288 = vmatpush2.bf16.msra.mxu0 %v2186
        %3289 = vmatprep.subr.bf16.mxu0 %v2183
        %3290 = vmatpush2.bf16.msra.mxu0 %v2182
        %3291 = vmatprep.mubr.bf16.mxu0 %v1067
        %3292 = vmatmul.mubr.bf16.gmra.mxu0 %v1066
        %v3293 = vpop.f32.mrf.mxu0
        %v3294 = vadd.f32 %v3181, %v3293
        %v3295 = vpop.f32.mrf.mxu0
        %v3296 = vadd.f32 %v3183, %v3295
        %v3297 = vpop.f32.mrf.mxu0
        %v3298 = vadd.f32 %v3185, %v3297
        %v3299 = vpop.f32.mrf.mxu0
        %v3300 = vadd.f32 %v3187, %v3299
        %3301 = vmatprep.mubr.bf16.mxu0 %v1075
        %3302 = vmatmul.mubr.bf16.gmra.mxu0 %v1074
        %v3303 = vpop.f32.mrf.mxu0
        %v3304 = vadd.f32 %v3191, %v3303
        %v3305 = vpop.f32.mrf.mxu0
        %v3306 = vadd.f32 %v3193, %v3305
        %v3307 = vpop.f32.mrf.mxu0
        %v3308 = vadd.f32 %v3195, %v3307
        %v3309 = vpop.f32.mrf.mxu0
        %v3310 = vadd.f32 %v3197, %v3309
        %3311 = vmatprep.mubr.bf16.mxu0 %v1083
        %3312 = vmatmul.mubr.bf16.gmra.mxu0 %v1082
        %v3313 = vpop.f32.mrf.mxu0
        %v3314 = vadd.f32 %v3201, %v3313
        %v3315 = vpop.f32.mrf.mxu0
        %v3316 = vadd.f32 %v3203, %v3315
        %v3317 = vpop.f32.mrf.mxu0
        %v3318 = vadd.f32 %v3205, %v3317
        %v3319 = vpop.f32.mrf.mxu0
        %v3320 = vadd.f32 %v3207, %v3319
        %3321 = vmatprep.mubr.bf16.mxu0 %v1091
        %3322 = vmatmul.mubr.bf16.gmra.mxu0 %v1090
        %v3323 = vpop.f32.mrf.mxu0
        %v3324 = vadd.f32 %v3211, %v3323
        %v3325 = vpop.f32.mrf.mxu0
        %v3326 = vadd.f32 %v3213, %v3325
        %v3327 = vpop.f32.mrf.mxu0
        %v3328 = vadd.f32 %v3215, %v3327
        %v3329 = vpop.f32.mrf.mxu0
        %v3330 = vadd.f32 %v3217, %v3329
        %3331 = vmatprep.mubr.bf16.mxu0 %v1099
        %3332 = vmatmul.mubr.bf16.gmra.mxu0 %v1098
        %v3333 = vpop.f32.mrf.mxu0
        %v3334 = vadd.f32 %v3221, %v3333
        %v3335 = vpop.f32.mrf.mxu0
        %v3336 = vadd.f32 %v3223, %v3335
        %v3337 = vpop.f32.mrf.mxu0
        %v3338 = vadd.f32 %v3225, %v3337
        %v3339 = vpop.f32.mrf.mxu0
        %v3340 = vadd.f32 %v3227, %v3339
        %3341 = vmatprep.mubr.bf16.mxu0 %v1107
        %3342 = vmatmul.mubr.bf16.gmra.mxu0 %v1106
        %v3343 = vpop.f32.mrf.mxu0
        %v3344 = vadd.f32 %v3231, %v3343
        %v3345 = vpop.f32.mrf.mxu0
        %v3346 = vadd.f32 %v3233, %v3345
        %v3347 = vpop.f32.mrf.mxu0
        %v3348 = vadd.f32 %v3235, %v3347
        %v3349 = vpop.f32.mrf.mxu0
        %v3350 = vadd.f32 %v3237, %v3349
        %3351 = vmatprep.mubr.bf16.mxu0 %v1115
        %3352 = vmatmul.mubr.bf16.gmra.mxu0 %v1114
        %v3353 = vpop.f32.mrf.mxu0
        %v3354 = vadd.f32 %v3241, %v3353
        %v3355 = vpop.f32.mrf.mxu0
        %v3356 = vadd.f32 %v3243, %v3355
        %v3357 = vpop.f32.mrf.mxu0
        %v3358 = vadd.f32 %v3245, %v3357
        %v3359 = vpop.f32.mrf.mxu0
        %v3360 = vadd.f32 %v3247, %v3359
        %3361 = vmatprep.mubr.bf16.mxu0 %v1123
        %3362 = vmatmul.mubr.bf16.gmra.mxu0 %v1122
        %v3363 = vpop.f32.mrf.mxu0
        %v3364 = vadd.f32 %v3251, %v3363
        %v3365 = vpop.f32.mrf.mxu0
        %v3366 = vadd.f32 %v3253, %v3365
        %v3367 = vpop.f32.mrf.mxu0
        %v3368 = vadd.f32 %v3255, %v3367
        %v3369 = vpop.f32.mrf.mxu0
        %v3370 = vadd.f32 %v3257, %v3369
        %3371 = vdwg.mxu0
        %v3372 = vadd.f32 %v484, %v2842
        %v3373 = vadd.f32 %v485, %v2844
        %v3374 = vadd.f32 %v486, %v3294
        %v3375 = vadd.f32 %v487, %v3296
        %v3376 = vadd.f32 %v488, %v2846
        %v3377 = vadd.f32 %v489, %v2848
        %v3378 = vadd.f32 %v490, %v3298
        %v3379 = vadd.f32 %v491, %v3300
        %v3380 = vadd.f32 %v492, %v2852
        %v3381 = vadd.f32 %v493, %v2854
        %v3382 = vadd.f32 %v494, %v3304
        %v3383 = vadd.f32 %v495, %v3306
        %v3384 = vadd.f32 %v496, %v2856
        %v3385 = vadd.f32 %v497, %v2858
        %v3386 = vadd.f32 %v498, %v3308
        %v3387 = vadd.f32 %v499, %v3310
        %v3388 = vadd.f32 %v500, %v2862
        %v3389 = vadd.f32 %v501, %v2864
        %v3390 = vadd.f32 %v502, %v3314
        %v3391 = vadd.f32 %v503, %v3316
        %v3392 = vadd.f32 %v504, %v2866
        %v3393 = vadd.f32 %v505, %v2868
        %v3394 = vadd.f32 %v506, %v3318
        %v3395 = vadd.f32 %v507, %v3320
        %v3396 = vadd.f32 %v508, %v2872
        %v3397 = vadd.f32 %v509, %v2874
        %v3398 = vadd.f32 %v510, %v3324
        %v3399 = vadd.f32 %v511, %v3326
        %v3400 = vadd.f32 %v512, %v2876
        %v3401 = vadd.f32 %v513, %v2878
        %v3402 = vadd.f32 %v514, %v3328
        %v3403 = vadd.f32 %v515, %v3330
        %v3404 = vadd.f32 %v516, %v2882
        %v3405 = vadd.f32 %v517, %v2884
        %v3406 = vadd.f32 %v518, %v3334
        %v3407 = vadd.f32 %v519, %v3336
        %v3408 = vadd.f32 %v520, %v2886
        %v3409 = vadd.f32 %v521, %v2888
        %v3410 = vadd.f32 %v522, %v3338
        %v3411 = vadd.f32 %v523, %v3340
        %v3412 = vadd.f32 %v524, %v2892
        %v3413 = vadd.f32 %v525, %v2894
        %v3414 = vadd.f32 %v526, %v3344
        %v3415 = vadd.f32 %v527, %v3346
        %v3416 = vadd.f32 %v528, %v2896
        %v3417 = vadd.f32 %v529, %v2898
        %v3418 = vadd.f32 %v530, %v3348
        %v3419 = vadd.f32 %v531, %v3350
        %v3420 = vadd.f32 %v532, %v2902
        %v3421 = vadd.f32 %v533, %v2904
        %v3422 = vadd.f32 %v534, %v3354
        %v3423 = vadd.f32 %v535, %v3356
        %v3424 = vadd.f32 %v536, %v2906
        %v3425 = vadd.f32 %v537, %v2908
        %v3426 = vadd.f32 %v538, %v3358
        %v3427 = vadd.f32 %v539, %v3360
        %v3428 = vadd.f32 %v540, %v2912
        %v3429 = vadd.f32 %v541, %v2914
        %v3430 = vadd.f32 %v542, %v3364
        %v3431 = vadd.f32 %v543, %v3366
        %v3432 = vadd.f32 %v544, %v2916
        %v3433 = vadd.f32 %v545, %v2918
        %v3434 = vadd.f32 %v546, %v3368
        %v3435 = vadd.f32 %v547, %v3370
        %3436 = vst [vmem:[#allocation2] sm:$0xff] %v3372
        %3437 = vst [vmem:[#allocation2 + $0x8] sm:$0xff] %v3373
        %3438 = vst [vmem:[#allocation2 + $0x10] sm:$0xff] %v3374
        %3439 = vst [vmem:[#allocation2 + $0x18] sm:$0xff] %v3375
        %3440 = vst [vmem:[#allocation2 + $0x20] sm:$0xff] %v3376
        %3441 = vst [vmem:[#allocation2 + $0x28] sm:$0xff] %v3377
        %3442 = vst [vmem:[#allocation2 + $0x30] sm:$0xff] %v3378
        %3443 = vst [vmem:[#allocation2 + $0x38] sm:$0xff] %v3379
        %3444 = vst [vmem:[#allocation2 + $0x40] sm:$0xff] %v3380
        %3445 = vst [vmem:[#allocation2 + $0x48] sm:$0xff] %v3381
        %3446 = vst [vmem:[#allocation2 + $0x50] sm:$0xff] %v3382
        %3447 = vst [vmem:[#allocation2 + $0x58] sm:$0xff] %v3383
        %3448 = vst [vmem:[#allocation2 + $0x60] sm:$0xff] %v3384
        %3449 = vst [vmem:[#allocation2 + $0x68] sm:$0xff] %v3385
        %3450 = vst [vmem:[#allocation2 + $0x70] sm:$0xff] %v3386
        %3451 = vst [vmem:[#allocation2 + $0x78] sm:$0xff] %v3387
        %3452 = vst [vmem:[#allocation2 + $0x80] sm:$0xff] %v3388
        %3453 = vst [vmem:[#allocation2 + $0x88] sm:$0xff] %v3389
        %3454 = vst [vmem:[#allocation2 + $0x90] sm:$0xff] %v3390
        %3455 = vst [vmem:[#allocation2 + $0x98] sm:$0xff] %v3391
        %3456 = vst [vmem:[#allocation2 + $0xa0] sm:$0xff] %v3392
        %3457 = vst [vmem:[#allocation2 + $0xa8] sm:$0xff] %v3393
        %3458 = vst [vmem:[#allocation2 + $0xb0] sm:$0xff] %v3394
        %3459 = vst [vmem:[#allocation2 + $0xb8] sm:$0xff] %v3395
        %3460 = vst [vmem:[#allocation2 + $0xc0] sm:$0xff] %v3396
        %3461 = vst [vmem:[#allocation2 + $0xc8] sm:$0xff] %v3397
        %3462 = vst [vmem:[#allocation2 + $0xd0] sm:$0xff] %v3398
        %3463 = vst [vmem:[#allocation2 + $0xd8] sm:$0xff] %v3399
        %3464 = vst [vmem:[#allocation2 + $0xe0] sm:$0xff] %v3400
        %3465 = vst [vmem:[#allocation2 + $0xe8] sm:$0xff] %v3401
        %3466 = vst [vmem:[#allocation2 + $0xf0] sm:$0xff] %v3402
        %3467 = vst [vmem:[#allocation2 + $0xf8] sm:$0xff] %v3403
        %3468 = vst [vmem:[#allocation2 + $0x100] sm:$0xff] %v3404
        %3469 = vst [vmem:[#allocation2 + $0x108] sm:$0xff] %v3405
        %3470 = vst [vmem:[#allocation2 + $0x110] sm:$0xff] %v3406
        %3471 = vst [vmem:[#allocation2 + $0x118] sm:$0xff] %v3407
        %3472 = vst [vmem:[#allocation2 + $0x120] sm:$0xff] %v3408
        %3473 = vst [vmem:[#allocation2 + $0x128] sm:$0xff] %v3409
        %3474 = vst [vmem:[#allocation2 + $0x130] sm:$0xff] %v3410
        %3475 = vst [vmem:[#allocation2 + $0x138] sm:$0xff] %v3411
        %3476 = vst [vmem:[#allocation2 + $0x140] sm:$0xff] %v3412
        %3477 = vst [vmem:[#allocation2 + $0x148] sm:$0xff] %v3413
        %3478 = vst [vmem:[#allocation2 + $0x150] sm:$0xff] %v3414
        %3479 = vst [vmem:[#allocation2 + $0x158] sm:$0xff] %v3415
        %3480 = vst [vmem:[#allocation2 + $0x160] sm:$0xff] %v3416
        %3481 = vst [vmem:[#allocation2 + $0x168] sm:$0xff] %v3417
        %3482 = vst [vmem:[#allocation2 + $0x170] sm:$0xff] %v3418
        %3483 = vst [vmem:[#allocation2 + $0x178] sm:$0xff] %v3419
        %3484 = vst [vmem:[#allocation2 + $0x180] sm:$0xff] %v3420
        %3485 = vst [vmem:[#allocation2 + $0x188] sm:$0xff] %v3421
        %3486 = vst [vmem:[#allocation2 + $0x190] sm:$0xff] %v3422
        %3487 = vst [vmem:[#allocation2 + $0x198] sm:$0xff] %v3423
        %3488 = vst [vmem:[#allocation2 + $0x1a0] sm:$0xff] %v3424
        %3489 = vst [vmem:[#allocation2 + $0x1a8] sm:$0xff] %v3425
        %3490 = vst [vmem:[#allocation2 + $0x1b0] sm:$0xff] %v3426
        %3491 = vst [vmem:[#allocation2 + $0x1b8] sm:$0xff] %v3427
        %3492 = vst [vmem:[#allocation2 + $0x1c0] sm:$0xff] %v3428
        %3493 = vst [vmem:[#allocation2 + $0x1c8] sm:$0xff] %v3429
        %3494 = vst [vmem:[#allocation2 + $0x1d0] sm:$0xff] %v3430
        %3495 = vst [vmem:[#allocation2 + $0x1d8] sm:$0xff] %v3431
        %3496 = vst [vmem:[#allocation2 + $0x1e0] sm:$0xff] %v3432
        %3497 = vst [vmem:[#allocation2 + $0x1e8] sm:$0xff] %v3433
        %3498 = vst [vmem:[#allocation2 + $0x1f0] sm:$0xff] %v3434
        %3499 = vst [vmem:[#allocation2 + $0x1f8] sm:$0xff] %v3435
        %p3500 = scmp.eq.s32.totalorder %s21, 8
        // Predicated region
        $region68: #{_rpn_device.1} parent=58 // pred_check
          %p3501 = pneg %p3500
        $region69: #{_rpn_device.1} parent=58 // pred_check_branch
          %3503 = sbr.rel (%p3501) target = $region71
        $region70: #{_rpn_device.1} parent=58 // pred_region
          %v3504 = vld [vmem:[#allocation2] sm:$0xff]
          %v3505 = vld [vmem:[#allocation2 + $0x8] sm:$0xff]
          %v3506 = vld [vmem:[#allocation2 + $0x10] sm:$0xff]
          %v3507 = vld [vmem:[#allocation2 + $0x18] sm:$0xff]
          %v3508 = vld [vmem:[#allocation2 + $0x20] sm:$0xff]
          %v3509 = vld [vmem:[#allocation2 + $0x28] sm:$0xff]
          %v3510 = vld [vmem:[#allocation2 + $0x30] sm:$0xff]
          %v3511 = vld [vmem:[#allocation2 + $0x38] sm:$0xff]
          %v3512 = vld [vmem:[#allocation2 + $0x40] sm:$0xff]
          %v3513 = vld [vmem:[#allocation2 + $0x48] sm:$0xff]
          %v3514 = vld [vmem:[#allocation2 + $0x50] sm:$0xff]
          %v3515 = vld [vmem:[#allocation2 + $0x58] sm:$0xff]
          %v3516 = vld [vmem:[#allocation2 + $0x60] sm:$0xff]
          %v3517 = vld [vmem:[#allocation2 + $0x68] sm:$0xff]
          %v3518 = vld [vmem:[#allocation2 + $0x70] sm:$0xff]
          %v3519 = vld [vmem:[#allocation2 + $0x78] sm:$0xff]
          %v3520 = vld [vmem:[#allocation2 + $0x80] sm:$0xff]
          %v3521 = vld [vmem:[#allocation2 + $0x88] sm:$0xff]
          %v3522 = vld [vmem:[#allocation2 + $0x90] sm:$0xff]
          %v3523 = vld [vmem:[#allocation2 + $0x98] sm:$0xff]
          %v3524 = vld [vmem:[#allocation2 + $0xa0] sm:$0xff]
          %v3525 = vld [vmem:[#allocation2 + $0xa8] sm:$0xff]
          %v3526 = vld [vmem:[#allocation2 + $0xb0] sm:$0xff]
          %v3527 = vld [vmem:[#allocation2 + $0xb8] sm:$0xff]
          %v3528 = vld [vmem:[#allocation2 + $0xc0] sm:$0xff]
          %v3529 = vld [vmem:[#allocation2 + $0xc8] sm:$0xff]
          %v3530 = vld [vmem:[#allocation2 + $0xd0] sm:$0xff]
          %v3531 = vld [vmem:[#allocation2 + $0xd8] sm:$0xff]
          %v3532 = vld [vmem:[#allocation2 + $0xe0] sm:$0xff]
          %v3533 = vld [vmem:[#allocation2 + $0xe8] sm:$0xff]
          %v3534 = vld [vmem:[#allocation2 + $0xf0] sm:$0xff]
          %v3535 = vld [vmem:[#allocation2 + $0xf8] sm:$0xff]
          %v3536 = vld [vmem:[#allocation2 + $0x100] sm:$0xff]
          %v3537 = vld [vmem:[#allocation2 + $0x108] sm:$0xff]
          %v3538 = vld [vmem:[#allocation2 + $0x110] sm:$0xff]
          %v3539 = vld [vmem:[#allocation2 + $0x118] sm:$0xff]
          %v3540 = vld [vmem:[#allocation2 + $0x120] sm:$0xff]
          %v3541 = vld [vmem:[#allocation2 + $0x128] sm:$0xff]
          %v3542 = vld [vmem:[#allocation2 + $0x130] sm:$0xff]
          %v3543 = vld [vmem:[#allocation2 + $0x138] sm:$0xff]
          %v3544 = vld [vmem:[#allocation2 + $0x140] sm:$0xff]
          %v3545 = vld [vmem:[#allocation2 + $0x148] sm:$0xff]
          %v3546 = vld [vmem:[#allocation2 + $0x150] sm:$0xff]
          %v3547 = vld [vmem:[#allocation2 + $0x158] sm:$0xff]
          %v3548 = vld [vmem:[#allocation2 + $0x160] sm:$0xff]
          %v3549 = vld [vmem:[#allocation2 + $0x168] sm:$0xff]
          %v3550 = vld [vmem:[#allocation2 + $0x170] sm:$0xff]
          %v3551 = vld [vmem:[#allocation2 + $0x178] sm:$0xff]
          %v3552 = vld [vmem:[#allocation2 + $0x180] sm:$0xff]
          %v3553 = vld [vmem:[#allocation2 + $0x188] sm:$0xff]
          %v3554 = vld [vmem:[#allocation2 + $0x190] sm:$0xff]
          %v3555 = vld [vmem:[#allocation2 + $0x198] sm:$0xff]
          %v3556 = vld [vmem:[#allocation2 + $0x1a0] sm:$0xff]
          %v3557 = vld [vmem:[#allocation2 + $0x1a8] sm:$0xff]
          %v3558 = vld [vmem:[#allocation2 + $0x1b0] sm:$0xff]
          %v3559 = vld [vmem:[#allocation2 + $0x1b8] sm:$0xff]
          %v3560 = vld [vmem:[#allocation2 + $0x1c0] sm:$0xff]
          %v3561 = vld [vmem:[#allocation2 + $0x1c8] sm:$0xff]
          %v3562 = vld [vmem:[#allocation2 + $0x1d0] sm:$0xff]
          %v3563 = vld [vmem:[#allocation2 + $0x1d8] sm:$0xff]
          %v3564 = vld [vmem:[#allocation2 + $0x1e0] sm:$0xff]
          %v3565 = vld [vmem:[#allocation2 + $0x1e8] sm:$0xff]
          %v3566 = vld [vmem:[#allocation2 + $0x1f0] sm:$0xff]
          %v3567 = vld [vmem:[#allocation2 + $0x1f8] sm:$0xff]
          %v3568 = vld [vmem:[%s2] sm:$0xf]
          %v3570 = vlaneseq
          %v3571 = vshrl.u32 %v3570, 7
          %v3572 = vsub.s32 0, %v3571
          %v3573 = vrot.slane %v3568, %v3572
          %v3574 = vlaneseq
          %v3575 = vshrl.u32 %v3574, 7
          %v3576 = vsub.s32 1, %v3575
          %v3577 = vrot.slane %v3568, %v3576
          %v3578 = vlaneseq
          %v3579 = vshrl.u32 %v3578, 7
          %v3580 = vsub.s32 2, %v3579
          %v3581 = vrot.slane %v3568, %v3580
          %v3582 = vlaneseq
          %v3583 = vshrl.u32 %v3582, 7
          %v3584 = vsub.s32 3, %v3583
          %v3585 = vrot.slane %v3568, %v3584
          %v3590 = vadd.f32 %v3504, %v3573
          %v3591 = vadd.f32 %v3505, %v3577
          %v3592 = vadd.f32 %v3506, %v3581
          %v3593 = vadd.f32 %v3507, %v3585
          %v3594 = vadd.f32 %v3508, %v3573
          %v3595 = vadd.f32 %v3509, %v3577
          %v3596 = vadd.f32 %v3510, %v3581
          %v3597 = vadd.f32 %v3511, %v3585
          %v3598 = vadd.f32 %v3512, %v3573
          %v3599 = vadd.f32 %v3513, %v3577
          %v3600 = vadd.f32 %v3514, %v3581
          %v3601 = vadd.f32 %v3515, %v3585
          %v3602 = vadd.f32 %v3516, %v3573
          %v3603 = vadd.f32 %v3517, %v3577
          %v3604 = vadd.f32 %v3518, %v3581
          %v3605 = vadd.f32 %v3519, %v3585
          %v3606 = vadd.f32 %v3520, %v3573
          %v3607 = vadd.f32 %v3521, %v3577
          %v3608 = vadd.f32 %v3522, %v3581
          %v3609 = vadd.f32 %v3523, %v3585
          %v3610 = vadd.f32 %v3524, %v3573
          %v3611 = vadd.f32 %v3525, %v3577
          %v3612 = vadd.f32 %v3526, %v3581
          %v3613 = vadd.f32 %v3527, %v3585
          %v3614 = vadd.f32 %v3528, %v3573
          %v3615 = vadd.f32 %v3529, %v3577
          %v3616 = vadd.f32 %v3530, %v3581
          %v3617 = vadd.f32 %v3531, %v3585
          %v3618 = vadd.f32 %v3532, %v3573
          %v3619 = vadd.f32 %v3533, %v3577
          %v3620 = vadd.f32 %v3534, %v3581
          %v3621 = vadd.f32 %v3535, %v3585
          %v3622 = vadd.f32 %v3536, %v3573
          %v3623 = vadd.f32 %v3537, %v3577
          %v3624 = vadd.f32 %v3538, %v3581
          %v3625 = vadd.f32 %v3539, %v3585
          %v3626 = vadd.f32 %v3540, %v3573
          %v3627 = vadd.f32 %v3541, %v3577
          %v3628 = vadd.f32 %v3542, %v3581
          %v3629 = vadd.f32 %v3543, %v3585
          %v3630 = vadd.f32 %v3544, %v3573
          %v3631 = vadd.f32 %v3545, %v3577
          %v3632 = vadd.f32 %v3546, %v3581
          %v3633 = vadd.f32 %v3547, %v3585
          %v3634 = vadd.f32 %v3548, %v3573
          %v3635 = vadd.f32 %v3549, %v3577
          %v3636 = vadd.f32 %v3550, %v3581
          %v3637 = vadd.f32 %v3551, %v3585
          %v3638 = vadd.f32 %v3552, %v3573
          %v3639 = vadd.f32 %v3553, %v3577
          %v3640 = vadd.f32 %v3554, %v3581
          %v3641 = vadd.f32 %v3555, %v3585
          %v3642 = vadd.f32 %v3556, %v3573
          %v3643 = vadd.f32 %v3557, %v3577
          %v3644 = vadd.f32 %v3558, %v3581
          %v3645 = vadd.f32 %v3559, %v3585
          %v3646 = vadd.f32 %v3560, %v3573
          %v3647 = vadd.f32 %v3561, %v3577
          %v3648 = vadd.f32 %v3562, %v3581
          %v3649 = vadd.f32 %v3563, %v3585
          %v3650 = vadd.f32 %v3564, %v3573
          %v3651 = vadd.f32 %v3565, %v3577
          %v3652 = vadd.f32 %v3566, %v3581
          %v3653 = vadd.f32 %v3567, %v3585
          %v3654 = vmax.f32 %v3590, 0.0
          %v3655 = vmax.f32 %v3591, 0.0
          %v3656 = vmax.f32 %v3592, 0.0
          %v3657 = vmax.f32 %v3593, 0.0
          %v3658 = vmax.f32 %v3594, 0.0
          %v3659 = vmax.f32 %v3595, 0.0
          %v3660 = vmax.f32 %v3596, 0.0
          %v3661 = vmax.f32 %v3597, 0.0
          %v3662 = vmax.f32 %v3598, 0.0
          %v3663 = vmax.f32 %v3599, 0.0
          %v3664 = vmax.f32 %v3600, 0.0
          %v3665 = vmax.f32 %v3601, 0.0
          %v3666 = vmax.f32 %v3602, 0.0
          %v3667 = vmax.f32 %v3603, 0.0
          %v3668 = vmax.f32 %v3604, 0.0
          %v3669 = vmax.f32 %v3605, 0.0
          %v3670 = vmax.f32 %v3606, 0.0
          %v3671 = vmax.f32 %v3607, 0.0
          %v3672 = vmax.f32 %v3608, 0.0
          %v3673 = vmax.f32 %v3609, 0.0
          %v3674 = vmax.f32 %v3610, 0.0
          %v3675 = vmax.f32 %v3611, 0.0
          %v3676 = vmax.f32 %v3612, 0.0
          %v3677 = vmax.f32 %v3613, 0.0
          %v3678 = vmax.f32 %v3614, 0.0
          %v3679 = vmax.f32 %v3615, 0.0
          %v3680 = vmax.f32 %v3616, 0.0
          %v3681 = vmax.f32 %v3617, 0.0
          %v3682 = vmax.f32 %v3618, 0.0
          %v3683 = vmax.f32 %v3619, 0.0
          %v3684 = vmax.f32 %v3620, 0.0
          %v3685 = vmax.f32 %v3621, 0.0
          %v3686 = vmax.f32 %v3622, 0.0
          %v3687 = vmax.f32 %v3623, 0.0
          %v3688 = vmax.f32 %v3624, 0.0
          %v3689 = vmax.f32 %v3625, 0.0
          %v3690 = vmax.f32 %v3626, 0.0
          %v3691 = vmax.f32 %v3627, 0.0
          %v3692 = vmax.f32 %v3628, 0.0
          %v3693 = vmax.f32 %v3629, 0.0
          %v3694 = vmax.f32 %v3630, 0.0
          %v3695 = vmax.f32 %v3631, 0.0
          %v3696 = vmax.f32 %v3632, 0.0
          %v3697 = vmax.f32 %v3633, 0.0
          %v3698 = vmax.f32 %v3634, 0.0
          %v3699 = vmax.f32 %v3635, 0.0
          %v3700 = vmax.f32 %v3636, 0.0
          %v3701 = vmax.f32 %v3637, 0.0
          %v3702 = vmax.f32 %v3638, 0.0
          %v3703 = vmax.f32 %v3639, 0.0
          %v3704 = vmax.f32 %v3640, 0.0
          %v3705 = vmax.f32 %v3641, 0.0
          %v3706 = vmax.f32 %v3642, 0.0
          %v3707 = vmax.f32 %v3643, 0.0
          %v3708 = vmax.f32 %v3644, 0.0
          %v3709 = vmax.f32 %v3645, 0.0
          %v3710 = vmax.f32 %v3646, 0.0
          %v3711 = vmax.f32 %v3647, 0.0
          %v3712 = vmax.f32 %v3648, 0.0
          %v3713 = vmax.f32 %v3649, 0.0
          %v3714 = vmax.f32 %v3650, 0.0
          %v3715 = vmax.f32 %v3651, 0.0
          %v3716 = vmax.f32 %v3652, 0.0
          %v3717 = vmax.f32 %v3653, 0.0
          %v3718 = vpack.c.bf16 %v3658, %v3654
          %v3719 = vpack.c.bf16 %v3659, %v3655
          %v3720 = vpack.c.bf16 %v3660, %v3656
          %v3721 = vpack.c.bf16 %v3661, %v3657
          %v3722 = vpack.c.bf16 %v3666, %v3662
          %v3723 = vpack.c.bf16 %v3667, %v3663
          %v3724 = vpack.c.bf16 %v3668, %v3664
          %v3725 = vpack.c.bf16 %v3669, %v3665
          %v3726 = vpack.c.bf16 %v3674, %v3670
          %v3727 = vpack.c.bf16 %v3675, %v3671
          %v3728 = vpack.c.bf16 %v3676, %v3672
          %v3729 = vpack.c.bf16 %v3677, %v3673
          %v3730 = vpack.c.bf16 %v3682, %v3678
          %v3731 = vpack.c.bf16 %v3683, %v3679
          %v3732 = vpack.c.bf16 %v3684, %v3680
          %v3733 = vpack.c.bf16 %v3685, %v3681
          %v3734 = vpack.c.bf16 %v3690, %v3686
          %v3735 = vpack.c.bf16 %v3691, %v3687
          %v3736 = vpack.c.bf16 %v3692, %v3688
          %v3737 = vpack.c.bf16 %v3693, %v3689
          %v3738 = vpack.c.bf16 %v3698, %v3694
          %v3739 = vpack.c.bf16 %v3699, %v3695
          %v3740 = vpack.c.bf16 %v3700, %v3696
          %v3741 = vpack.c.bf16 %v3701, %v3697
          %v3742 = vpack.c.bf16 %v3706, %v3702
          %v3743 = vpack.c.bf16 %v3707, %v3703
          %v3744 = vpack.c.bf16 %v3708, %v3704
          %v3745 = vpack.c.bf16 %v3709, %v3705
          %v3746 = vpack.c.bf16 %v3714, %v3710
          %v3747 = vpack.c.bf16 %v3715, %v3711
          %v3748 = vpack.c.bf16 %v3716, %v3712
          %v3749 = vpack.c.bf16 %v3717, %v3713
          %v3750 = vld [vmem:[%s3] sm:$0xff]
          %v3751 = vld [vmem:[%s3 + $0x8] sm:$0xff]
          %v3752 = vld [vmem:[%s3 + $0x10] sm:$0xff]
          %v3753 = vld [vmem:[%s3 + $0x18] sm:$0xff]
          %v3754 = vld [vmem:[%s3 + $0x20] sm:$0xff]
          %v3755 = vld [vmem:[%s3 + $0x28] sm:$0xff]
          %v3756 = vld [vmem:[%s3 + $0x30] sm:$0xff]
          %v3757 = vld [vmem:[%s3 + $0x38] sm:$0xff]
          %v3758 = vld [vmem:[%s3 + $0x40] sm:$0xff]
          %v3759 = vld [vmem:[%s3 + $0x48] sm:$0xff]
          %v3760 = vld [vmem:[%s3 + $0x50] sm:$0xff]
          %v3761 = vld [vmem:[%s3 + $0x58] sm:$0xff]
          %v3762 = vld [vmem:[%s3 + $0x60] sm:$0xff]
          %v3763 = vld [vmem:[%s3 + $0x68] sm:$0xff]
          %v3764 = vld [vmem:[%s3 + $0x70] sm:$0xff]
          %v3765 = vld [vmem:[%s3 + $0x78] sm:$0xff]
          %v3766 = vld [vmem:[%s3 + $0x80] sm:$0xff]
          %v3767 = vld [vmem:[%s3 + $0x88] sm:$0xff]
          %v3768 = vld [vmem:[%s3 + $0x90] sm:$0xff]
          %v3769 = vld [vmem:[%s3 + $0x98] sm:$0xff]
          %v3770 = vld [vmem:[%s3 + $0xa0] sm:$0xff]
          %v3771 = vld [vmem:[%s3 + $0xa8] sm:$0xff]
          %v3772 = vld [vmem:[%s3 + $0xb0] sm:$0xff]
          %v3773 = vld [vmem:[%s3 + $0xb8] sm:$0xff]
          %v3774 = vld [vmem:[%s3 + $0xc0] sm:$0xff]
          %v3775 = vld [vmem:[%s3 + $0xc8] sm:$0xff]
          %v3776 = vld [vmem:[%s3 + $0xd0] sm:$0xff]
          %v3777 = vld [vmem:[%s3 + $0xd8] sm:$0xff]
          %v3778 = vld [vmem:[%s3 + $0xe0] sm:$0xff]
          %v3779 = vld [vmem:[%s3 + $0xe8] sm:$0xff]
          %v3780 = vld [vmem:[%s3 + $0xf0] sm:$0xff]
          %v3781 = vld [vmem:[%s3 + $0xf8] sm:$0xff]
          %v3782 = vld [vmem:[%s3 + $0x100] sm:$0xff]
          %v3783 = vld [vmem:[%s3 + $0x108] sm:$0xff]
          %v3784 = vld [vmem:[%s3 + $0x110] sm:$0xff]
          %v3785 = vld [vmem:[%s3 + $0x118] sm:$0xff]
          %v3786 = vld [vmem:[%s3 + $0x120] sm:$0xff]
          %v3787 = vld [vmem:[%s3 + $0x128] sm:$0xff]
          %v3788 = vld [vmem:[%s3 + $0x130] sm:$0xff]
          %v3789 = vld [vmem:[%s3 + $0x138] sm:$0xff]
          %v3790 = vld [vmem:[%s3 + $0x140] sm:$0xff]
          %v3791 = vld [vmem:[%s3 + $0x148] sm:$0xff]
          %v3792 = vld [vmem:[%s3 + $0x150] sm:$0xff]
          %v3793 = vld [vmem:[%s3 + $0x158] sm:$0xff]
          %v3794 = vld [vmem:[%s3 + $0x160] sm:$0xff]
          %v3795 = vld [vmem:[%s3 + $0x168] sm:$0xff]
          %v3796 = vld [vmem:[%s3 + $0x170] sm:$0xff]
          %v3797 = vld [vmem:[%s3 + $0x178] sm:$0xff]
          %v3798 = vld [vmem:[%s3 + $0x180] sm:$0xff]
          %v3799 = vld [vmem:[%s3 + $0x188] sm:$0xff]
          %v3800 = vld [vmem:[%s3 + $0x190] sm:$0xff]
          %v3801 = vld [vmem:[%s3 + $0x198] sm:$0xff]
          %v3802 = vld [vmem:[%s3 + $0x1a0] sm:$0xff]
          %v3803 = vld [vmem:[%s3 + $0x1a8] sm:$0xff]
          %v3804 = vld [vmem:[%s3 + $0x1b0] sm:$0xff]
          %v3805 = vld [vmem:[%s3 + $0x1b8] sm:$0xff]
          %v3806 = vld [vmem:[%s3 + $0x1c0] sm:$0xff]
          %v3807 = vld [vmem:[%s3 + $0x1c8] sm:$0xff]
          %v3808 = vld [vmem:[%s3 + $0x1d0] sm:$0xff]
          %v3809 = vld [vmem:[%s3 + $0x1d8] sm:$0xff]
          %v3810 = vld [vmem:[%s3 + $0x1e0] sm:$0xff]
          %v3811 = vld [vmem:[%s3 + $0x1e8] sm:$0xff]
          %v3812 = vld [vmem:[%s3 + $0x1f0] sm:$0xff]
          %v3813 = vld [vmem:[%s3 + $0x1f8] sm:$0xff]
          %v3814 = vld [vmem:[%s4] sm:$0x3]
          %v3816 = vlaneseq
          %v3817 = vshrl.u32 %v3816, 7
          %v3818 = vsub.s32 0, %v3817
          %v3819 = vrot.slane %v3814, %v3818
          %v3820 = vlaneseq
          %v3821 = vshrl.u32 %v3820, 7
          %v3822 = vsub.s32 1, %v3821
          %v3823 = vrot.slane %v3814, %v3822
          %v3890 = vunpack.c.l.b16 %v3750
          %v3891 = vunpack.c.h.b16 %v3750
          %v3892 = vunpack.c.l.b16 %v3751
          %v3893 = vunpack.c.h.b16 %v3751
          %v3894 = vunpack.c.l.b16 %v3752
          %v3895 = vunpack.c.h.b16 %v3752
          %v3896 = vunpack.c.l.b16 %v3753
          %v3897 = vunpack.c.h.b16 %v3753
          %v3898 = vunpack.c.l.b16 %v3754
          %v3899 = vunpack.c.h.b16 %v3754
          %v3900 = vunpack.c.l.b16 %v3755
          %v3901 = vunpack.c.h.b16 %v3755
          %v3902 = vunpack.c.l.b16 %v3756
          %v3903 = vunpack.c.h.b16 %v3756
          %v3904 = vunpack.c.l.b16 %v3757
          %v3905 = vunpack.c.h.b16 %v3757
          %v3906 = vunpack.c.l.b16 %v3758
          %v3907 = vunpack.c.h.b16 %v3758
          %v3908 = vunpack.c.l.b16 %v3759
          %v3909 = vunpack.c.h.b16 %v3759
          %v3910 = vunpack.c.l.b16 %v3760
          %v3911 = vunpack.c.h.b16 %v3760
          %v3912 = vunpack.c.l.b16 %v3761
          %v3913 = vunpack.c.h.b16 %v3761
          %v3914 = vunpack.c.l.b16 %v3762
          %v3915 = vunpack.c.h.b16 %v3762
          %v3916 = vunpack.c.l.b16 %v3763
          %v3917 = vunpack.c.h.b16 %v3763
          %v3918 = vunpack.c.l.b16 %v3764
          %v3919 = vunpack.c.h.b16 %v3764
          %v3920 = vunpack.c.l.b16 %v3765
          %v3921 = vunpack.c.h.b16 %v3765
          %v3922 = vunpack.c.l.b16 %v3766
          %v3923 = vunpack.c.h.b16 %v3766
          %v3924 = vunpack.c.l.b16 %v3767
          %v3925 = vunpack.c.h.b16 %v3767
          %v3926 = vunpack.c.l.b16 %v3768
          %v3927 = vunpack.c.h.b16 %v3768
          %v3928 = vunpack.c.l.b16 %v3769
          %v3929 = vunpack.c.h.b16 %v3769
          %v3930 = vunpack.c.l.b16 %v3770
          %v3931 = vunpack.c.h.b16 %v3770
          %v3932 = vunpack.c.l.b16 %v3771
          %v3933 = vunpack.c.h.b16 %v3771
          %v3934 = vunpack.c.l.b16 %v3772
          %v3935 = vunpack.c.h.b16 %v3772
          %v3936 = vunpack.c.l.b16 %v3773
          %v3937 = vunpack.c.h.b16 %v3773
          %v3938 = vunpack.c.l.b16 %v3774
          %v3939 = vunpack.c.h.b16 %v3774
          %v3940 = vunpack.c.l.b16 %v3775
          %v3941 = vunpack.c.h.b16 %v3775
          %v3942 = vunpack.c.l.b16 %v3776
          %v3943 = vunpack.c.h.b16 %v3776
          %v3944 = vunpack.c.l.b16 %v3777
          %v3945 = vunpack.c.h.b16 %v3777
          %v3946 = vunpack.c.l.b16 %v3778
          %v3947 = vunpack.c.h.b16 %v3778
          %v3948 = vunpack.c.l.b16 %v3779
          %v3949 = vunpack.c.h.b16 %v3779
          %v3950 = vunpack.c.l.b16 %v3780
          %v3951 = vunpack.c.h.b16 %v3780
          %v3952 = vunpack.c.l.b16 %v3781
          %v3953 = vunpack.c.h.b16 %v3781
          %v3954 = vunpack.c.l.b16 %v3782
          %v3955 = vunpack.c.h.b16 %v3782
          %v3956 = vunpack.c.l.b16 %v3783
          %v3957 = vunpack.c.h.b16 %v3783
          %v3958 = vunpack.c.l.b16 %v3784
          %v3959 = vunpack.c.h.b16 %v3784
          %v3960 = vunpack.c.l.b16 %v3785
          %v3961 = vunpack.c.h.b16 %v3785
          %v3962 = vunpack.c.l.b16 %v3786
          %v3963 = vunpack.c.h.b16 %v3786
          %v3964 = vunpack.c.l.b16 %v3787
          %v3965 = vunpack.c.h.b16 %v3787
          %v3966 = vunpack.c.l.b16 %v3788
          %v3967 = vunpack.c.h.b16 %v3788
          %v3968 = vunpack.c.l.b16 %v3789
          %v3969 = vunpack.c.h.b16 %v3789
          %v3970 = vunpack.c.l.b16 %v3790
          %v3971 = vunpack.c.h.b16 %v3790
          %v3972 = vunpack.c.l.b16 %v3791
          %v3973 = vunpack.c.h.b16 %v3791
          %v3974 = vunpack.c.l.b16 %v3792
          %v3975 = vunpack.c.h.b16 %v3792
          %v3976 = vunpack.c.l.b16 %v3793
          %v3977 = vunpack.c.h.b16 %v3793
          %v3978 = vunpack.c.l.b16 %v3794
          %v3979 = vunpack.c.h.b16 %v3794
          %v3980 = vunpack.c.l.b16 %v3795
          %v3981 = vunpack.c.h.b16 %v3795
          %v3982 = vunpack.c.l.b16 %v3796
          %v3983 = vunpack.c.h.b16 %v3796
          %v3984 = vunpack.c.l.b16 %v3797
          %v3985 = vunpack.c.h.b16 %v3797
          %v3986 = vunpack.c.l.b16 %v3798
          %v3987 = vunpack.c.h.b16 %v3798
          %v3988 = vunpack.c.l.b16 %v3799
          %v3989 = vunpack.c.h.b16 %v3799
          %v3990 = vunpack.c.l.b16 %v3800
          %v3991 = vunpack.c.h.b16 %v3800
          %v3992 = vunpack.c.l.b16 %v3801
          %v3993 = vunpack.c.h.b16 %v3801
          %v3994 = vunpack.c.l.b16 %v3802
          %v3995 = vunpack.c.h.b16 %v3802
          %v3996 = vunpack.c.l.b16 %v3803
          %v3997 = vunpack.c.h.b16 %v3803
          %v3998 = vunpack.c.l.b16 %v3804
          %v3999 = vunpack.c.h.b16 %v3804
          %v4000 = vunpack.c.l.b16 %v3805
          %v4001 = vunpack.c.h.b16 %v3805
          %v4002 = vunpack.c.l.b16 %v3806
          %v4003 = vunpack.c.h.b16 %v3806
          %v4004 = vunpack.c.l.b16 %v3807
          %v4005 = vunpack.c.h.b16 %v3807
          %v4006 = vunpack.c.l.b16 %v3808
          %v4007 = vunpack.c.h.b16 %v3808
          %v4008 = vunpack.c.l.b16 %v3809
          %v4009 = vunpack.c.h.b16 %v3809
          %v4010 = vunpack.c.l.b16 %v3810
          %v4011 = vunpack.c.h.b16 %v3810
          %v4012 = vunpack.c.l.b16 %v3811
          %v4013 = vunpack.c.h.b16 %v3811
          %v4014 = vunpack.c.l.b16 %v3812
          %v4015 = vunpack.c.h.b16 %v3812
          %v4016 = vunpack.c.l.b16 %v3813
          %v4017 = vunpack.c.h.b16 %v3813
          %v4018 = vpack.c.b16 %v3892, %v3890
          %v4019 = vpack.c.b16 %v3893, %v3891
          %v4020 = vpack.c.b16 %v3896, %v3894
          %v4021 = vpack.c.b16 %v3897, %v3895
          %v4022 = vpack.c.b16 %v3900, %v3898
          %v4023 = vpack.c.b16 %v3901, %v3899
          %v4024 = vpack.c.b16 %v3904, %v3902
          %v4025 = vpack.c.b16 %v3905, %v3903
          %v4026 = vpack.c.b16 %v3908, %v3906
          %v4027 = vpack.c.b16 %v3909, %v3907
          %v4028 = vpack.c.b16 %v3912, %v3910
          %v4029 = vpack.c.b16 %v3913, %v3911
          %v4030 = vpack.c.b16 %v3916, %v3914
          %v4031 = vpack.c.b16 %v3917, %v3915
          %v4032 = vpack.c.b16 %v3920, %v3918
          %v4033 = vpack.c.b16 %v3921, %v3919
          %v4034 = vpack.c.b16 %v3924, %v3922
          %v4035 = vpack.c.b16 %v3925, %v3923
          %v4036 = vpack.c.b16 %v3928, %v3926
          %v4037 = vpack.c.b16 %v3929, %v3927
          %v4038 = vpack.c.b16 %v3932, %v3930
          %v4039 = vpack.c.b16 %v3933, %v3931
          %v4040 = vpack.c.b16 %v3936, %v3934
          %v4041 = vpack.c.b16 %v3937, %v3935
          %v4042 = vpack.c.b16 %v3940, %v3938
          %v4043 = vpack.c.b16 %v3941, %v3939
          %v4044 = vpack.c.b16 %v3944, %v3942
          %v4045 = vpack.c.b16 %v3945, %v3943
          %v4046 = vpack.c.b16 %v3948, %v3946
          %v4047 = vpack.c.b16 %v3949, %v3947
          %v4048 = vpack.c.b16 %v3952, %v3950
          %v4049 = vpack.c.b16 %v3953, %v3951
          %v4050 = vpack.c.b16 %v3956, %v3954
          %v4051 = vpack.c.b16 %v3957, %v3955
          %v4052 = vpack.c.b16 %v3960, %v3958
          %v4053 = vpack.c.b16 %v3961, %v3959
          %v4054 = vpack.c.b16 %v3964, %v3962
          %v4055 = vpack.c.b16 %v3965, %v3963
          %v4056 = vpack.c.b16 %v3968, %v3966
          %v4057 = vpack.c.b16 %v3969, %v3967
          %v4058 = vpack.c.b16 %v3972, %v3970
          %v4059 = vpack.c.b16 %v3973, %v3971
          %v4060 = vpack.c.b16 %v3976, %v3974
          %v4061 = vpack.c.b16 %v3977, %v3975
          %v4062 = vpack.c.b16 %v3980, %v3978
          %v4063 = vpack.c.b16 %v3981, %v3979
          %v4064 = vpack.c.b16 %v3984, %v3982
          %v4065 = vpack.c.b16 %v3985, %v3983
          %v4066 = vpack.c.b16 %v3988, %v3986
          %v4067 = vpack.c.b16 %v3989, %v3987
          %v4068 = vpack.c.b16 %v3992, %v3990
          %v4069 = vpack.c.b16 %v3993, %v3991
          %v4070 = vpack.c.b16 %v3996, %v3994
          %v4071 = vpack.c.b16 %v3997, %v3995
          %v4072 = vpack.c.b16 %v4000, %v3998
          %v4073 = vpack.c.b16 %v4001, %v3999
          %v4074 = vpack.c.b16 %v4004, %v4002
          %v4075 = vpack.c.b16 %v4005, %v4003
          %v4076 = vpack.c.b16 %v4008, %v4006
          %v4077 = vpack.c.b16 %v4009, %v4007
          %v4078 = vpack.c.b16 %v4012, %v4010
          %v4079 = vpack.c.b16 %v4013, %v4011
          %v4080 = vpack.c.b16 %v4016, %v4014
          %v4081 = vpack.c.b16 %v4017, %v4015
          %4146 = vmatprep.subr.bf16.mxu0 %v4033
          %4147 = vmatpush1.bf16.msra.mxu0 %v4032
          %4148 = vmatprep.subr.bf16.mxu0 %v4031
          %4149 = vmatpush1.bf16.msra.mxu0 %v4030
          %4150 = vmatprep.subr.bf16.mxu0 %v4029
          %4151 = vmatpush1.bf16.msra.mxu0 %v4028
          %4152 = vmatprep.subr.bf16.mxu0 %v4027
          %4153 = vmatpush1.bf16.msra.mxu0 %v4026
          %4154 = vmatprep.subr.bf16.mxu0 %v4025
          %4155 = vmatpush1.bf16.msra.mxu0 %v4024
          %4156 = vmatprep.subr.bf16.mxu0 %v4023
          %4157 = vmatpush1.bf16.msra.mxu0 %v4022
          %4158 = vmatprep.subr.bf16.mxu0 %v4021
          %4159 = vmatpush1.bf16.msra.mxu0 %v4020
          %4160 = vmatprep.subr.bf16.mxu0 %v4019
          %4161 = vmatpush1.bf16.msra.mxu0 %v4018
          %4162 = vmatprep.subr.bf16.mxu0 %v4049
          %4163 = vmatpush2.bf16.msra.mxu0 %v4048
          %4164 = vmatprep.subr.bf16.mxu0 %v4047
          %4165 = vmatpush2.bf16.msra.mxu0 %v4046
          %4166 = vmatprep.subr.bf16.mxu0 %v4045
          %4167 = vmatpush2.bf16.msra.mxu0 %v4044
          %4168 = vmatprep.subr.bf16.mxu0 %v4043
          %4169 = vmatpush2.bf16.msra.mxu0 %v4042
          %4170 = vmatprep.subr.bf16.mxu0 %v4041
          %4171 = vmatpush2.bf16.msra.mxu0 %v4040
          %4172 = vmatprep.subr.bf16.mxu0 %v4039
          %4173 = vmatpush2.bf16.msra.mxu0 %v4038
          %4174 = vmatprep.subr.bf16.mxu0 %v4037
          %4175 = vmatpush2.bf16.msra.mxu0 %v4036
          %4176 = vmatprep.subr.bf16.mxu0 %v4035
          %4177 = vmatpush2.bf16.msra.mxu0 %v4034
          %4178 = vmatprep.mubr.bf16.mxu0 %v3719
          %4179 = vmatmul.mubr.bf16.gmra.mxu0 %v3718
          %v4180 = vpop.f32.mrf.mxu0
          %v4181 = vadd.f32 %v3819, %v4180
          %v4182 = vpop.f32.mrf.mxu0
          %v4183 = vadd.f32 %v3823, %v4182
          %v4184 = vpop.f32.mrf.mxu0
          %v4185 = vadd.f32 %v3819, %v4184
          %v4186 = vpop.f32.mrf.mxu0
          %v4187 = vadd.f32 %v3823, %v4186
          %4188 = vmatprep.mubr.bf16.mxu0 %v3723
          %4189 = vmatmul.mubr.bf16.gmra.mxu0 %v3722
          %v4190 = vpop.f32.mrf.mxu0
          %v4191 = vadd.f32 %v3819, %v4190
          %v4192 = vpop.f32.mrf.mxu0
          %v4193 = vadd.f32 %v3823, %v4192
          %v4194 = vpop.f32.mrf.mxu0
          %v4195 = vadd.f32 %v3819, %v4194
          %v4196 = vpop.f32.mrf.mxu0
          %v4197 = vadd.f32 %v3823, %v4196
          %4198 = vmatprep.mubr.bf16.mxu0 %v3727
          %4199 = vmatmul.mubr.bf16.gmra.mxu0 %v3726
          %v4200 = vpop.f32.mrf.mxu0
          %v4201 = vadd.f32 %v3819, %v4200
          %v4202 = vpop.f32.mrf.mxu0
          %v4203 = vadd.f32 %v3823, %v4202
          %v4204 = vpop.f32.mrf.mxu0
          %v4205 = vadd.f32 %v3819, %v4204
          %v4206 = vpop.f32.mrf.mxu0
          %v4207 = vadd.f32 %v3823, %v4206
          %4208 = vmatprep.mubr.bf16.mxu0 %v3731
          %4209 = vmatmul.mubr.bf16.gmra.mxu0 %v3730
          %v4210 = vpop.f32.mrf.mxu0
          %v4211 = vadd.f32 %v3819, %v4210
          %v4212 = vpop.f32.mrf.mxu0
          %v4213 = vadd.f32 %v3823, %v4212
          %v4214 = vpop.f32.mrf.mxu0
          %v4215 = vadd.f32 %v3819, %v4214
          %v4216 = vpop.f32.mrf.mxu0
          %v4217 = vadd.f32 %v3823, %v4216
          %4218 = vmatprep.mubr.bf16.mxu0 %v3735
          %4219 = vmatmul.mubr.bf16.gmra.mxu0 %v3734
          %v4220 = vpop.f32.mrf.mxu0
          %v4221 = vadd.f32 %v3819, %v4220
          %v4222 = vpop.f32.mrf.mxu0
          %v4223 = vadd.f32 %v3823, %v4222
          %v4224 = vpop.f32.mrf.mxu0
          %v4225 = vadd.f32 %v3819, %v4224
          %v4226 = vpop.f32.mrf.mxu0
          %v4227 = vadd.f32 %v3823, %v4226
          %4228 = vmatprep.mubr.bf16.mxu0 %v3739
          %4229 = vmatmul.mubr.bf16.gmra.mxu0 %v3738
          %v4230 = vpop.f32.mrf.mxu0
          %v4231 = vadd.f32 %v3819, %v4230
          %v4232 = vpop.f32.mrf.mxu0
          %v4233 = vadd.f32 %v3823, %v4232
          %v4234 = vpop.f32.mrf.mxu0
          %v4235 = vadd.f32 %v3819, %v4234
          %v4236 = vpop.f32.mrf.mxu0
          %v4237 = vadd.f32 %v3823, %v4236
          %4238 = vmatprep.mubr.bf16.mxu0 %v3743
          %4239 = vmatmul.mubr.bf16.gmra.mxu0 %v3742
          %v4240 = vpop.f32.mrf.mxu0
          %v4241 = vadd.f32 %v3819, %v4240
          %v4242 = vpop.f32.mrf.mxu0
          %v4243 = vadd.f32 %v3823, %v4242
          %v4244 = vpop.f32.mrf.mxu0
          %v4245 = vadd.f32 %v3819, %v4244
          %v4246 = vpop.f32.mrf.mxu0
          %v4247 = vadd.f32 %v3823, %v4246
          %4248 = vmatprep.mubr.bf16.mxu0 %v3747
          %4249 = vmatmul.mubr.bf16.gmra.mxu0 %v3746
          %v4250 = vpop.f32.mrf.mxu0
          %v4251 = vadd.f32 %v3819, %v4250
          %v4252 = vpop.f32.mrf.mxu0
          %v4253 = vadd.f32 %v3823, %v4252
          %v4254 = vpop.f32.mrf.mxu0
          %v4255 = vadd.f32 %v3819, %v4254
          %v4256 = vpop.f32.mrf.mxu0
          %v4257 = vadd.f32 %v3823, %v4256
          %4258 = vdwg.mxu0
          %4259 = vmatprep.subr.bf16.mxu0 %v4065
          %4260 = vmatpush1.bf16.msra.mxu0 %v4064
          %4261 = vmatprep.subr.bf16.mxu0 %v4063
          %4262 = vmatpush1.bf16.msra.mxu0 %v4062
          %4263 = vmatprep.subr.bf16.mxu0 %v4061
          %4264 = vmatpush1.bf16.msra.mxu0 %v4060
          %4265 = vmatprep.subr.bf16.mxu0 %v4059
          %4266 = vmatpush1.bf16.msra.mxu0 %v4058
          %4267 = vmatprep.subr.bf16.mxu0 %v4057
          %4268 = vmatpush1.bf16.msra.mxu0 %v4056
          %4269 = vmatprep.subr.bf16.mxu0 %v4055
          %4270 = vmatpush1.bf16.msra.mxu0 %v4054
          %4271 = vmatprep.subr.bf16.mxu0 %v4053
          %4272 = vmatpush1.bf16.msra.mxu0 %v4052
          %4273 = vmatprep.subr.bf16.mxu0 %v4051
          %4274 = vmatpush1.bf16.msra.mxu0 %v4050
          %4275 = vmatprep.subr.bf16.mxu0 %v4081
          %4276 = vmatpush2.bf16.msra.mxu0 %v4080
          %4277 = vmatprep.subr.bf16.mxu0 %v4079
          %4278 = vmatpush2.bf16.msra.mxu0 %v4078
          %4279 = vmatprep.subr.bf16.mxu0 %v4077
          %4280 = vmatpush2.bf16.msra.mxu0 %v4076
          %4281 = vmatprep.subr.bf16.mxu0 %v4075
          %4282 = vmatpush2.bf16.msra.mxu0 %v4074
          %4283 = vmatprep.subr.bf16.mxu0 %v4073
          %4284 = vmatpush2.bf16.msra.mxu0 %v4072
          %4285 = vmatprep.subr.bf16.mxu0 %v4071
          %4286 = vmatpush2.bf16.msra.mxu0 %v4070
          %4287 = vmatprep.subr.bf16.mxu0 %v4069
          %4288 = vmatpush2.bf16.msra.mxu0 %v4068
          %4289 = vmatprep.subr.bf16.mxu0 %v4067
          %4290 = vmatpush2.bf16.msra.mxu0 %v4066
          %4291 = vmatprep.mubr.bf16.mxu0 %v3721
          %4292 = vmatmul.mubr.bf16.gmra.mxu0 %v3720
          %v4293 = vpop.f32.mrf.mxu0
          %v4294 = vadd.f32 %v4181, %v4293
          %v4295 = vpop.f32.mrf.mxu0
          %v4296 = vadd.f32 %v4183, %v4295
          %v4297 = vpop.f32.mrf.mxu0
          %v4298 = vadd.f32 %v4185, %v4297
          %v4299 = vpop.f32.mrf.mxu0
          %v4300 = vadd.f32 %v4187, %v4299
          %4301 = vmatprep.mubr.bf16.mxu0 %v3725
          %4302 = vmatmul.mubr.bf16.gmra.mxu0 %v3724
          %v4303 = vpop.f32.mrf.mxu0
          %v4304 = vadd.f32 %v4191, %v4303
          %v4305 = vpop.f32.mrf.mxu0
          %v4306 = vadd.f32 %v4193, %v4305
          %v4307 = vpop.f32.mrf.mxu0
          %v4308 = vadd.f32 %v4195, %v4307
          %v4309 = vpop.f32.mrf.mxu0
          %v4310 = vadd.f32 %v4197, %v4309
          %4311 = vmatprep.mubr.bf16.mxu0 %v3729
          %4312 = vmatmul.mubr.bf16.gmra.mxu0 %v3728
          %v4313 = vpop.f32.mrf.mxu0
          %v4314 = vadd.f32 %v4201, %v4313
          %v4315 = vpop.f32.mrf.mxu0
          %v4316 = vadd.f32 %v4203, %v4315
          %v4317 = vpop.f32.mrf.mxu0
          %v4318 = vadd.f32 %v4205, %v4317
          %v4319 = vpop.f32.mrf.mxu0
          %v4320 = vadd.f32 %v4207, %v4319
          %4321 = vmatprep.mubr.bf16.mxu0 %v3733
          %4322 = vmatmul.mubr.bf16.gmra.mxu0 %v3732
          %v4323 = vpop.f32.mrf.mxu0
          %v4324 = vadd.f32 %v4211, %v4323
          %v4325 = vpop.f32.mrf.mxu0
          %v4326 = vadd.f32 %v4213, %v4325
          %v4327 = vpop.f32.mrf.mxu0
          %v4328 = vadd.f32 %v4215, %v4327
          %v4329 = vpop.f32.mrf.mxu0
          %v4330 = vadd.f32 %v4217, %v4329
          %4331 = vmatprep.mubr.bf16.mxu0 %v3737
          %4332 = vmatmul.mubr.bf16.gmra.mxu0 %v3736
          %v4333 = vpop.f32.mrf.mxu0
          %v4334 = vadd.f32 %v4221, %v4333
          %v4335 = vpop.f32.mrf.mxu0
          %v4336 = vadd.f32 %v4223, %v4335
          %v4337 = vpop.f32.mrf.mxu0
          %v4338 = vadd.f32 %v4225, %v4337
          %v4339 = vpop.f32.mrf.mxu0
          %v4340 = vadd.f32 %v4227, %v4339
          %4341 = vmatprep.mubr.bf16.mxu0 %v3741
          %4342 = vmatmul.mubr.bf16.gmra.mxu0 %v3740
          %v4343 = vpop.f32.mrf.mxu0
          %v4344 = vadd.f32 %v4231, %v4343
          %v4345 = vpop.f32.mrf.mxu0
          %v4346 = vadd.f32 %v4233, %v4345
          %v4347 = vpop.f32.mrf.mxu0
          %v4348 = vadd.f32 %v4235, %v4347
          %v4349 = vpop.f32.mrf.mxu0
          %v4350 = vadd.f32 %v4237, %v4349
          %4351 = vmatprep.mubr.bf16.mxu0 %v3745
          %4352 = vmatmul.mubr.bf16.gmra.mxu0 %v3744
          %v4353 = vpop.f32.mrf.mxu0
          %v4354 = vadd.f32 %v4241, %v4353
          %v4355 = vpop.f32.mrf.mxu0
          %v4356 = vadd.f32 %v4243, %v4355
          %v4357 = vpop.f32.mrf.mxu0
          %v4358 = vadd.f32 %v4245, %v4357
          %v4359 = vpop.f32.mrf.mxu0
          %v4360 = vadd.f32 %v4247, %v4359
          %4361 = vmatprep.mubr.bf16.mxu0 %v3749
          %4362 = vmatmul.mubr.bf16.gmra.mxu0 %v3748
          %v4363 = vpop.f32.mrf.mxu0
          %v4364 = vadd.f32 %v4251, %v4363
          %v4365 = vpop.f32.mrf.mxu0
          %v4366 = vadd.f32 %v4253, %v4365
          %v4367 = vpop.f32.mrf.mxu0
          %v4368 = vadd.f32 %v4255, %v4367
          %v4369 = vpop.f32.mrf.mxu0
          %v4370 = vadd.f32 %v4257, %v4369
          %4371 = vdwg.mxu0
          %v4372 = vmax.f32 %v4294, %v4296
          %v4373 = vmax.f32 %v4298, %v4300
          %v4374 = vmax.f32 %v4304, %v4306
          %v4375 = vmax.f32 %v4308, %v4310
          %v4376 = vmax.f32 %v4314, %v4316
          %v4377 = vmax.f32 %v4318, %v4320
          %v4378 = vmax.f32 %v4324, %v4326
          %v4379 = vmax.f32 %v4328, %v4330
          %v4380 = vmax.f32 %v4334, %v4336
          %v4381 = vmax.f32 %v4338, %v4340
          %v4382 = vmax.f32 %v4344, %v4346
          %v4383 = vmax.f32 %v4348, %v4350
          %v4384 = vmax.f32 %v4354, %v4356
          %v4385 = vmax.f32 %v4358, %v4360
          %v4386 = vmax.f32 %v4364, %v4366
          %v4387 = vmax.f32 %v4368, %v4370
          %v4388 = vsub.f32 %v4294, %v4372
          %v4389 = vsub.f32 %v4298, %v4373
          %v4390 = vsub.f32 %v4304, %v4374
          %v4391 = vsub.f32 %v4308, %v4375
          %v4392 = vsub.f32 %v4314, %v4376
          %v4393 = vsub.f32 %v4318, %v4377
          %v4394 = vsub.f32 %v4324, %v4378
          %v4395 = vsub.f32 %v4328, %v4379
          %v4396 = vsub.f32 %v4334, %v4380
          %v4397 = vsub.f32 %v4338, %v4381
          %v4398 = vsub.f32 %v4344, %v4382
          %v4399 = vsub.f32 %v4348, %v4383
          %v4400 = vsub.f32 %v4354, %v4384
          %v4401 = vsub.f32 %v4358, %v4385
          %v4402 = vsub.f32 %v4364, %v4386
          %v4403 = vsub.f32 %v4368, %v4387
          %v4404 = vmul.f32 %v4388, 1.442695
          %v4405 = vpow.pop %v4404
          %v4406 = vmul.f32 %v4389, 1.442695
          %v4407 = vpow.pop %v4406
          %v4408 = vmul.f32 %v4390, 1.442695
          %v4409 = vpow.pop %v4408
          %v4410 = vmul.f32 %v4391, 1.442695
          %v4411 = vpow.pop %v4410
          %v4412 = vmul.f32 %v4392, 1.442695
          %v4413 = vpow.pop %v4412
          %v4414 = vmul.f32 %v4393, 1.442695
          %v4415 = vpow.pop %v4414
          %v4416 = vmul.f32 %v4394, 1.442695
          %v4417 = vpow.pop %v4416
          %v4418 = vmul.f32 %v4395, 1.442695
          %v4419 = vpow.pop %v4418
          %v4420 = vmul.f32 %v4396, 1.442695
          %v4421 = vpow.pop %v4420
          %v4422 = vmul.f32 %v4397, 1.442695
          %v4423 = vpow.pop %v4422
          %v4424 = vmul.f32 %v4398, 1.442695
          %v4425 = vpow.pop %v4424
          %v4426 = vmul.f32 %v4399, 1.442695
          %v4427 = vpow.pop %v4426
          %v4428 = vmul.f32 %v4400, 1.442695
          %v4429 = vpow.pop %v4428
          %v4430 = vmul.f32 %v4401, 1.442695
          %v4431 = vpow.pop %v4430
          %v4432 = vmul.f32 %v4402, 1.442695
          %v4433 = vpow.pop %v4432
          %v4434 = vmul.f32 %v4403, 1.442695
          %v4435 = vpow.pop %v4434
          %v4436 = vsub.f32 %v4296, %v4372
          %v4437 = vsub.f32 %v4300, %v4373
          %v4438 = vsub.f32 %v4306, %v4374
          %v4439 = vsub.f32 %v4310, %v4375
          %v4440 = vsub.f32 %v4316, %v4376
          %v4441 = vsub.f32 %v4320, %v4377
          %v4442 = vsub.f32 %v4326, %v4378
          %v4443 = vsub.f32 %v4330, %v4379
          %v4444 = vsub.f32 %v4336, %v4380
          %v4445 = vsub.f32 %v4340, %v4381
          %v4446 = vsub.f32 %v4346, %v4382
          %v4447 = vsub.f32 %v4350, %v4383
          %v4448 = vsub.f32 %v4356, %v4384
          %v4449 = vsub.f32 %v4360, %v4385
          %v4450 = vsub.f32 %v4366, %v4386
          %v4451 = vsub.f32 %v4370, %v4387
          %v4452 = vmul.f32 %v4436, 1.442695
          %v4453 = vpow.pop %v4452
          %v4454 = vmul.f32 %v4437, 1.442695
          %v4455 = vpow.pop %v4454
          %v4456 = vmul.f32 %v4438, 1.442695
          %v4457 = vpow.pop %v4456
          %v4458 = vmul.f32 %v4439, 1.442695
          %v4459 = vpow.pop %v4458
          %v4460 = vmul.f32 %v4440, 1.442695
          %v4461 = vpow.pop %v4460
          %v4462 = vmul.f32 %v4441, 1.442695
          %v4463 = vpow.pop %v4462
          %v4464 = vmul.f32 %v4442, 1.442695
          %v4465 = vpow.pop %v4464
          %v4466 = vmul.f32 %v4443, 1.442695
          %v4467 = vpow.pop %v4466
          %v4468 = vmul.f32 %v4444, 1.442695
          %v4469 = vpow.pop %v4468
          %v4470 = vmul.f32 %v4445, 1.442695
          %v4471 = vpow.pop %v4470
          %v4472 = vmul.f32 %v4446, 1.442695
          %v4473 = vpow.pop %v4472
          %v4474 = vmul.f32 %v4447, 1.442695
          %v4475 = vpow.pop %v4474
          %v4476 = vmul.f32 %v4448, 1.442695
          %v4477 = vpow.pop %v4476
          %v4478 = vmul.f32 %v4449, 1.442695
          %v4479 = vpow.pop %v4478
          %v4480 = vmul.f32 %v4450, 1.442695
          %v4481 = vpow.pop %v4480
          %v4482 = vmul.f32 %v4451, 1.442695
          %v4483 = vpow.pop %v4482
          %v4484 = vadd.f32 %v4405, %v4453
          %v4485 = vadd.f32 %v4407, %v4455
          %v4486 = vadd.f32 %v4409, %v4457
          %v4487 = vadd.f32 %v4411, %v4459
          %v4488 = vadd.f32 %v4413, %v4461
          %v4489 = vadd.f32 %v4415, %v4463
          %v4490 = vadd.f32 %v4417, %v4465
          %v4491 = vadd.f32 %v4419, %v4467
          %v4492 = vadd.f32 %v4421, %v4469
          %v4493 = vadd.f32 %v4423, %v4471
          %v4494 = vadd.f32 %v4425, %v4473
          %v4495 = vadd.f32 %v4427, %v4475
          %v4496 = vadd.f32 %v4429, %v4477
          %v4497 = vadd.f32 %v4431, %v4479
          %v4498 = vadd.f32 %v4433, %v4481
          %v4499 = vadd.f32 %v4435, %v4483
          %v4500 = vrcp.pop %v4484
          %v4501 = vrcp.pop %v4485
          %v4502 = vrcp.pop %v4486
          %v4503 = vrcp.pop %v4487
          %v4504 = vrcp.pop %v4488
          %v4505 = vrcp.pop %v4489
          %v4506 = vrcp.pop %v4490
          %v4507 = vrcp.pop %v4491
          %v4508 = vrcp.pop %v4492
          %v4509 = vrcp.pop %v4493
          %v4510 = vrcp.pop %v4494
          %v4511 = vrcp.pop %v4495
          %v4512 = vrcp.pop %v4496
          %v4513 = vrcp.pop %v4497
          %v4514 = vrcp.pop %v4498
          %v4515 = vrcp.pop %v4499
          %v4516 = vmul.f32 %v4405, %v4500
          %v4517 = vmul.f32 %v4407, %v4501
          %v4518 = vmul.f32 %v4409, %v4502
          %v4519 = vmul.f32 %v4411, %v4503
          %v4520 = vmul.f32 %v4413, %v4504
          %v4521 = vmul.f32 %v4415, %v4505
          %v4522 = vmul.f32 %v4417, %v4506
          %v4523 = vmul.f32 %v4419, %v4507
          %v4524 = vmul.f32 %v4421, %v4508
          %v4525 = vmul.f32 %v4423, %v4509
          %v4526 = vmul.f32 %v4425, %v4510
          %v4527 = vmul.f32 %v4427, %v4511
          %v4528 = vmul.f32 %v4429, %v4512
          %v4529 = vmul.f32 %v4431, %v4513
          %v4530 = vmul.f32 %v4433, %v4514
          %v4531 = vmul.f32 %v4435, %v4515
          %v4532 = vlaneseq
          %v4533 = vand.u32 %v4532, 127
          %vm4534 = vcmp.lt.s32.totalorder %v4533, 18
          %v4535 = vsel %vm4534, %v4516, %v4294
          %v4536 = vsel %vm4534, %v4517, %v4298
          %v4537 = vsel %vm4534, %v4518, %v4304
          %v4538 = vsel %vm4534, %v4519, %v4308
          %v4539 = vsel %vm4534, %v4520, %v4314
          %v4540 = vsel %vm4534, %v4521, %v4318
          %v4541 = vsel %vm4534, %v4522, %v4324
          %v4542 = vsel %vm4534, %v4523, %v4328
          %v4543 = vsel %vm4534, %v4524, %v4334
          %v4544 = vsel %vm4534, %v4525, %v4338
          %v4545 = vsel %vm4534, %v4526, %v4344
          %v4546 = vsel %vm4534, %v4527, %v4348
          %v4547 = vsel %vm4534, %v4528, %v4354
          %v4548 = vsel %vm4534, %v4529, %v4358
          %v4549 = vsel %vm4534, %v4530, %v4364
          %v4550 = vsel %vm4534, %v4531, %v4368
          %4551 = vst [vmem:[%s414] sm:$0xff] %v4535
          %4552 = vst [vmem:[%s414 + $0x8] sm:$0xff] %v4536
          %4553 = vst [vmem:[%s414 + $0x10] sm:$0xff] %v4537
          %4554 = vst [vmem:[%s414 + $0x18] sm:$0xff] %v4538
          %4555 = vst [vmem:[%s414 + $0x20] sm:$0xff] %v4539
          %4556 = vst [vmem:[%s414 + $0x28] sm:$0xff] %v4540
          %4557 = vst [vmem:[%s414 + $0x30] sm:$0xff] %v4541
          %4558 = vst [vmem:[%s414 + $0x38] sm:$0xff] %v4542
          %4559 = vst [vmem:[%s414 + $0x40] sm:$0xff] %v4543
          %4560 = vst [vmem:[%s414 + $0x48] sm:$0xff] %v4544
          %4561 = vst [vmem:[%s414 + $0x50] sm:$0xff] %v4545
          %4562 = vst [vmem:[%s414 + $0x58] sm:$0xff] %v4546
          %4563 = vst [vmem:[%s414 + $0x60] sm:$0xff] %v4547
          %4564 = vst [vmem:[%s414 + $0x68] sm:$0xff] %v4548
          %4565 = vst [vmem:[%s414 + $0x70] sm:$0xff] %v4549
          %4566 = vst [vmem:[%s414 + $0x78] sm:$0xff] %v4550
        $region71: #{_rpn_device.1} parent=58 // pred_fallthru
          _
        %s4567 = smul.u32 16, %s20
        %p4568 = scmp.lt.s32.totalorder %s4567, 31
        %s4569 = scalar_select %p4568, %s4567, 31
        %s4570 = smul.addr %s4569, 8
        %s4571 = scalar_lea.vmem %s5, %s4570
        // Predicated region
        $region72: #{_rpn_device.1} parent=58 // pred_check
          %p4572 = pneg %p163
        $region73: #{_rpn_device.1} parent=58 // pred_check_branch
          %4574 = sbr.rel (%p4572) target = $region75
        $region74: #{_rpn_device.1} parent=58 // pred_region
          %s4575 = smul.u32 16, %s20
        $region75: #{_rpn_device.1} parent=58 // pred_fallthru
          _
      $region59: #{_rpn_device.1} parent=5 // pred_fallthru
        _
      %p4576 = scmp.le.s32.totalorder 2, %s11
      // Predicated region
      $region76: #{_rpn_device.1} parent=5 // pred_check
        %p4577 = pneg %p4576
      $region77: #{_rpn_device.1} parent=5 // pred_check_branch
        %4579 = sbr.rel (%p4577) target = $region79
      $region78: #{_rpn_device.1} parent=5 // pred_region
        %s4580 = ssub.s32 %s11, 2
        // Predicated region
        $region80: #{_rpn_device.1} parent=78 // pred_check
          %p4581 = pneg %p169
        $region81: #{_rpn_device.1} parent=78 // pred_check_branch
          %4583 = sbr.rel (%p4581) target = $region83
        $region82: #{_rpn_device.1} parent=78 // pred_region
          %s4584 = smul.u32 16, %s22
          %p4585 = scmp.lt.s32.totalorder %s4584, 31
          %s4586 = scalar_select %p4585, %s4584, 31
          %s4587 = smul.addr %s4586, 8
          %s4588 = scalar_lea.vmem %s5, %s4587
        $region83: #{_rpn_device.1} parent=78 // pred_fallthru
          _
      $region79: #{_rpn_device.1} parent=5 // pred_fallthru
        _
    $region6: #{_rpn_device.1} parent=1 // loop_footer
      %s15 = sadd.s32 1, %s11
    $region7: #{_rpn_device.1} parent=1 // loop_footer_branch
      %10 = sbr.rel target = $region3
    $region8: #{_rpn_device.1} parent=1 // loop_exit
      _

</llo_original>
